<compile_context>
chip_gen: v7x
topology: tpu7x:2x2x1
jax: 0.10.0
libtpu: 0.0.40
codegen_flags: <defaults>
</compile_context>

<pallas_src>
import functools
import math

import jax
import jax.numpy as jnp
from jax.experimental import pallas as pl
from jax.experimental.pallas import tpu as pltpu

# ---- scaled-down hyper-params (reference module: d_model=512, num_heads=8, d_ff=2048) ----
D_MODEL = 128
NUM_HEADS = 8
D_HEAD = D_MODEL // NUM_HEADS          # 16
D_FF = 4 * D_MODEL                     # keep the 4x ratio of the reference module
BATCH = 2
SEQ = 8                                # decoder (target) length
SEQ_ENC = 16                           # encoder (memory) length
EPS = 1e-5                             # torch LayerNorm default

_COMPILER_PARAMS_CLS = (getattr(pltpu, "CompilerParams", None)
                        or getattr(pltpu, "TPUCompilerParams", None))


def _parallel_params(n_axes=1):
    if _COMPILER_PARAMS_CLS is None:
        return None
    return _COMPILER_PARAMS_CLS(dimension_semantics=("parallel",) * n_axes)


def _fast_recip(x):
    # softmax denominator on the EUP slot (otherwise-idle) instead of a VALU divide
    if hasattr(pl, "reciprocal"):
        return pl.reciprocal(x, approx=True)
    return 1.0 / x


def _layernorm(y, gamma, beta):
    mean = jnp.mean(y, axis=-1, keepdims=True)
    var = jnp.mean((y - mean) ** 2, axis=-1, keepdims=True)    # biased variance, like torch LN
    return (y - mean) * jax.lax.rsqrt(var + EPS) * gamma + beta


# ----------------------------- Pallas kernels -----------------------------

def _mha_addln_kernel(xq_ref, xkv_ref, mask_ref,
                      wq_ref, bq_ref, wkv_ref, bkv_ref, wo_ref, bo_ref,
                      g_ref, beta_ref, o_ref, *, num_heads, d_head):
    """Fused MHA + residual add + LayerNorm for one batch element."""
    f32 = jnp.float32
    bf16 = jnp.bfloat16
    d_model = num_heads * d_head

    xq = xq_ref[...]                       # (Sq, D) f32
    xkv = xkv_ref[...]                     # (Sk, D) f32
    masked_out = mask_ref[...] == 0        # (Sq, Sk) bool  (mask == 0 -> -1e9, like masked_fill)

    # Fused projections: Q = xq @ Wq,  [K|V] = xkv @ [Wk|Wv]   (bf16 on the MXU, f32 acc)
    q = jnp.dot(xq.astype(bf16), wq_ref[...], preferred_element_type=f32) + bq_ref[...]
    kv = jnp.dot(xkv.astype(bf16), wkv_ref[...], preferred_element_type=f32) + bkv_ref[...]

    q = q * (1.0 / math.sqrt(d_head))      # fold the 1/sqrt(d_head) scale into Q once

    # All heads handled in this single grid step; static lane slices, no K transpose.
    heads = []
    for h in range(num_heads):
        lo = h * d_head
        qh = q[:, lo:lo + d_head].astype(bf16)                        # (Sq, Dh)
        kh = kv[:, lo:lo + d_head].astype(bf16)                       # (Sk, Dh)
        vh = kv[:, d_model + lo:d_model + lo + d_head].astype(bf16)   # (Sk, Dh)
        # scores: contract the last dim of q and k directly (no transpose materialized)
        s = jax.lax.dot_general(qh, kh, (((1,), (1,)), ((), ())),
                                preferred_element_type=f32)           # (Sq, Sk) f32
        s = jnp.where(masked_out, -1e9, s)
        s_max = jnp.max(s, axis=-1, keepdims=True)
        p = jnp.exp(s - s_max)
        p = p * _fast_recip(jnp.sum(p, axis=-1, keepdims=True))
        heads.append(jnp.dot(p.astype(bf16), vh, preferred_element_type=f32))
    attn = jnp.concatenate(heads, axis=-1)                            # (Sq, D), lane-dense

    proj = jnp.dot(attn.astype(bf16), wo_ref[...], preferred_element_type=f32) + bo_ref[...]

    # residual add + LayerNorm fused (dropout = identity, eval mode)
    y = _layernorm(xq + proj, g_ref[...], beta_ref[...])
    o_ref[...] = y.astype(o_ref.dtype)


def _ffn_addln_kernel(x_ref, w1_ref, b1_ref, w2_ref, b2_ref, g_ref, beta_ref, o_ref):
    """Fused position-wise FFN + residual add + LayerNorm for one batch element."""
    f32 = jnp.float32
    bf16 = jnp.bfloat16
    x = x_ref[...]                                                    # (S, D) f32
    h = jnp.dot(x.astype(bf16), w1_ref[...], preferred_element_type=f32) + b1_ref[...]
    h = jnp.maximum(h, 0.0)                                           # ReLU in f32
    y = jnp.dot(h.astype(bf16), w2_ref[...], preferred_element_type=f32) + b2_ref[...]
    y = _layernorm(x + y, g_ref[...], beta_ref[...])                  # residual + norm3 fused
    o_ref[...] = y.astype(o_ref.dtype)


# ----------------------------- pallas_call wrappers -----------------------------

def mha_addln(xq, xkv, mask, pa, gamma, beta):
    """norm(xq + MHA(xq, xkv, xkv, mask)); mask:(B,Sq,Sk) int32; returns (B,Sq,D) f32."""
    B, Sq, D = xq.shape
    Sk = xkv.shape[1]
    kern = functools.partial(_mha_addln_kernel, num_heads=NUM_HEADS, d_head=D_HEAD)
    return pl.pallas_call(
        kern,
        out_shape=jax.ShapeDtypeStruct((B, Sq, D), jnp.float32),
        grid=(B,),
        in_specs=[
            pl.BlockSpec((None, Sq, D), lambda b: (b, 0, 0)),       # xq
            pl.BlockSpec((None, Sk, D), lambda b: (b, 0, 0)),       # xkv
            pl.BlockSpec((None, Sq, Sk), lambda b: (b, 0, 0)),      # mask (int32)
            pl.BlockSpec((D, D), lambda b: (0, 0)),                 # wq   (bf16)
            pl.BlockSpec((1, D), lambda b: (0, 0)),                 # bq
            pl.BlockSpec((D, 2 * D), lambda b: (0, 0)),             # wkv  (bf16, [Wk|Wv])
            pl.BlockSpec((1, 2 * D), lambda b: (0, 0)),             # bkv
            pl.BlockSpec((D, D), lambda b: (0, 0)),                 # wo   (bf16)
            pl.BlockSpec((1, D), lambda b: (0, 0)),                 # bo
            pl.BlockSpec((1, D), lambda b: (0, 0)),                 # gamma
            pl.BlockSpec((1, D), lambda b: (0, 0)),                 # beta
        ],
        out_specs=pl.BlockSpec((None, Sq, D), lambda b: (b, 0, 0)),
        compiler_params=_parallel_params(1),
    )(xq, xkv, mask,
      pa['wq'], pa['bq'], pa['wkv'], pa['bkv'], pa['wo'], pa['bo'], gamma, beta)


def ffn_addln(x, w1, b1, w2, b2, gamma, beta):
    """norm(x + fc2(relu(fc1(x)))); returns (B,S,D) f32."""
    B, S, D = x.shape
    F = w1.shape[1]
    return pl.pallas_call(
        _ffn_addln_kernel,
        out_shape=jax.ShapeDtypeStruct((B, S, D), jnp.float32),
        grid=(B,),
        in_specs=[
            pl.BlockSpec((None, S, D), lambda b: (b, 0, 0)),        # x
            pl.BlockSpec((D, F), lambda b: (0, 0)),                 # w1 (bf16)
            pl.BlockSpec((1, F), lambda b: (0, 0)),                 # b1
            pl.BlockSpec((F, D), lambda b: (0, 0)),                 # w2 (bf16)
            pl.BlockSpec((1, D), lambda b: (0, 0)),                 # b2
            pl.BlockSpec((1, D), lambda b: (0, 0)),                 # gamma
            pl.BlockSpec((1, D), lambda b: (0, 0)),                 # beta
        ],
        out_specs=pl.BlockSpec((None, S, D), lambda b: (b, 0, 0)),
        compiler_params=_parallel_params(1),
    )(x, w1, b1, w2, b2, gamma, beta)


# ----------------------------- DecoderLayer forward (3 fused pallas_calls) -----------------------------

def decoder_layer_forward(p, x, enc_output, src_mask, tgt_mask):
    B, S, _ = x.shape
    Se = enc_output.shape[1]
    # masks can arrive as (B,1,S,S) / (B,1,1,Se) bool (like generate_mask); make them (B,Sq,Sk) int32
    tgt_m = jnp.broadcast_to(tgt_mask, (B, 1, S, S)).astype(jnp.int32).reshape(B, S, S)
    src_m = jnp.broadcast_to(src_mask, (B, 1, S, Se)).astype(jnp.int32).reshape(B, S, Se)

    # self-attention + residual + norm1  (single fused kernel)
    x = mha_addln(x, x, tgt_m, p['self_attn'], p['norm1_g'], p['norm1_b'])
    # cross-attention + residual + norm2
    x = mha_addln(x, enc_output, src_m, p['cross_attn'], p['norm2_g'], p['norm2_b'])
    # FFN + residual + norm3
    return ffn_addln(x, p['w1'], p['b1'], p['w2'], p['b2'], p['norm3_g'], p['norm3_b'])


# ----------------------------- deterministic parameter init -----------------------------

def init_params(key):
    ctr = [0]

    def nk():
        ctr[0] += 1
        return jax.random.fold_in(key, ctr[0])

    def dense(din, dout):
        w = (jax.random.normal(nk(), (din, dout), jnp.float32) * 0.02).astype(jnp.bfloat16)
        b = jax.random.normal(nk(), (1, dout), jnp.float32) * 0.02
        return w, b

    def mha_params():
        wq, bq = dense(D_MODEL, D_MODEL)
        wk, bk = dense(D_MODEL, D_MODEL)
        wv, bv = dense(D_MODEL, D_MODEL)
        wo, bo = dense(D_MODEL, D_MODEL)
        return dict(wq=wq, bq=bq,
                    wkv=jnp.concatenate([wk, wv], axis=1),     # (D, 2D) fused K|V weights
                    bkv=jnp.concatenate([bk, bv], axis=1),     # (1, 2D)
                    wo=wo, bo=bo)

    def ln_params():
        return jnp.ones((1, D_MODEL), jnp.float32), jnp.zeros((1, D_MODEL), jnp.float32)

    w1, b1 = dense(D_MODEL, D_FF)
    w2, b2 = dense(D_FF, D_MODEL)
    n1g, n1b = ln_params()
    n2g, n2b = ln_params()
    n3g, n3b = ln_params()
    return dict(self_attn=mha_params(), cross_attn=mha_params(),
                w1=w1, b1=b1, w2=w2, b2=b2,
                norm1_g=n1g, norm1_b=n1b,
                norm2_g=n2g, norm2_b=n2b,
                norm3_g=n3g, norm3_b=n3b)


# ----------------------------- main -----------------------------

if __name__ == "__main__":
    key = jax.random.PRNGKey(0)
    params = init_params(key)

    kx, ke = jax.random.split(jax.random.fold_in(key, 1000))
    x = jax.random.normal(kx, (BATCH, SEQ, D_MODEL), jnp.float32)
    enc_out = jax.random.normal(ke, (BATCH, SEQ_ENC, D_MODEL), jnp.float32)

    # masks with the same semantics as the PyTorch reference (mask == 0 -> -1e9)
    src_len = jnp.array([SEQ_ENC, SEQ_ENC - 5], jnp.int32)
    src_mask = (jnp.arange(SEQ_ENC)[None, :] < src_len[:, None])[:, None, None, :]  # (B,1,1,Se)
    tgt_mask = jnp.tril(jnp.ones((SEQ, SEQ), dtype=bool))[None, None]                # (1,1,S,S)

    fwd = jax.jit(decoder_layer_forward)
    out = fwd(params, x, enc_out, src_mask, tgt_mask)
    out = jax.block_until_ready(out)
    assert out.shape == (BATCH, SEQ, D_MODEL) and out.dtype == jnp.float32
    print("KERNEL_OK")
</pallas_src>

<mosaic_0001>
module attributes {stable_mosaic.version = 11 : i64} {
  func.func @_mha_addln_kernel(%arg0: i32, %arg1: memref<1x8x128xf32, #tpu.memory_space<vmem>>, %arg2: memref<1x8x128xf32, #tpu.memory_space<vmem>>, %arg3: memref<1x8x8xi32, #tpu.memory_space<vmem>>, %arg4: memref<128x128xbf16, #tpu.memory_space<vmem>>, %arg5: memref<1x128xf32, #tpu.memory_space<vmem>>, %arg6: memref<128x256xbf16, #tpu.memory_space<vmem>>, %arg7: memref<1x256xf32, #tpu.memory_space<vmem>>, %arg8: memref<128x128xbf16, #tpu.memory_space<vmem>>, %arg9: memref<1x128xf32, #tpu.memory_space<vmem>>, %arg10: memref<1x128xf32, #tpu.memory_space<vmem>>, %arg11: memref<1x128xf32, #tpu.memory_space<vmem>>, %arg12: memref<1x8x128xf32, #tpu.memory_space<vmem>>) attributes {dimension_semantics = [#tpu.dimension_semantics<parallel>], iteration_bounds = array<i64: 2>, scalar_prefetch = 0 : i64, scratch_operands = 0 : i64, tpu.core_type = #tpu.core_type<tc>, window_params = [{transform_indices = @transform_0, window_bounds = array<i64: 1, 8, 128>}, {transform_indices = @transform_1, window_bounds = array<i64: 1, 8, 128>}, {transform_indices = @transform_2, window_bounds = array<i64: 1, 8, 8>}, {pipeline_mode = #tpu.pipeline_mode<synchronous>, transform_indices = @transform_3, window_bounds = array<i64: 128, 128>}, {pipeline_mode = #tpu.pipeline_mode<synchronous>, transform_indices = @transform_4, window_bounds = array<i64: 1, 128>}, {pipeline_mode = #tpu.pipeline_mode<synchronous>, transform_indices = @transform_5, window_bounds = array<i64: 128, 256>}, {pipeline_mode = #tpu.pipeline_mode<synchronous>, transform_indices = @transform_6, window_bounds = array<i64: 1, 256>}, {pipeline_mode = #tpu.pipeline_mode<synchronous>, transform_indices = @transform_7, window_bounds = array<i64: 128, 128>}, {pipeline_mode = #tpu.pipeline_mode<synchronous>, transform_indices = @transform_8, window_bounds = array<i64: 1, 128>}, {pipeline_mode = #tpu.pipeline_mode<synchronous>, transform_indices = @transform_9, window_bounds = array<i64: 1, 128>}, {pipeline_mode = #tpu.pipeline_mode<synchronous>, transform_indices = @transform_10, window_bounds = array<i64: 1, 128>}, {transform_indices = @transform_11, window_bounds = array<i64: 1, 8, 128>}]} {
    %c0 = arith.constant 0 : index
    %c0_0 = arith.constant 0 : index
    %c0_1 = arith.constant 0 : index
    %0 = vector.load %arg1[%c0, %c0_0, %c0_1] : memref<1x8x128xf32, #tpu.memory_space<vmem>>, vector<1x8x128xf32>
    %1 = vector.shape_cast %0 : vector<1x8x128xf32> to vector<8x128xf32>
    %c0_2 = arith.constant 0 : index
    %c0_3 = arith.constant 0 : index
    %c0_4 = arith.constant 0 : index
    %2 = vector.load %arg2[%c0_2, %c0_3, %c0_4] : memref<1x8x128xf32, #tpu.memory_space<vmem>>, vector<1x8x128xf32>
    %3 = vector.shape_cast %2 : vector<1x8x128xf32> to vector<8x128xf32>
    %c0_5 = arith.constant 0 : index
    %c0_6 = arith.constant 0 : index
    %c0_7 = arith.constant 0 : index
    %4 = vector.load %arg3[%c0_5, %c0_6, %c0_7] : memref<1x8x8xi32, #tpu.memory_space<vmem>>, vector<1x8x8xi32>
    %5 = vector.shape_cast %4 : vector<1x8x8xi32> to vector<8x8xi32>
    %c0_i32 = arith.constant 0 : i32
    %6 = vector.broadcast %c0_i32 : i32 to vector<8x8xi32>
    %7 = arith.cmpi eq, %5, %6 : vector<8x8xi32>
    %8 = arith.truncf %1 : vector<8x128xf32> to vector<8x128xbf16>
    %c0_8 = arith.constant 0 : index
    %c0_9 = arith.constant 0 : index
    %9 = vector.load %arg4[%c0_8, %c0_9] : memref<128x128xbf16, #tpu.memory_space<vmem>>, vector<128x128xbf16>
    %cst = arith.constant dense<0.000000e+00> : vector<8x128xf32>
    %10 = tpu.matmul %8, %9, %cst {dimension_numbers = #tpu.dot_dimension_numbers<[1], [0], [0], [1], [0, 0, 1, 1], [], []>} : vector<8x128xbf16>, vector<128x128xbf16>, vector<8x128xf32> -> vector<8x128xf32>
    %c0_10 = arith.constant 0 : index
    %c0_11 = arith.constant 0 : index
    %11 = vector.load %arg5[%c0_10, %c0_11] : memref<1x128xf32, #tpu.memory_space<vmem>>, vector<1x128xf32>
    %12 = vector.broadcast %11 : vector<1x128xf32> to vector<8x128xf32>
    %13 = arith.addf %10, %12 : vector<8x128xf32>
    %14 = arith.truncf %3 : vector<8x128xf32> to vector<8x128xbf16>
    %c0_12 = arith.constant 0 : index
    %c0_13 = arith.constant 0 : index
    %15 = vector.load %arg6[%c0_12, %c0_13] : memref<128x256xbf16, #tpu.memory_space<vmem>>, vector<128x256xbf16>
    %cst_14 = arith.constant dense<0.000000e+00> : vector<8x256xf32>
    %16 = tpu.matmul %14, %15, %cst_14 {dimension_numbers = #tpu.dot_dimension_numbers<[1], [0], [0], [1], [0, 0, 1, 1], [], []>} : vector<8x128xbf16>, vector<128x256xbf16>, vector<8x256xf32> -> vector<8x256xf32>
    %c0_15 = arith.constant 0 : index
    %c0_16 = arith.constant 0 : index
    %17 = vector.load %arg7[%c0_15, %c0_16] : memref<1x256xf32, #tpu.memory_space<vmem>>, vector<1x256xf32>
    %18 = vector.broadcast %17 : vector<1x256xf32> to vector<8x256xf32>
    %19 = arith.addf %16, %18 : vector<8x256xf32>
    %cst_17 = arith.constant 2.500000e-01 : f32
    %20 = vector.broadcast %cst_17 : f32 to vector<8x128xf32>
    %21 = arith.mulf %13, %20 : vector<8x128xf32>
    %22 = vector.extract_strided_slice %21 {offsets = [0, 0], sizes = [8, 16], strides = [1, 1]} : vector<8x128xf32> to vector<8x16xf32>
    %23 = arith.truncf %22 : vector<8x16xf32> to vector<8x16xbf16>
    %24 = vector.extract_strided_slice %19 {offsets = [0, 0], sizes = [8, 16], strides = [1, 1]} : vector<8x256xf32> to vector<8x16xf32>
    %25 = arith.truncf %24 : vector<8x16xf32> to vector<8x16xbf16>
    %26 = vector.extract_strided_slice %19 {offsets = [0, 128], sizes = [8, 16], strides = [1, 1]} : vector<8x256xf32> to vector<8x16xf32>
    %27 = arith.truncf %26 : vector<8x16xf32> to vector<8x16xbf16>
    %cst_18 = arith.constant dense<0.000000e+00> : vector<8x8xf32>
    %28 = tpu.matmul %23, %25, %cst_18 {dimension_numbers = #tpu.dot_dimension_numbers<[1], [1], [0], [0], [0, 0, 1, 0], [], []>} : vector<8x16xbf16>, vector<8x16xbf16>, vector<8x8xf32> -> vector<8x8xf32>
    %cst_19 = arith.constant -1.000000e+09 : f32
    %29 = vector.broadcast %cst_19 : f32 to vector<8x8xf32>
    %30 = arith.select %7, %29, %28 : vector<8x8xi1>, vector<8x8xf32>
    %cst_20 = arith.constant dense<0xFF800000> : vector<8xf32>
    %31 = vector.multi_reduction <maximumf>, %30, %cst_20 [1] : vector<8x8xf32> to vector<8xf32>
    %32 = vector.shape_cast %31 : vector<8xf32> to vector<8x1xf32>
    %33 = vector.broadcast %32 : vector<8x1xf32> to vector<8x8xf32>
    %34 = arith.subf %30, %33 : vector<8x8xf32>
    %35 = math.exp %34 : vector<8x8xf32>
    %cst_21 = arith.constant dense<0.000000e+00> : vector<8xf32>
    %36 = vector.multi_reduction <add>, %35, %cst_21 [1] : vector<8x8xf32> to vector<8xf32>
    %37 = vector.shape_cast %36 : vector<8xf32> to vector<8x1xf32>
    %38 = tpu.reciprocal %37 {approx = true} : vector<8x1xf32> -> vector<8x1xf32>
    %39 = vector.broadcast %38 : vector<8x1xf32> to vector<8x8xf32>
    %40 = arith.mulf %35, %39 : vector<8x8xf32>
    %41 = arith.truncf %40 : vector<8x8xf32> to vector<8x8xbf16>
    %cst_22 = arith.constant dense<0.000000e+00> : vector<8x16xf32>
    %42 = tpu.matmul %41, %27, %cst_22 {dimension_numbers = #tpu.dot_dimension_numbers<[1], [0], [0], [1], [0, 0, 1, 1], [], []>} : vector<8x8xbf16>, vector<8x16xbf16>, vector<8x16xf32> -> vector<8x16xf32>
    %43 = vector.extract_strided_slice %21 {offsets = [0, 16], sizes = [8, 16], strides = [1, 1]} : vector<8x128xf32> to vector<8x16xf32>
    %44 = arith.truncf %43 : vector<8x16xf32> to vector<8x16xbf16>
    %45 = vector.extract_strided_slice %19 {offsets = [0, 16], sizes = [8, 16], strides = [1, 1]} : vector<8x256xf32> to vector<8x16xf32>
    %46 = arith.truncf %45 : vector<8x16xf32> to vector<8x16xbf16>
    %47 = vector.extract_strided_slice %19 {offsets = [0, 144], sizes = [8, 16], strides = [1, 1]} : vector<8x256xf32> to vector<8x16xf32>
    %48 = arith.truncf %47 : vector<8x16xf32> to vector<8x16xbf16>
    %cst_23 = arith.constant dense<0.000000e+00> : vector<8x8xf32>
    %49 = tpu.matmul %44, %46, %cst_23 {dimension_numbers = #tpu.dot_dimension_numbers<[1], [1], [0], [0], [0, 0, 1, 0], [], []>} : vector<8x16xbf16>, vector<8x16xbf16>, vector<8x8xf32> -> vector<8x8xf32>
    %cst_24 = arith.constant -1.000000e+09 : f32
    %50 = vector.broadcast %cst_24 : f32 to vector<8x8xf32>
    %51 = arith.select %7, %50, %49 : vector<8x8xi1>, vector<8x8xf32>
    %cst_25 = arith.constant dense<0xFF800000> : vector<8xf32>
    %52 = vector.multi_reduction <maximumf>, %51, %cst_25 [1] : vector<8x8xf32> to vector<8xf32>
    %53 = vector.shape_cast %52 : vector<8xf32> to vector<8x1xf32>
    %54 = vector.broadcast %53 : vector<8x1xf32> to vector<8x8xf32>
    %55 = arith.subf %51, %54 : vector<8x8xf32>
    %56 = math.exp %55 : vector<8x8xf32>
    %cst_26 = arith.constant dense<0.000000e+00> : vector<8xf32>
    %57 = vector.multi_reduction <add>, %56, %cst_26 [1] : vector<8x8xf32> to vector<8xf32>
    %58 = vector.shape_cast %57 : vector<8xf32> to vector<8x1xf32>
    %59 = tpu.reciprocal %58 {approx = true} : vector<8x1xf32> -> vector<8x1xf32>
    %60 = vector.broadcast %59 : vector<8x1xf32> to vector<8x8xf32>
    %61 = arith.mulf %56, %60 : vector<8x8xf32>
    %62 = arith.truncf %61 : vector<8x8xf32> to vector<8x8xbf16>
    %cst_27 = arith.constant dense<0.000000e+00> : vector<8x16xf32>
    %63 = tpu.matmul %62, %48, %cst_27 {dimension_numbers = #tpu.dot_dimension_numbers<[1], [0], [0], [1], [0, 0, 1, 1], [], []>} : vector<8x8xbf16>, vector<8x16xbf16>, vector<8x16xf32> -> vector<8x16xf32>
    %64 = vector.extract_strided_slice %21 {offsets = [0, 32], sizes = [8, 16], strides = [1, 1]} : vector<8x128xf32> to vector<8x16xf32>
    %65 = arith.truncf %64 : vector<8x16xf32> to vector<8x16xbf16>
    %66 = vector.extract_strided_slice %19 {offsets = [0, 32], sizes = [8, 16], strides = [1, 1]} : vector<8x256xf32> to vector<8x16xf32>
    %67 = arith.truncf %66 : vector<8x16xf32> to vector<8x16xbf16>
    %68 = vector.extract_strided_slice %19 {offsets = [0, 160], sizes = [8, 16], strides = [1, 1]} : vector<8x256xf32> to vector<8x16xf32>
    %69 = arith.truncf %68 : vector<8x16xf32> to vector<8x16xbf16>
    %cst_28 = arith.constant dense<0.000000e+00> : vector<8x8xf32>
    %70 = tpu.matmul %65, %67, %cst_28 {dimension_numbers = #tpu.dot_dimension_numbers<[1], [1], [0], [0], [0, 0, 1, 0], [], []>} : vector<8x16xbf16>, vector<8x16xbf16>, vector<8x8xf32> -> vector<8x8xf32>
    %cst_29 = arith.constant -1.000000e+09 : f32
    %71 = vector.broadcast %cst_29 : f32 to vector<8x8xf32>
    %72 = arith.select %7, %71, %70 : vector<8x8xi1>, vector<8x8xf32>
    %cst_30 = arith.constant dense<0xFF800000> : vector<8xf32>
    %73 = vector.multi_reduction <maximumf>, %72, %cst_30 [1] : vector<8x8xf32> to vector<8xf32>
    %74 = vector.shape_cast %73 : vector<8xf32> to vector<8x1xf32>
    %75 = vector.broadcast %74 : vector<8x1xf32> to vector<8x8xf32>
    %76 = arith.subf %72, %75 : vector<8x8xf32>
    %77 = math.exp %76 : vector<8x8xf32>
    %cst_31 = arith.constant dense<0.000000e+00> : vector<8xf32>
    %78 = vector.multi_reduction <add>, %77, %cst_31 [1] : vector<8x8xf32> to vector<8xf32>
    %79 = vector.shape_cast %78 : vector<8xf32> to vector<8x1xf32>
    %80 = tpu.reciprocal %79 {approx = true} : vector<8x1xf32> -> vector<8x1xf32>
    %81 = vector.broadcast %80 : vector<8x1xf32> to vector<8x8xf32>
    %82 = arith.mulf %77, %81 : vector<8x8xf32>
    %83 = arith.truncf %82 : vector<8x8xf32> to vector<8x8xbf16>
    %cst_32 = arith.constant dense<0.000000e+00> : vector<8x16xf32>
    %84 = tpu.matmul %83, %69, %cst_32 {dimension_numbers = #tpu.dot_dimension_numbers<[1], [0], [0], [1], [0, 0, 1, 1], [], []>} : vector<8x8xbf16>, vector<8x16xbf16>, vector<8x16xf32> -> vector<8x16xf32>
    %85 = vector.extract_strided_slice %21 {offsets = [0, 48], sizes = [8, 16], strides = [1, 1]} : vector<8x128xf32> to vector<8x16xf32>
    %86 = arith.truncf %85 : vector<8x16xf32> to vector<8x16xbf16>
    %87 = vector.extract_strided_slice %19 {offsets = [0, 48], sizes = [8, 16], strides = [1, 1]} : vector<8x256xf32> to vector<8x16xf32>
    %88 = arith.truncf %87 : vector<8x16xf32> to vector<8x16xbf16>
    %89 = vector.extract_strided_slice %19 {offsets = [0, 176], sizes = [8, 16], strides = [1, 1]} : vector<8x256xf32> to vector<8x16xf32>
    %90 = arith.truncf %89 : vector<8x16xf32> to vector<8x16xbf16>
    %cst_33 = arith.constant dense<0.000000e+00> : vector<8x8xf32>
    %91 = tpu.matmul %86, %88, %cst_33 {dimension_numbers = #tpu.dot_dimension_numbers<[1], [1], [0], [0], [0, 0, 1, 0], [], []>} : vector<8x16xbf16>, vector<8x16xbf16>, vector<8x8xf32> -> vector<8x8xf32>
    %cst_34 = arith.constant -1.000000e+09 : f32
    %92 = vector.broadcast %cst_34 : f32 to vector<8x8xf32>
    %93 = arith.select %7, %92, %91 : vector<8x8xi1>, vector<8x8xf32>
    %cst_35 = arith.constant dense<0xFF800000> : vector<8xf32>
    %94 = vector.multi_reduction <maximumf>, %93, %cst_35 [1] : vector<8x8xf32> to vector<8xf32>
    %95 = vector.shape_cast %94 : vector<8xf32> to vector<8x1xf32>
    %96 = vector.broadcast %95 : vector<8x1xf32> to vector<8x8xf32>
    %97 = arith.subf %93, %96 : vector<8x8xf32>
    %98 = math.exp %97 : vector<8x8xf32>
    %cst_36 = arith.constant dense<0.000000e+00> : vector<8xf32>
    %99 = vector.multi_reduction <add>, %98, %cst_36 [1] : vector<8x8xf32> to vector<8xf32>
    %100 = vector.shape_cast %99 : vector<8xf32> to vector<8x1xf32>
    %101 = tpu.reciprocal %100 {approx = true} : vector<8x1xf32> -> vector<8x1xf32>
    %102 = vector.broadcast %101 : vector<8x1xf32> to vector<8x8xf32>
    %103 = arith.mulf %98, %102 : vector<8x8xf32>
    %104 = arith.truncf %103 : vector<8x8xf32> to vector<8x8xbf16>
    %cst_37 = arith.constant dense<0.000000e+00> : vector<8x16xf32>
    %105 = tpu.matmul %104, %90, %cst_37 {dimension_numbers = #tpu.dot_dimension_numbers<[1], [0], [0], [1], [0, 0, 1, 1], [], []>} : vector<8x8xbf16>, vector<8x16xbf16>, vector<8x16xf32> -> vector<8x16xf32>
    %106 = vector.extract_strided_slice %21 {offsets = [0, 64], sizes = [8, 16], strides = [1, 1]} : vector<8x128xf32> to vector<8x16xf32>
    %107 = arith.truncf %106 : vector<8x16xf32> to vector<8x16xbf16>
    %108 = vector.extract_strided_slice %19 {offsets = [0, 64], sizes = [8, 16], strides = [1, 1]} : vector<8x256xf32> to vector<8x16xf32>
    %109 = arith.truncf %108 : vector<8x16xf32> to vector<8x16xbf16>
    %110 = vector.extract_strided_slice %19 {offsets = [0, 192], sizes = [8, 16], strides = [1, 1]} : vector<8x256xf32> to vector<8x16xf32>
    %111 = arith.truncf %110 : vector<8x16xf32> to vector<8x16xbf16>
    %cst_38 = arith.constant dense<0.000000e+00> : vector<8x8xf32>
    %112 = tpu.matmul %107, %109, %cst_38 {dimension_numbers = #tpu.dot_dimension_numbers<[1], [1], [0], [0], [0, 0, 1, 0], [], []>} : vector<8x16xbf16>, vector<8x16xbf16>, vector<8x8xf32> -> vector<8x8xf32>
    %cst_39 = arith.constant -1.000000e+09 : f32
    %113 = vector.broadcast %cst_39 : f32 to vector<8x8xf32>
    %114 = arith.select %7, %113, %112 : vector<8x8xi1>, vector<8x8xf32>
    %cst_40 = arith.constant dense<0xFF800000> : vector<8xf32>
    %115 = vector.multi_reduction <maximumf>, %114, %cst_40 [1] : vector<8x8xf32> to vector<8xf32>
    %116 = vector.shape_cast %115 : vector<8xf32> to vector<8x1xf32>
    %117 = vector.broadcast %116 : vector<8x1xf32> to vector<8x8xf32>
    %118 = arith.subf %114, %117 : vector<8x8xf32>
    %119 = math.exp %118 : vector<8x8xf32>
    %cst_41 = arith.constant dense<0.000000e+00> : vector<8xf32>
    %120 = vector.multi_reduction <add>, %119, %cst_41 [1] : vector<8x8xf32> to vector<8xf32>
    %121 = vector.shape_cast %120 : vector<8xf32> to vector<8x1xf32>
    %122 = tpu.reciprocal %121 {approx = true} : vector<8x1xf32> -> vector<8x1xf32>
    %123 = vector.broadcast %122 : vector<8x1xf32> to vector<8x8xf32>
    %124 = arith.mulf %119, %123 : vector<8x8xf32>
    %125 = arith.truncf %124 : vector<8x8xf32> to vector<8x8xbf16>
    %cst_42 = arith.constant dense<0.000000e+00> : vector<8x16xf32>
    %126 = tpu.matmul %125, %111, %cst_42 {dimension_numbers = #tpu.dot_dimension_numbers<[1], [0], [0], [1], [0, 0, 1, 1], [], []>} : vector<8x8xbf16>, vector<8x16xbf16>, vector<8x16xf32> -> vector<8x16xf32>
    %127 = vector.extract_strided_slice %21 {offsets = [0, 80], sizes = [8, 16], strides = [1, 1]} : vector<8x128xf32> to vector<8x16xf32>
    %128 = arith.truncf %127 : vector<8x16xf32> to vector<8x16xbf16>
    %129 = vector.extract_strided_slice %19 {offsets = [0, 80], sizes = [8, 16], strides = [1, 1]} : vector<8x256xf32> to vector<8x16xf32>
    %130 = arith.truncf %129 : vector<8x16xf32> to vector<8x16xbf16>
    %131 = vector.extract_strided_slice %19 {offsets = [0, 208], sizes = [8, 16], strides = [1, 1]} : vector<8x256xf32> to vector<8x16xf32>
    %132 = arith.truncf %131 : vector<8x16xf32> to vector<8x16xbf16>
    %cst_43 = arith.constant dense<0.000000e+00> : vector<8x8xf32>
    %133 = tpu.matmul %128, %130, %cst_43 {dimension_numbers = #tpu.dot_dimension_numbers<[1], [1], [0], [0], [0, 0, 1, 0], [], []>} : vector<8x16xbf16>, vector<8x16xbf16>, vector<8x8xf32> -> vector<8x8xf32>
    %cst_44 = arith.constant -1.000000e+09 : f32
    %134 = vector.broadcast %cst_44 : f32 to vector<8x8xf32>
    %135 = arith.select %7, %134, %133 : vector<8x8xi1>, vector<8x8xf32>
    %cst_45 = arith.constant dense<0xFF800000> : vector<8xf32>
    %136 = vector.multi_reduction <maximumf>, %135, %cst_45 [1] : vector<8x8xf32> to vector<8xf32>
    %137 = vector.shape_cast %136 : vector<8xf32> to vector<8x1xf32>
    %138 = vector.broadcast %137 : vector<8x1xf32> to vector<8x8xf32>
    %139 = arith.subf %135, %138 : vector<8x8xf32>
    %140 = math.exp %139 : vector<8x8xf32>
    %cst_46 = arith.constant dense<0.000000e+00> : vector<8xf32>
    %141 = vector.multi_reduction <add>, %140, %cst_46 [1] : vector<8x8xf32> to vector<8xf32>
    %142 = vector.shape_cast %141 : vector<8xf32> to vector<8x1xf32>
    %143 = tpu.reciprocal %142 {approx = true} : vector<8x1xf32> -> vector<8x1xf32>
    %144 = vector.broadcast %143 : vector<8x1xf32> to vector<8x8xf32>
    %145 = arith.mulf %140, %144 : vector<8x8xf32>
    %146 = arith.truncf %145 : vector<8x8xf32> to vector<8x8xbf16>
    %cst_47 = arith.constant dense<0.000000e+00> : vector<8x16xf32>
    %147 = tpu.matmul %146, %132, %cst_47 {dimension_numbers = #tpu.dot_dimension_numbers<[1], [0], [0], [1], [0, 0, 1, 1], [], []>} : vector<8x8xbf16>, vector<8x16xbf16>, vector<8x16xf32> -> vector<8x16xf32>
    %148 = vector.extract_strided_slice %21 {offsets = [0, 96], sizes = [8, 16], strides = [1, 1]} : vector<8x128xf32> to vector<8x16xf32>
    %149 = arith.truncf %148 : vector<8x16xf32> to vector<8x16xbf16>
    %150 = vector.extract_strided_slice %19 {offsets = [0, 96], sizes = [8, 16], strides = [1, 1]} : vector<8x256xf32> to vector<8x16xf32>
    %151 = arith.truncf %150 : vector<8x16xf32> to vector<8x16xbf16>
    %152 = vector.extract_strided_slice %19 {offsets = [0, 224], sizes = [8, 16], strides = [1, 1]} : vector<8x256xf32> to vector<8x16xf32>
    %153 = arith.truncf %152 : vector<8x16xf32> to vector<8x16xbf16>
    %cst_48 = arith.constant dense<0.000000e+00> : vector<8x8xf32>
    %154 = tpu.matmul %149, %151, %cst_48 {dimension_numbers = #tpu.dot_dimension_numbers<[1], [1], [0], [0], [0, 0, 1, 0], [], []>} : vector<8x16xbf16>, vector<8x16xbf16>, vector<8x8xf32> -> vector<8x8xf32>
    %cst_49 = arith.constant -1.000000e+09 : f32
    %155 = vector.broadcast %cst_49 : f32 to vector<8x8xf32>
    %156 = arith.select %7, %155, %154 : vector<8x8xi1>, vector<8x8xf32>
    %cst_50 = arith.constant dense<0xFF800000> : vector<8xf32>
    %157 = vector.multi_reduction <maximumf>, %156, %cst_50 [1] : vector<8x8xf32> to vector<8xf32>
    %158 = vector.shape_cast %157 : vector<8xf32> to vector<8x1xf32>
    %159 = vector.broadcast %158 : vector<8x1xf32> to vector<8x8xf32>
    %160 = arith.subf %156, %159 : vector<8x8xf32>
    %161 = math.exp %160 : vector<8x8xf32>
    %cst_51 = arith.constant dense<0.000000e+00> : vector<8xf32>
    %162 = vector.multi_reduction <add>, %161, %cst_51 [1] : vector<8x8xf32> to vector<8xf32>
    %163 = vector.shape_cast %162 : vector<8xf32> to vector<8x1xf32>
    %164 = tpu.reciprocal %163 {approx = true} : vector<8x1xf32> -> vector<8x1xf32>
    %165 = vector.broadcast %164 : vector<8x1xf32> to vector<8x8xf32>
    %166 = arith.mulf %161, %165 : vector<8x8xf32>
    %167 = arith.truncf %166 : vector<8x8xf32> to vector<8x8xbf16>
    %cst_52 = arith.constant dense<0.000000e+00> : vector<8x16xf32>
    %168 = tpu.matmul %167, %153, %cst_52 {dimension_numbers = #tpu.dot_dimension_numbers<[1], [0], [0], [1], [0, 0, 1, 1], [], []>} : vector<8x8xbf16>, vector<8x16xbf16>, vector<8x16xf32> -> vector<8x16xf32>
    %169 = vector.extract_strided_slice %21 {offsets = [0, 112], sizes = [8, 16], strides = [1, 1]} : vector<8x128xf32> to vector<8x16xf32>
    %170 = arith.truncf %169 : vector<8x16xf32> to vector<8x16xbf16>
    %171 = vector.extract_strided_slice %19 {offsets = [0, 112], sizes = [8, 16], strides = [1, 1]} : vector<8x256xf32> to vector<8x16xf32>
    %172 = arith.truncf %171 : vector<8x16xf32> to vector<8x16xbf16>
    %173 = vector.extract_strided_slice %19 {offsets = [0, 240], sizes = [8, 16], strides = [1, 1]} : vector<8x256xf32> to vector<8x16xf32>
    %174 = arith.truncf %173 : vector<8x16xf32> to vector<8x16xbf16>
    %cst_53 = arith.constant dense<0.000000e+00> : vector<8x8xf32>
    %175 = tpu.matmul %170, %172, %cst_53 {dimension_numbers = #tpu.dot_dimension_numbers<[1], [1], [0], [0], [0, 0, 1, 0], [], []>} : vector<8x16xbf16>, vector<8x16xbf16>, vector<8x8xf32> -> vector<8x8xf32>
    %cst_54 = arith.constant -1.000000e+09 : f32
    %176 = vector.broadcast %cst_54 : f32 to vector<8x8xf32>
    %177 = arith.select %7, %176, %175 : vector<8x8xi1>, vector<8x8xf32>
    %cst_55 = arith.constant dense<0xFF800000> : vector<8xf32>
    %178 = vector.multi_reduction <maximumf>, %177, %cst_55 [1] : vector<8x8xf32> to vector<8xf32>
    %179 = vector.shape_cast %178 : vector<8xf32> to vector<8x1xf32>
    %180 = vector.broadcast %179 : vector<8x1xf32> to vector<8x8xf32>
    %181 = arith.subf %177, %180 : vector<8x8xf32>
    %182 = math.exp %181 : vector<8x8xf32>
    %cst_56 = arith.constant dense<0.000000e+00> : vector<8xf32>
    %183 = vector.multi_reduction <add>, %182, %cst_56 [1] : vector<8x8xf32> to vector<8xf32>
    %184 = vector.shape_cast %183 : vector<8xf32> to vector<8x1xf32>
    %185 = tpu.reciprocal %184 {approx = true} : vector<8x1xf32> -> vector<8x1xf32>
    %186 = vector.broadcast %185 : vector<8x1xf32> to vector<8x8xf32>
    %187 = arith.mulf %182, %186 : vector<8x8xf32>
    %188 = arith.truncf %187 : vector<8x8xf32> to vector<8x8xbf16>
    %cst_57 = arith.constant dense<0.000000e+00> : vector<8x16xf32>
    %189 = tpu.matmul %188, %174, %cst_57 {dimension_numbers = #tpu.dot_dimension_numbers<[1], [0], [0], [1], [0, 0, 1, 1], [], []>} : vector<8x8xbf16>, vector<8x16xbf16>, vector<8x16xf32> -> vector<8x16xf32>
    %190 = tpu.concatenate %42, %63, %84, %105, %126, %147, %168, %189 in 1 : vector<8x16xf32>, vector<8x16xf32>, vector<8x16xf32>, vector<8x16xf32>, vector<8x16xf32>, vector<8x16xf32>, vector<8x16xf32>, vector<8x16xf32> -> vector<8x128xf32>
    %191 = arith.truncf %190 : vector<8x128xf32> to vector<8x128xbf16>
    %c0_58 = arith.constant 0 : index
    %c0_59 = arith.constant 0 : index
    %192 = vector.load %arg8[%c0_58, %c0_59] : memref<128x128xbf16, #tpu.memory_space<vmem>>, vector<128x128xbf16>
    %cst_60 = arith.constant dense<0.000000e+00> : vector<8x128xf32>
    %193 = tpu.matmul %191, %192, %cst_60 {dimension_numbers = #tpu.dot_dimension_numbers<[1], [0], [0], [1], [0, 0, 1, 1], [], []>} : vector<8x128xbf16>, vector<128x128xbf16>, vector<8x128xf32> -> vector<8x128xf32>
    %c0_61 = arith.constant 0 : index
    %c0_62 = arith.constant 0 : index
    %194 = vector.load %arg9[%c0_61, %c0_62] : memref<1x128xf32, #tpu.memory_space<vmem>>, vector<1x128xf32>
    %195 = vector.broadcast %194 : vector<1x128xf32> to vector<8x128xf32>
    %196 = arith.addf %193, %195 : vector<8x128xf32>
    %197 = arith.addf %1, %196 : vector<8x128xf32>
    %c0_63 = arith.constant 0 : index
    %c0_64 = arith.constant 0 : index
    %198 = vector.load %arg10[%c0_63, %c0_64] : memref<1x128xf32, #tpu.memory_space<vmem>>, vector<1x128xf32>
    %c0_65 = arith.constant 0 : index
    %c0_66 = arith.constant 0 : index
    %199 = vector.load %arg11[%c0_65, %c0_66] : memref<1x128xf32, #tpu.memory_space<vmem>>, vector<1x128xf32>
    %cst_67 = arith.constant dense<0.000000e+00> : vector<8xf32>
    %200 = vector.multi_reduction <add>, %197, %cst_67 [1] : vector<8x128xf32> to vector<8xf32>
    %201 = vector.shape_cast %200 : vector<8xf32> to vector<8x1xf32>
    %cst_68 = arith.constant 1.280000e+02 : f32
    %202 = vector.broadcast %cst_68 : f32 to vector<8x1xf32>
    %203 = arith.divf %201, %202 : vector<8x1xf32>
    %204 = vector.broadcast %203 : vector<8x1xf32> to vector<8x128xf32>
    %205 = arith.subf %197, %204 : vector<8x128xf32>
    %206 = arith.mulf %205, %205 : vector<8x128xf32>
    %cst_69 = arith.constant dense<0.000000e+00> : vector<8xf32>
    %207 = vector.multi_reduction <add>, %206, %cst_69 [1] : vector<8x128xf32> to vector<8xf32>
    %208 = vector.shape_cast %207 : vector<8xf32> to vector<8x1xf32>
    %cst_70 = arith.constant 1.280000e+02 : f32
    %209 = vector.broadcast %cst_70 : f32 to vector<8x1xf32>
    %210 = arith.divf %208, %209 : vector<8x1xf32>
    %211 = vector.broadcast %203 : vector<8x1xf32> to vector<8x128xf32>
    %212 = arith.subf %197, %211 : vector<8x128xf32>
    %cst_71 = arith.constant 9.99999974E-6 : f32
    %213 = vector.broadcast %cst_71 : f32 to vector<8x1xf32>
    %214 = arith.addf %210, %213 : vector<8x1xf32>
    %215 = math.rsqrt %214 : vector<8x1xf32>
    %216 = vector.broadcast %215 : vector<8x1xf32> to vector<8x128xf32>
    %217 = arith.mulf %212, %216 : vector<8x128xf32>
    %218 = vector.broadcast %198 : vector<1x128xf32> to vector<8x128xf32>
    %219 = arith.mulf %217, %218 : vector<8x128xf32>
    %220 = vector.broadcast %199 : vector<1x128xf32> to vector<8x128xf32>
    %221 = arith.addf %219, %220 : vector<8x128xf32>
    %c0_72 = arith.constant 0 : index
    %c0_73 = arith.constant 0 : index
    %c0_74 = arith.constant 0 : index
    %222 = vector.load %arg12[%c0_72, %c0_73, %c0_74] : memref<1x8x128xf32, #tpu.memory_space<vmem>>, vector<1x8x128xf32>
    %223 = vector.shape_cast %222 : vector<1x8x128xf32> to vector<8x128xf32>
    %224 = vector.shape_cast %221 : vector<8x128xf32> to vector<1x8x128xf32>
    tpu.vector_store %arg12[%c0_72, %c0_73, %c0_74], %224 {strides = array<i32>} : memref<1x8x128xf32, #tpu.memory_space<vmem>>, vector<1x8x128xf32>,
    return
  }
  func.func @transform_0(%arg0: i32) -> (i32, i32, i32) {
    %c0_i32 = arith.constant 0 : i32
    %c0_i32_0 = arith.constant 0 : i32
    %c0_i32_1 = arith.constant 0 : i32
    return %arg0, %c0_i32, %c0_i32_0 : i32, i32, i32
  }
  func.func @transform_1(%arg0: i32) -> (i32, i32, i32) {
    %c0_i32 = arith.constant 0 : i32
    %c0_i32_0 = arith.constant 0 : i32
    %c0_i32_1 = arith.constant 0 : i32
    return %arg0, %c0_i32, %c0_i32_0 : i32, i32, i32
  }
  func.func @transform_2(%arg0: i32) -> (i32, i32, i32) {
    %c0_i32 = arith.constant 0 : i32
    %c0_i32_0 = arith.constant 0 : i32
    %c0_i32_1 = arith.constant 0 : i32
    return %arg0, %c0_i32, %c0_i32_0 : i32, i32, i32
  }
  func.func @transform_3(%arg0: i32) -> (i32, i32) {
    %c0_i32 = arith.constant 0 : i32
    %c0_i32_0 = arith.constant 0 : i32
    %c0_i32_1 = arith.constant 0 : i32
    return %c0_i32, %c0_i32_0 : i32, i32
  }
  func.func @transform_4(%arg0: i32) -> (i32, i32) {
    %c0_i32 = arith.constant 0 : i32
    %c0_i32_0 = arith.constant 0 : i32
    %c0_i32_1 = arith.constant 0 : i32
    return %c0_i32, %c0_i32_0 : i32, i32
  }
  func.func @transform_5(%arg0: i32) -> (i32, i32) {
    %c0_i32 = arith.constant 0 : i32
    %c0_i32_0 = arith.constant 0 : i32
    %c0_i32_1 = arith.constant 0 : i32
    return %c0_i32, %c0_i32_0 : i32, i32
  }
  func.func @transform_6(%arg0: i32) -> (i32, i32) {
    %c0_i32 = arith.constant 0 : i32
    %c0_i32_0 = arith.constant 0 : i32
    %c0_i32_1 = arith.constant 0 : i32
    return %c0_i32, %c0_i32_0 : i32, i32
  }
  func.func @transform_7(%arg0: i32) -> (i32, i32) {
    %c0_i32 = arith.constant 0 : i32
    %c0_i32_0 = arith.constant 0 : i32
    %c0_i32_1 = arith.constant 0 : i32
    return %c0_i32, %c0_i32_0 : i32, i32
  }
  func.func @transform_8(%arg0: i32) -> (i32, i32) {
    %c0_i32 = arith.constant 0 : i32
    %c0_i32_0 = arith.constant 0 : i32
    %c0_i32_1 = arith.constant 0 : i32
    return %c0_i32, %c0_i32_0 : i32, i32
  }
  func.func @transform_9(%arg0: i32) -> (i32, i32) {
    %c0_i32 = arith.constant 0 : i32
    %c0_i32_0 = arith.constant 0 : i32
    %c0_i32_1 = arith.constant 0 : i32
    return %c0_i32, %c0_i32_0 : i32, i32
  }
  func.func @transform_10(%arg0: i32) -> (i32, i32) {
    %c0_i32 = arith.constant 0 : i32
    %c0_i32_0 = arith.constant 0 : i32
    %c0_i32_1 = arith.constant 0 : i32
    return %c0_i32, %c0_i32_0 : i32, i32
  }
  func.func @transform_11(%arg0: i32) -> (i32, i32, i32) {
    %c0_i32 = arith.constant 0 : i32
    %c0_i32_0 = arith.constant 0 : i32
    %c0_i32_1 = arith.constant 0 : i32
    return %arg0, %c0_i32, %c0_i32_0 : i32, i32, i32
  }
}

module attributes {stable_mosaic.version = 11 : i64} {
  func.func @_ffn_addln_kernel(%arg0: i32, %arg1: memref<1x8x128xf32, #tpu.memory_space<vmem>>, %arg2: memref<128x512xbf16, #tpu.memory_space<vmem>>, %arg3: memref<1x512xf32, #tpu.memory_space<vmem>>, %arg4: memref<512x128xbf16, #tpu.memory_space<vmem>>, %arg5: memref<1x128xf32, #tpu.memory_space<vmem>>, %arg6: memref<1x128xf32, #tpu.memory_space<vmem>>, %arg7: memref<1x128xf32, #tpu.memory_space<vmem>>, %arg8: memref<1x8x128xf32, #tpu.memory_space<vmem>>) attributes {dimension_semantics = [#tpu.dimension_semantics<parallel>], iteration_bounds = array<i64: 2>, scalar_prefetch = 0 : i64, scratch_operands = 0 : i64, tpu.core_type = #tpu.core_type<tc>, window_params = [{transform_indices = @transform_0, window_bounds = array<i64: 1, 8, 128>}, {pipeline_mode = #tpu.pipeline_mode<synchronous>, transform_indices = @transform_1, window_bounds = array<i64: 128, 512>}, {pipeline_mode = #tpu.pipeline_mode<synchronous>, transform_indices = @transform_2, window_bounds = array<i64: 1, 512>}, {pipeline_mode = #tpu.pipeline_mode<synchronous>, transform_indices = @transform_3, window_bounds = array<i64: 512, 128>}, {pipeline_mode = #tpu.pipeline_mode<synchronous>, transform_indices = @transform_4, window_bounds = array<i64: 1, 128>}, {pipeline_mode = #tpu.pipeline_mode<synchronous>, transform_indices = @transform_5, window_bounds = array<i64: 1, 128>}, {pipeline_mode = #tpu.pipeline_mode<synchronous>, transform_indices = @transform_6, window_bounds = array<i64: 1, 128>}, {transform_indices = @transform_7, window_bounds = array<i64: 1, 8, 128>}]} {
    %c0 = arith.constant 0 : index
    %c0_0 = arith.constant 0 : index
    %c0_1 = arith.constant 0 : index
    %0 = vector.load %arg1[%c0, %c0_0, %c0_1] : memref<1x8x128xf32, #tpu.memory_space<vmem>>, vector<1x8x128xf32>
    %1 = vector.shape_cast %0 : vector<1x8x128xf32> to vector<8x128xf32>
    %2 = arith.truncf %1 : vector<8x128xf32> to vector<8x128xbf16>
    %c0_2 = arith.constant 0 : index
    %c0_3 = arith.constant 0 : index
    %3 = vector.load %arg2[%c0_2, %c0_3] : memref<128x512xbf16, #tpu.memory_space<vmem>>, vector<128x512xbf16>
    %cst = arith.constant dense<0.000000e+00> : vector<8x512xf32>
    %4 = tpu.matmul %2, %3, %cst {dimension_numbers = #tpu.dot_dimension_numbers<[1], [0], [0], [1], [0, 0, 1, 1], [], []>} : vector<8x128xbf16>, vector<128x512xbf16>, vector<8x512xf32> -> vector<8x512xf32>
    %c0_4 = arith.constant 0 : index
    %c0_5 = arith.constant 0 : index
    %5 = vector.load %arg3[%c0_4, %c0_5] : memref<1x512xf32, #tpu.memory_space<vmem>>, vector<1x512xf32>
    %6 = vector.broadcast %5 : vector<1x512xf32> to vector<8x512xf32>
    %7 = arith.addf %4, %6 : vector<8x512xf32>
    %cst_6 = arith.constant 0.000000e+00 : f32
    %8 = vector.broadcast %cst_6 : f32 to vector<8x512xf32>
    %9 = arith.maximumf %7, %8 : vector<8x512xf32>
    %10 = arith.truncf %9 : vector<8x512xf32> to vector<8x512xbf16>
    %c0_7 = arith.constant 0 : index
    %c0_8 = arith.constant 0 : index
    %11 = vector.load %arg4[%c0_7, %c0_8] : memref<512x128xbf16, #tpu.memory_space<vmem>>, vector<512x128xbf16>
    %cst_9 = arith.constant dense<0.000000e+00> : vector<8x128xf32>
    %12 = tpu.matmul %10, %11, %cst_9 {dimension_numbers = #tpu.dot_dimension_numbers<[1], [0], [0], [1], [0, 0, 1, 1], [], []>} : vector<8x512xbf16>, vector<512x128xbf16>, vector<8x128xf32> -> vector<8x128xf32>
    %c0_10 = arith.constant 0 : index
    %c0_11 = arith.constant 0 : index
    %13 = vector.load %arg5[%c0_10, %c0_11] : memref<1x128xf32, #tpu.memory_space<vmem>>, vector<1x128xf32>
    %14 = vector.broadcast %13 : vector<1x128xf32> to vector<8x128xf32>
    %15 = arith.addf %12, %14 : vector<8x128xf32>
    %16 = arith.addf %1, %15 : vector<8x128xf32>
    %c0_12 = arith.constant 0 : index
    %c0_13 = arith.constant 0 : index
    %17 = vector.load %arg6[%c0_12, %c0_13] : memref<1x128xf32, #tpu.memory_space<vmem>>, vector<1x128xf32>
    %c0_14 = arith.constant 0 : index
    %c0_15 = arith.constant 0 : index
    %18 = vector.load %arg7[%c0_14, %c0_15] : memref<1x128xf32, #tpu.memory_space<vmem>>, vector<1x128xf32>
    %cst_16 = arith.constant dense<0.000000e+00> : vector<8xf32>
    %19 = vector.multi_reduction <add>, %16, %cst_16 [1] : vector<8x128xf32> to vector<8xf32>
    %20 = vector.shape_cast %19 : vector<8xf32> to vector<8x1xf32>
    %cst_17 = arith.constant 1.280000e+02 : f32
    %21 = vector.broadcast %cst_17 : f32 to vector<8x1xf32>
    %22 = arith.divf %20, %21 : vector<8x1xf32>
    %23 = vector.broadcast %22 : vector<8x1xf32> to vector<8x128xf32>
    %24 = arith.subf %16, %23 : vector<8x128xf32>
    %25 = arith.mulf %24, %24 : vector<8x128xf32>
    %cst_18 = arith.constant dense<0.000000e+00> : vector<8xf32>
    %26 = vector.multi_reduction <add>, %25, %cst_18 [1] : vector<8x128xf32> to vector<8xf32>
    %27 = vector.shape_cast %26 : vector<8xf32> to vector<8x1xf32>
    %cst_19 = arith.constant 1.280000e+02 : f32
    %28 = vector.broadcast %cst_19 : f32 to vector<8x1xf32>
    %29 = arith.divf %27, %28 : vector<8x1xf32>
    %30 = vector.broadcast %22 : vector<8x1xf32> to vector<8x128xf32>
    %31 = arith.subf %16, %30 : vector<8x128xf32>
    %cst_20 = arith.constant 9.99999974E-6 : f32
    %32 = vector.broadcast %cst_20 : f32 to vector<8x1xf32>
    %33 = arith.addf %29, %32 : vector<8x1xf32>
    %34 = math.rsqrt %33 : vector<8x1xf32>
    %35 = vector.broadcast %34 : vector<8x1xf32> to vector<8x128xf32>
    %36 = arith.mulf %31, %35 : vector<8x128xf32>
    %37 = vector.broadcast %17 : vector<1x128xf32> to vector<8x128xf32>
    %38 = arith.mulf %36, %37 : vector<8x128xf32>
    %39 = vector.broadcast %18 : vector<1x128xf32> to vector<8x128xf32>
    %40 = arith.addf %38, %39 : vector<8x128xf32>
    %c0_21 = arith.constant 0 : index
    %c0_22 = arith.constant 0 : index
    %c0_23 = arith.constant 0 : index
    %41 = vector.load %arg8[%c0_21, %c0_22, %c0_23] : memref<1x8x128xf32, #tpu.memory_space<vmem>>, vector<1x8x128xf32>
    %42 = vector.shape_cast %41 : vector<1x8x128xf32> to vector<8x128xf32>
    %43 = vector.shape_cast %40 : vector<8x128xf32> to vector<1x8x128xf32>
    tpu.vector_store %arg8[%c0_21, %c0_22, %c0_23], %43 {strides = array<i32>} : memref<1x8x128xf32, #tpu.memory_space<vmem>>, vector<1x8x128xf32>,
    return
  }
  func.func @transform_0(%arg0: i32) -> (i32, i32, i32) {
    %c0_i32 = arith.constant 0 : i32
    %c0_i32_0 = arith.constant 0 : i32
    %c0_i32_1 = arith.constant 0 : i32
    return %arg0, %c0_i32, %c0_i32_0 : i32, i32, i32
  }
  func.func @transform_1(%arg0: i32) -> (i32, i32) {
    %c0_i32 = arith.constant 0 : i32
    %c0_i32_0 = arith.constant 0 : i32
    %c0_i32_1 = arith.constant 0 : i32
    return %c0_i32, %c0_i32_0 : i32, i32
  }
  func.func @transform_2(%arg0: i32) -> (i32, i32) {
    %c0_i32 = arith.constant 0 : i32
    %c0_i32_0 = arith.constant 0 : i32
    %c0_i32_1 = arith.constant 0 : i32
    return %c0_i32, %c0_i32_0 : i32, i32
  }
  func.func @transform_3(%arg0: i32) -> (i32, i32) {
    %c0_i32 = arith.constant 0 : i32
    %c0_i32_0 = arith.constant 0 : i32
    %c0_i32_1 = arith.constant 0 : i32
    return %c0_i32, %c0_i32_0 : i32, i32
  }
  func.func @transform_4(%arg0: i32) -> (i32, i32) {
    %c0_i32 = arith.constant 0 : i32
    %c0_i32_0 = arith.constant 0 : i32
    %c0_i32_1 = arith.constant 0 : i32
    return %c0_i32, %c0_i32_0 : i32, i32
  }
  func.func @transform_5(%arg0: i32) -> (i32, i32) {
    %c0_i32 = arith.constant 0 : i32
    %c0_i32_0 = arith.constant 0 : i32
    %c0_i32_1 = arith.constant 0 : i32
    return %c0_i32, %c0_i32_0 : i32, i32
  }
  func.func @transform_6(%arg0: i32) -> (i32, i32) {
    %c0_i32 = arith.constant 0 : i32
    %c0_i32_0 = arith.constant 0 : i32
    %c0_i32_1 = arith.constant 0 : i32
    return %c0_i32, %c0_i32_0 : i32, i32
  }
  func.func @transform_7(%arg0: i32) -> (i32, i32, i32) {
    %c0_i32 = arith.constant 0 : i32
    %c0_i32_0 = arith.constant 0 : i32
    %c0_i32_1 = arith.constant 0 : i32
    return %arg0, %c0_i32, %c0_i32_0 : i32, i32, i32
  }
}

module attributes {stable_mosaic.version = 11 : i64} {
  func.func @_mha_addln_kernel(%arg0: i32, %arg1: memref<1x8x128xf32, #tpu.memory_space<vmem>>, %arg2: memref<1x16x128xf32, #tpu.memory_space<vmem>>, %arg3: memref<1x8x16xi32, #tpu.memory_space<vmem>>, %arg4: memref<128x128xbf16, #tpu.memory_space<vmem>>, %arg5: memref<1x128xf32, #tpu.memory_space<vmem>>, %arg6: memref<128x256xbf16, #tpu.memory_space<vmem>>, %arg7: memref<1x256xf32, #tpu.memory_space<vmem>>, %arg8: memref<128x128xbf16, #tpu.memory_space<vmem>>, %arg9: memref<1x128xf32, #tpu.memory_space<vmem>>, %arg10: memref<1x128xf32, #tpu.memory_space<vmem>>, %arg11: memref<1x128xf32, #tpu.memory_space<vmem>>, %arg12: memref<1x8x128xf32, #tpu.memory_space<vmem>>) attributes {dimension_semantics = [#tpu.dimension_semantics<parallel>], iteration_bounds = array<i64: 2>, scalar_prefetch = 0 : i64, scratch_operands = 0 : i64, tpu.core_type = #tpu.core_type<tc>, window_params = [{transform_indices = @transform_0, window_bounds = array<i64: 1, 8, 128>}, {transform_indices = @transform_1, window_bounds = array<i64: 1, 16, 128>}, {transform_indices = @transform_2, window_bounds = array<i64: 1, 8, 16>}, {pipeline_mode = #tpu.pipeline_mode<synchronous>, transform_indices = @transform_3, window_bounds = array<i64: 128, 128>}, {pipeline_mode = #tpu.pipeline_mode<synchronous>, transform_indices = @transform_4, window_bounds = array<i64: 1, 128>}, {pipeline_mode = #tpu.pipeline_mode<synchronous>, transform_indices = @transform_5, window_bounds = array<i64: 128, 256>}, {pipeline_mode = #tpu.pipeline_mode<synchronous>, transform_indices = @transform_6, window_bounds = array<i64: 1, 256>}, {pipeline_mode = #tpu.pipeline_mode<synchronous>, transform_indices = @transform_7, window_bounds = array<i64: 128, 128>}, {pipeline_mode = #tpu.pipeline_mode<synchronous>, transform_indices = @transform_8, window_bounds = array<i64: 1, 128>}, {pipeline_mode = #tpu.pipeline_mode<synchronous>, transform_indices = @transform_9, window_bounds = array<i64: 1, 128>}, {pipeline_mode = #tpu.pipeline_mode<synchronous>, transform_indices = @transform_10, window_bounds = array<i64: 1, 128>}, {transform_indices = @transform_11, window_bounds = array<i64: 1, 8, 128>}]} {
    %c0 = arith.constant 0 : index
    %c0_0 = arith.constant 0 : index
    %c0_1 = arith.constant 0 : index
    %0 = vector.load %arg1[%c0, %c0_0, %c0_1] : memref<1x8x128xf32, #tpu.memory_space<vmem>>, vector<1x8x128xf32>
    %1 = vector.shape_cast %0 : vector<1x8x128xf32> to vector<8x128xf32>
    %c0_2 = arith.constant 0 : index
    %c0_3 = arith.constant 0 : index
    %c0_4 = arith.constant 0 : index
    %2 = vector.load %arg2[%c0_2, %c0_3, %c0_4] : memref<1x16x128xf32, #tpu.memory_space<vmem>>, vector<1x16x128xf32>
    %3 = vector.shape_cast %2 : vector<1x16x128xf32> to vector<16x128xf32>
    %c0_5 = arith.constant 0 : index
    %c0_6 = arith.constant 0 : index
    %c0_7 = arith.constant 0 : index
    %4 = vector.load %arg3[%c0_5, %c0_6, %c0_7] : memref<1x8x16xi32, #tpu.memory_space<vmem>>, vector<1x8x16xi32>
    %5 = vector.shape_cast %4 : vector<1x8x16xi32> to vector<8x16xi32>
    %c0_i32 = arith.constant 0 : i32
    %6 = vector.broadcast %c0_i32 : i32 to vector<8x16xi32>
    %7 = arith.cmpi eq, %5, %6 : vector<8x16xi32>
    %8 = arith.truncf %1 : vector<8x128xf32> to vector<8x128xbf16>
    %c0_8 = arith.constant 0 : index
    %c0_9 = arith.constant 0 : index
    %9 = vector.load %arg4[%c0_8, %c0_9] : memref<128x128xbf16, #tpu.memory_space<vmem>>, vector<128x128xbf16>
    %cst = arith.constant dense<0.000000e+00> : vector<8x128xf32>
    %10 = tpu.matmul %8, %9, %cst {dimension_numbers = #tpu.dot_dimension_numbers<[1], [0], [0], [1], [0, 0, 1, 1], [], []>} : vector<8x128xbf16>, vector<128x128xbf16>, vector<8x128xf32> -> vector<8x128xf32>
    %c0_10 = arith.constant 0 : index
    %c0_11 = arith.constant 0 : index
    %11 = vector.load %arg5[%c0_10, %c0_11] : memref<1x128xf32, #tpu.memory_space<vmem>>, vector<1x128xf32>
    %12 = vector.broadcast %11 : vector<1x128xf32> to vector<8x128xf32>
    %13 = arith.addf %10, %12 : vector<8x128xf32>
    %14 = arith.truncf %3 : vector<16x128xf32> to vector<16x128xbf16>
    %c0_12 = arith.constant 0 : index
    %c0_13 = arith.constant 0 : index
    %15 = vector.load %arg6[%c0_12, %c0_13] : memref<128x256xbf16, #tpu.memory_space<vmem>>, vector<128x256xbf16>
    %cst_14 = arith.constant dense<0.000000e+00> : vector<16x256xf32>
    %16 = tpu.matmul %14, %15, %cst_14 {dimension_numbers = #tpu.dot_dimension_numbers<[1], [0], [0], [1], [0, 0, 1, 1], [], []>} : vector<16x128xbf16>, vector<128x256xbf16>, vector<16x256xf32> -> vector<16x256xf32>
    %c0_15 = arith.constant 0 : index
    %c0_16 = arith.constant 0 : index
    %17 = vector.load %arg7[%c0_15, %c0_16] : memref<1x256xf32, #tpu.memory_space<vmem>>, vector<1x256xf32>
    %18 = vector.broadcast %17 : vector<1x256xf32> to vector<16x256xf32>
    %19 = arith.addf %16, %18 : vector<16x256xf32>
    %cst_17 = arith.constant 2.500000e-01 : f32
    %20 = vector.broadcast %cst_17 : f32 to vector<8x128xf32>
    %21 = arith.mulf %13, %20 : vector<8x128xf32>
    %22 = vector.extract_strided_slice %21 {offsets = [0, 0], sizes = [8, 16], strides = [1, 1]} : vector<8x128xf32> to vector<8x16xf32>
    %23 = arith.truncf %22 : vector<8x16xf32> to vector<8x16xbf16>
    %24 = vector.extract_strided_slice %19 {offsets = [0, 0], sizes = [16, 16], strides = [1, 1]} : vector<16x256xf32> to vector<16x16xf32>
    %25 = arith.truncf %24 : vector<16x16xf32> to vector<16x16xbf16>
    %26 = vector.extract_strided_slice %19 {offsets = [0, 128], sizes = [16, 16], strides = [1, 1]} : vector<16x256xf32> to vector<16x16xf32>
    %27 = arith.truncf %26 : vector<16x16xf32> to vector<16x16xbf16>
    %cst_18 = arith.constant dense<0.000000e+00> : vector<8x16xf32>
    %28 = tpu.matmul %23, %25, %cst_18 {dimension_numbers = #tpu.dot_dimension_numbers<[1], [1], [0], [0], [0, 0, 1, 0], [], []>} : vector<8x16xbf16>, vector<16x16xbf16>, vector<8x16xf32> -> vector<8x16xf32>
    %cst_19 = arith.constant -1.000000e+09 : f32
    %29 = vector.broadcast %cst_19 : f32 to vector<8x16xf32>
    %30 = arith.select %7, %29, %28 : vector<8x16xi1>, vector<8x16xf32>
    %cst_20 = arith.constant dense<0xFF800000> : vector<8xf32>
    %31 = vector.multi_reduction <maximumf>, %30, %cst_20 [1] : vector<8x16xf32> to vector<8xf32>
    %32 = vector.shape_cast %31 : vector<8xf32> to vector<8x1xf32>
    %33 = vector.broadcast %32 : vector<8x1xf32> to vector<8x16xf32>
    %34 = arith.subf %30, %33 : vector<8x16xf32>
    %35 = math.exp %34 : vector<8x16xf32>
    %cst_21 = arith.constant dense<0.000000e+00> : vector<8xf32>
    %36 = vector.multi_reduction <add>, %35, %cst_21 [1] : vector<8x16xf32> to vector<8xf32>
    %37 = vector.shape_cast %36 : vector<8xf32> to vector<8x1xf32>
    %38 = tpu.reciprocal %37 {approx = true} : vector<8x1xf32> -> vector<8x1xf32>
    %39 = vector.broadcast %38 : vector<8x1xf32> to vector<8x16xf32>
    %40 = arith.mulf %35, %39 : vector<8x16xf32>
    %41 = arith.truncf %40 : vector<8x16xf32> to vector<8x16xbf16>
    %cst_22 = arith.constant dense<0.000000e+00> : vector<8x16xf32>
    %42 = tpu.matmul %41, %27, %cst_22 {dimension_numbers = #tpu.dot_dimension_numbers<[1], [0], [0], [1], [0, 0, 1, 1], [], []>} : vector<8x16xbf16>, vector<16x16xbf16>, vector<8x16xf32> -> vector<8x16xf32>
    %43 = vector.extract_strided_slice %21 {offsets = [0, 16], sizes = [8, 16], strides = [1, 1]} : vector<8x128xf32> to vector<8x16xf32>
    %44 = arith.truncf %43 : vector<8x16xf32> to vector<8x16xbf16>
    %45 = vector.extract_strided_slice %19 {offsets = [0, 16], sizes = [16, 16], strides = [1, 1]} : vector<16x256xf32> to vector<16x16xf32>
    %46 = arith.truncf %45 : vector<16x16xf32> to vector<16x16xbf16>
    %47 = vector.extract_strided_slice %19 {offsets = [0, 144], sizes = [16, 16], strides = [1, 1]} : vector<16x256xf32> to vector<16x16xf32>
    %48 = arith.truncf %47 : vector<16x16xf32> to vector<16x16xbf16>
    %cst_23 = arith.constant dense<0.000000e+00> : vector<8x16xf32>
    %49 = tpu.matmul %44, %46, %cst_23 {dimension_numbers = #tpu.dot_dimension_numbers<[1], [1], [0], [0], [0, 0, 1, 0], [], []>} : vector<8x16xbf16>, vector<16x16xbf16>, vector<8x16xf32> -> vector<8x16xf32>
    %cst_24 = arith.constant -1.000000e+09 : f32
    %50 = vector.broadcast %cst_24 : f32 to vector<8x16xf32>
    %51 = arith.select %7, %50, %49 : vector<8x16xi1>, vector<8x16xf32>
    %cst_25 = arith.constant dense<0xFF800000> : vector<8xf32>
    %52 = vector.multi_reduction <maximumf>, %51, %cst_25 [1] : vector<8x16xf32> to vector<8xf32>
    %53 = vector.shape_cast %52 : vector<8xf32> to vector<8x1xf32>
    %54 = vector.broadcast %53 : vector<8x1xf32> to vector<8x16xf32>
    %55 = arith.subf %51, %54 : vector<8x16xf32>
    %56 = math.exp %55 : vector<8x16xf32>
    %cst_26 = arith.constant dense<0.000000e+00> : vector<8xf32>
    %57 = vector.multi_reduction <add>, %56, %cst_26 [1] : vector<8x16xf32> to vector<8xf32>
    %58 = vector.shape_cast %57 : vector<8xf32> to vector<8x1xf32>
    %59 = tpu.reciprocal %58 {approx = true} : vector<8x1xf32> -> vector<8x1xf32>
    %60 = vector.broadcast %59 : vector<8x1xf32> to vector<8x16xf32>
    %61 = arith.mulf %56, %60 : vector<8x16xf32>
    %62 = arith.truncf %61 : vector<8x16xf32> to vector<8x16xbf16>
    %cst_27 = arith.constant dense<0.000000e+00> : vector<8x16xf32>
    %63 = tpu.matmul %62, %48, %cst_27 {dimension_numbers = #tpu.dot_dimension_numbers<[1], [0], [0], [1], [0, 0, 1, 1], [], []>} : vector<8x16xbf16>, vector<16x16xbf16>, vector<8x16xf32> -> vector<8x16xf32>
    %64 = vector.extract_strided_slice %21 {offsets = [0, 32], sizes = [8, 16], strides = [1, 1]} : vector<8x128xf32> to vector<8x16xf32>
    %65 = arith.truncf %64 : vector<8x16xf32> to vector<8x16xbf16>
    %66 = vector.extract_strided_slice %19 {offsets = [0, 32], sizes = [16, 16], strides = [1, 1]} : vector<16x256xf32> to vector<16x16xf32>
    %67 = arith.truncf %66 : vector<16x16xf32> to vector<16x16xbf16>
    %68 = vector.extract_strided_slice %19 {offsets = [0, 160], sizes = [16, 16], strides = [1, 1]} : vector<16x256xf32> to vector<16x16xf32>
    %69 = arith.truncf %68 : vector<16x16xf32> to vector<16x16xbf16>
    %cst_28 = arith.constant dense<0.000000e+00> : vector<8x16xf32>
    %70 = tpu.matmul %65, %67, %cst_28 {dimension_numbers = #tpu.dot_dimension_numbers<[1], [1], [0], [0], [0, 0, 1, 0], [], []>} : vector<8x16xbf16>, vector<16x16xbf16>, vector<8x16xf32> -> vector<8x16xf32>
    %cst_29 = arith.constant -1.000000e+09 : f32
    %71 = vector.broadcast %cst_29 : f32 to vector<8x16xf32>
    %72 = arith.select %7, %71, %70 : vector<8x16xi1>, vector<8x16xf32>
    %cst_30 = arith.constant dense<0xFF800000> : vector<8xf32>
    %73 = vector.multi_reduction <maximumf>, %72, %cst_30 [1] : vector<8x16xf32> to vector<8xf32>
    %74 = vector.shape_cast %73 : vector<8xf32> to vector<8x1xf32>
    %75 = vector.broadcast %74 : vector<8x1xf32> to vector<8x16xf32>
    %76 = arith.subf %72, %75 : vector<8x16xf32>
    %77 = math.exp %76 : vector<8x16xf32>
    %cst_31 = arith.constant dense<0.000000e+00> : vector<8xf32>
    %78 = vector.multi_reduction <add>, %77, %cst_31 [1] : vector<8x16xf32> to vector<8xf32>
    %79 = vector.shape_cast %78 : vector<8xf32> to vector<8x1xf32>
    %80 = tpu.reciprocal %79 {approx = true} : vector<8x1xf32> -> vector<8x1xf32>
    %81 = vector.broadcast %80 : vector<8x1xf32> to vector<8x16xf32>
    %82 = arith.mulf %77, %81 : vector<8x16xf32>
    %83 = arith.truncf %82 : vector<8x16xf32> to vector<8x16xbf16>
    %cst_32 = arith.constant dense<0.000000e+00> : vector<8x16xf32>
    %84 = tpu.matmul %83, %69, %cst_32 {dimension_numbers = #tpu.dot_dimension_numbers<[1], [0], [0], [1], [0, 0, 1, 1], [], []>} : vector<8x16xbf16>, vector<16x16xbf16>, vector<8x16xf32> -> vector<8x16xf32>
    %85 = vector.extract_strided_slice %21 {offsets = [0, 48], sizes = [8, 16], strides = [1, 1]} : vector<8x128xf32> to vector<8x16xf32>
    %86 = arith.truncf %85 : vector<8x16xf32> to vector<8x16xbf16>
    %87 = vector.extract_strided_slice %19 {offsets = [0, 48], sizes = [16, 16], strides = [1, 1]} : vector<16x256xf32> to vector<16x16xf32>
    %88 = arith.truncf %87 : vector<16x16xf32> to vector<16x16xbf16>
    %89 = vector.extract_strided_slice %19 {offsets = [0, 176], sizes = [16, 16], strides = [1, 1]} : vector<16x256xf32> to vector<16x16xf32>
    %90 = arith.truncf %89 : vector<16x16xf32> to vector<16x16xbf16>
    %cst_33 = arith.constant dense<0.000000e+00> : vector<8x16xf32>
    %91 = tpu.matmul %86, %88, %cst_33 {dimension_numbers = #tpu.dot_dimension_numbers<[1], [1], [0], [0], [0, 0, 1, 0], [], []>} : vector<8x16xbf16>, vector<16x16xbf16>, vector<8x16xf32> -> vector<8x16xf32>
    %cst_34 = arith.constant -1.000000e+09 : f32
    %92 = vector.broadcast %cst_34 : f32 to vector<8x16xf32>
    %93 = arith.select %7, %92, %91 : vector<8x16xi1>, vector<8x16xf32>
    %cst_35 = arith.constant dense<0xFF800000> : vector<8xf32>
    %94 = vector.multi_reduction <maximumf>, %93, %cst_35 [1] : vector<8x16xf32> to vector<8xf32>
    %95 = vector.shape_cast %94 : vector<8xf32> to vector<8x1xf32>
    %96 = vector.broadcast %95 : vector<8x1xf32> to vector<8x16xf32>
    %97 = arith.subf %93, %96 : vector<8x16xf32>
    %98 = math.exp %97 : vector<8x16xf32>
    %cst_36 = arith.constant dense<0.000000e+00> : vector<8xf32>
    %99 = vector.multi_reduction <add>, %98, %cst_36 [1] : vector<8x16xf32> to vector<8xf32>
    %100 = vector.shape_cast %99 : vector<8xf32> to vector<8x1xf32>
    %101 = tpu.reciprocal %100 {approx = true} : vector<8x1xf32> -> vector<8x1xf32>
    %102 = vector.broadcast %101 : vector<8x1xf32> to vector<8x16xf32>
    %103 = arith.mulf %98, %102 : vector<8x16xf32>
    %104 = arith.truncf %103 : vector<8x16xf32> to vector<8x16xbf16>
    %cst_37 = arith.constant dense<0.000000e+00> : vector<8x16xf32>
    %105 = tpu.matmul %104, %90, %cst_37 {dimension_numbers = #tpu.dot_dimension_numbers<[1], [0], [0], [1], [0, 0, 1, 1], [], []>} : vector<8x16xbf16>, vector<16x16xbf16>, vector<8x16xf32> -> vector<8x16xf32>
    %106 = vector.extract_strided_slice %21 {offsets = [0, 64], sizes = [8, 16], strides = [1, 1]} : vector<8x128xf32> to vector<8x16xf32>
    %107 = arith.truncf %106 : vector<8x16xf32> to vector<8x16xbf16>
    %108 = vector.extract_strided_slice %19 {offsets = [0, 64], sizes = [16, 16], strides = [1, 1]} : vector<16x256xf32> to vector<16x16xf32>
    %109 = arith.truncf %108 : vector<16x16xf32> to vector<16x16xbf16>
    %110 = vector.extract_strided_slice %19 {offsets = [0, 192], sizes = [16, 16], strides = [1, 1]} : vector<16x256xf32> to vector<16x16xf32>
    %111 = arith.truncf %110 : vector<16x16xf32> to vector<16x16xbf16>
    %cst_38 = arith.constant dense<0.000000e+00> : vector<8x16xf32>
    %112 = tpu.matmul %107, %109, %cst_38 {dimension_numbers = #tpu.dot_dimension_numbers<[1], [1], [0], [0], [0, 0, 1, 0], [], []>} : vector<8x16xbf16>, vector<16x16xbf16>, vector<8x16xf32> -> vector<8x16xf32>
    %cst_39 = arith.constant -1.000000e+09 : f32
    %113 = vector.broadcast %cst_39 : f32 to vector<8x16xf32>
    %114 = arith.select %7, %113, %112 : vector<8x16xi1>, vector<8x16xf32>
    %cst_40 = arith.constant dense<0xFF800000> : vector<8xf32>
    %115 = vector.multi_reduction <maximumf>, %114, %cst_40 [1] : vector<8x16xf32> to vector<8xf32>
    %116 = vector.shape_cast %115 : vector<8xf32> to vector<8x1xf32>
    %117 = vector.broadcast %116 : vector<8x1xf32> to vector<8x16xf32>
    %118 = arith.subf %114, %117 : vector<8x16xf32>
    %119 = math.exp %118 : vector<8x16xf32>
    %cst_41 = arith.constant dense<0.000000e+00> : vector<8xf32>
    %120 = vector.multi_reduction <add>, %119, %cst_41 [1] : vector<8x16xf32> to vector<8xf32>
    %121 = vector.shape_cast %120 : vector<8xf32> to vector<8x1xf32>
    %122 = tpu.reciprocal %121 {approx = true} : vector<8x1xf32> -> vector<8x1xf32>
    %123 = vector.broadcast %122 : vector<8x1xf32> to vector<8x16xf32>
    %124 = arith.mulf %119, %123 : vector<8x16xf32>
    %125 = arith.truncf %124 : vector<8x16xf32> to vector<8x16xbf16>
    %cst_42 = arith.constant dense<0.000000e+00> : vector<8x16xf32>
    %126 = tpu.matmul %125, %111, %cst_42 {dimension_numbers = #tpu.dot_dimension_numbers<[1], [0], [0], [1], [0, 0, 1, 1], [], []>} : vector<8x16xbf16>, vector<16x16xbf16>, vector<8x16xf32> -> vector<8x16xf32>
    %127 = vector.extract_strided_slice %21 {offsets = [0, 80], sizes = [8, 16], strides = [1, 1]} : vector<8x128xf32> to vector<8x16xf32>
    %128 = arith.truncf %127 : vector<8x16xf32> to vector<8x16xbf16>
    %129 = vector.extract_strided_slice %19 {offsets = [0, 80], sizes = [16, 16], strides = [1, 1]} : vector<16x256xf32> to vector<16x16xf32>
    %130 = arith.truncf %129 : vector<16x16xf32> to vector<16x16xbf16>
    %131 = vector.extract_strided_slice %19 {offsets = [0, 208], sizes = [16, 16], strides = [1, 1]} : vector<16x256xf32> to vector<16x16xf32>
    %132 = arith.truncf %131 : vector<16x16xf32> to vector<16x16xbf16>
    %cst_43 = arith.constant dense<0.000000e+00> : vector<8x16xf32>
    %133 = tpu.matmul %128, %130, %cst_43 {dimension_numbers = #tpu.dot_dimension_numbers<[1], [1], [0], [0], [0, 0, 1, 0], [], []>} : vector<8x16xbf16>, vector<16x16xbf16>, vector<8x16xf32> -> vector<8x16xf32>
    %cst_44 = arith.constant -1.000000e+09 : f32
    %134 = vector.broadcast %cst_44 : f32 to vector<8x16xf32>
    %135 = arith.select %7, %134, %133 : vector<8x16xi1>, vector<8x16xf32>
    %cst_45 = arith.constant dense<0xFF800000> : vector<8xf32>
    %136 = vector.multi_reduction <maximumf>, %135, %cst_45 [1] : vector<8x16xf32> to vector<8xf32>
    %137 = vector.shape_cast %136 : vector<8xf32> to vector<8x1xf32>
    %138 = vector.broadcast %137 : vector<8x1xf32> to vector<8x16xf32>
    %139 = arith.subf %135, %138 : vector<8x16xf32>
    %140 = math.exp %139 : vector<8x16xf32>
    %cst_46 = arith.constant dense<0.000000e+00> : vector<8xf32>
    %141 = vector.multi_reduction <add>, %140, %cst_46 [1] : vector<8x16xf32> to vector<8xf32>
    %142 = vector.shape_cast %141 : vector<8xf32> to vector<8x1xf32>
    %143 = tpu.reciprocal %142 {approx = true} : vector<8x1xf32> -> vector<8x1xf32>
    %144 = vector.broadcast %143 : vector<8x1xf32> to vector<8x16xf32>
    %145 = arith.mulf %140, %144 : vector<8x16xf32>
    %146 = arith.truncf %145 : vector<8x16xf32> to vector<8x16xbf16>
    %cst_47 = arith.constant dense<0.000000e+00> : vector<8x16xf32>
    %147 = tpu.matmul %146, %132, %cst_47 {dimension_numbers = #tpu.dot_dimension_numbers<[1], [0], [0], [1], [0, 0, 1, 1], [], []>} : vector<8x16xbf16>, vector<16x16xbf16>, vector<8x16xf32> -> vector<8x16xf32>
    %148 = vector.extract_strided_slice %21 {offsets = [0, 96], sizes = [8, 16], strides = [1, 1]} : vector<8x128xf32> to vector<8x16xf32>
    %149 = arith.truncf %148 : vector<8x16xf32> to vector<8x16xbf16>
    %150 = vector.extract_strided_slice %19 {offsets = [0, 96], sizes = [16, 16], strides = [1, 1]} : vector<16x256xf32> to vector<16x16xf32>
    %151 = arith.truncf %150 : vector<16x16xf32> to vector<16x16xbf16>
    %152 = vector.extract_strided_slice %19 {offsets = [0, 224], sizes = [16, 16], strides = [1, 1]} : vector<16x256xf32> to vector<16x16xf32>
    %153 = arith.truncf %152 : vector<16x16xf32> to vector<16x16xbf16>
    %cst_48 = arith.constant dense<0.000000e+00> : vector<8x16xf32>
    %154 = tpu.matmul %149, %151, %cst_48 {dimension_numbers = #tpu.dot_dimension_numbers<[1], [1], [0], [0], [0, 0, 1, 0], [], []>} : vector<8x16xbf16>, vector<16x16xbf16>, vector<8x16xf32> -> vector<8x16xf32>
    %cst_49 = arith.constant -1.000000e+09 : f32
    %155 = vector.broadcast %cst_49 : f32 to vector<8x16xf32>
    %156 = arith.select %7, %155, %154 : vector<8x16xi1>, vector<8x16xf32>
    %cst_50 = arith.constant dense<0xFF800000> : vector<8xf32>
    %157 = vector.multi_reduction <maximumf>, %156, %cst_50 [1] : vector<8x16xf32> to vector<8xf32>
    %158 = vector.shape_cast %157 : vector<8xf32> to vector<8x1xf32>
    %159 = vector.broadcast %158 : vector<8x1xf32> to vector<8x16xf32>
    %160 = arith.subf %156, %159 : vector<8x16xf32>
    %161 = math.exp %160 : vector<8x16xf32>
    %cst_51 = arith.constant dense<0.000000e+00> : vector<8xf32>
    %162 = vector.multi_reduction <add>, %161, %cst_51 [1] : vector<8x16xf32> to vector<8xf32>
    %163 = vector.shape_cast %162 : vector<8xf32> to vector<8x1xf32>
    %164 = tpu.reciprocal %163 {approx = true} : vector<8x1xf32> -> vector<8x1xf32>
    %165 = vector.broadcast %164 : vector<8x1xf32> to vector<8x16xf32>
    %166 = arith.mulf %161, %165 : vector<8x16xf32>
    %167 = arith.truncf %166 : vector<8x16xf32> to vector<8x16xbf16>
    %cst_52 = arith.constant dense<0.000000e+00> : vector<8x16xf32>
    %168 = tpu.matmul %167, %153, %cst_52 {dimension_numbers = #tpu.dot_dimension_numbers<[1], [0], [0], [1], [0, 0, 1, 1], [], []>} : vector<8x16xbf16>, vector<16x16xbf16>, vector<8x16xf32> -> vector<8x16xf32>
    %169 = vector.extract_strided_slice %21 {offsets = [0, 112], sizes = [8, 16], strides = [1, 1]} : vector<8x128xf32> to vector<8x16xf32>
    %170 = arith.truncf %169 : vector<8x16xf32> to vector<8x16xbf16>
    %171 = vector.extract_strided_slice %19 {offsets = [0, 112], sizes = [16, 16], strides = [1, 1]} : vector<16x256xf32> to vector<16x16xf32>
    %172 = arith.truncf %171 : vector<16x16xf32> to vector<16x16xbf16>
    %173 = vector.extract_strided_slice %19 {offsets = [0, 240], sizes = [16, 16], strides = [1, 1]} : vector<16x256xf32> to vector<16x16xf32>
    %174 = arith.truncf %173 : vector<16x16xf32> to vector<16x16xbf16>
    %cst_53 = arith.constant dense<0.000000e+00> : vector<8x16xf32>
    %175 = tpu.matmul %170, %172, %cst_53 {dimension_numbers = #tpu.dot_dimension_numbers<[1], [1], [0], [0], [0, 0, 1, 0], [], []>} : vector<8x16xbf16>, vector<16x16xbf16>, vector<8x16xf32> -> vector<8x16xf32>
    %cst_54 = arith.constant -1.000000e+09 : f32
    %176 = vector.broadcast %cst_54 : f32 to vector<8x16xf32>
    %177 = arith.select %7, %176, %175 : vector<8x16xi1>, vector<8x16xf32>
    %cst_55 = arith.constant dense<0xFF800000> : vector<8xf32>
    %178 = vector.multi_reduction <maximumf>, %177, %cst_55 [1] : vector<8x16xf32> to vector<8xf32>
    %179 = vector.shape_cast %178 : vector<8xf32> to vector<8x1xf32>
    %180 = vector.broadcast %179 : vector<8x1xf32> to vector<8x16xf32>
    %181 = arith.subf %177, %180 : vector<8x16xf32>
    %182 = math.exp %181 : vector<8x16xf32>
    %cst_56 = arith.constant dense<0.000000e+00> : vector<8xf32>
    %183 = vector.multi_reduction <add>, %182, %cst_56 [1] : vector<8x16xf32> to vector<8xf32>
    %184 = vector.shape_cast %183 : vector<8xf32> to vector<8x1xf32>
    %185 = tpu.reciprocal %184 {approx = true} : vector<8x1xf32> -> vector<8x1xf32>
    %186 = vector.broadcast %185 : vector<8x1xf32> to vector<8x16xf32>
    %187 = arith.mulf %182, %186 : vector<8x16xf32>
    %188 = arith.truncf %187 : vector<8x16xf32> to vector<8x16xbf16>
    %cst_57 = arith.constant dense<0.000000e+00> : vector<8x16xf32>
    %189 = tpu.matmul %188, %174, %cst_57 {dimension_numbers = #tpu.dot_dimension_numbers<[1], [0], [0], [1], [0, 0, 1, 1], [], []>} : vector<8x16xbf16>, vector<16x16xbf16>, vector<8x16xf32> -> vector<8x16xf32>
    %190 = tpu.concatenate %42, %63, %84, %105, %126, %147, %168, %189 in 1 : vector<8x16xf32>, vector<8x16xf32>, vector<8x16xf32>, vector<8x16xf32>, vector<8x16xf32>, vector<8x16xf32>, vector<8x16xf32>, vector<8x16xf32> -> vector<8x128xf32>
    %191 = arith.truncf %190 : vector<8x128xf32> to vector<8x128xbf16>
    %c0_58 = arith.constant 0 : index
    %c0_59 = arith.constant 0 : index
    %192 = vector.load %arg8[%c0_58, %c0_59] : memref<128x128xbf16, #tpu.memory_space<vmem>>, vector<128x128xbf16>
    %cst_60 = arith.constant dense<0.000000e+00> : vector<8x128xf32>
    %193 = tpu.matmul %191, %192, %cst_60 {dimension_numbers = #tpu.dot_dimension_numbers<[1], [0], [0], [1], [0, 0, 1, 1], [], []>} : vector<8x128xbf16>, vector<128x128xbf16>, vector<8x128xf32> -> vector<8x128xf32>
    %c0_61 = arith.constant 0 : index
    %c0_62 = arith.constant 0 : index
    %194 = vector.load %arg9[%c0_61, %c0_62] : memref<1x128xf32, #tpu.memory_space<vmem>>, vector<1x128xf32>
    %195 = vector.broadcast %194 : vector<1x128xf32> to vector<8x128xf32>
    %196 = arith.addf %193, %195 : vector<8x128xf32>
    %197 = arith.addf %1, %196 : vector<8x128xf32>
    %c0_63 = arith.constant 0 : index
    %c0_64 = arith.constant 0 : index
    %198 = vector.load %arg10[%c0_63, %c0_64] : memref<1x128xf32, #tpu.memory_space<vmem>>, vector<1x128xf32>
    %c0_65 = arith.constant 0 : index
    %c0_66 = arith.constant 0 : index
    %199 = vector.load %arg11[%c0_65, %c0_66] : memref<1x128xf32, #tpu.memory_space<vmem>>, vector<1x128xf32>
    %cst_67 = arith.constant dense<0.000000e+00> : vector<8xf32>
    %200 = vector.multi_reduction <add>, %197, %cst_67 [1] : vector<8x128xf32> to vector<8xf32>
    %201 = vector.shape_cast %200 : vector<8xf32> to vector<8x1xf32>
    %cst_68 = arith.constant 1.280000e+02 : f32
    %202 = vector.broadcast %cst_68 : f32 to vector<8x1xf32>
    %203 = arith.divf %201, %202 : vector<8x1xf32>
    %204 = vector.broadcast %203 : vector<8x1xf32> to vector<8x128xf32>
    %205 = arith.subf %197, %204 : vector<8x128xf32>
    %206 = arith.mulf %205, %205 : vector<8x128xf32>
    %cst_69 = arith.constant dense<0.000000e+00> : vector<8xf32>
    %207 = vector.multi_reduction <add>, %206, %cst_69 [1] : vector<8x128xf32> to vector<8xf32>
    %208 = vector.shape_cast %207 : vector<8xf32> to vector<8x1xf32>
    %cst_70 = arith.constant 1.280000e+02 : f32
    %209 = vector.broadcast %cst_70 : f32 to vector<8x1xf32>
    %210 = arith.divf %208, %209 : vector<8x1xf32>
    %211 = vector.broadcast %203 : vector<8x1xf32> to vector<8x128xf32>
    %212 = arith.subf %197, %211 : vector<8x128xf32>
    %cst_71 = arith.constant 9.99999974E-6 : f32
    %213 = vector.broadcast %cst_71 : f32 to vector<8x1xf32>
    %214 = arith.addf %210, %213 : vector<8x1xf32>
    %215 = math.rsqrt %214 : vector<8x1xf32>
    %216 = vector.broadcast %215 : vector<8x1xf32> to vector<8x128xf32>
    %217 = arith.mulf %212, %216 : vector<8x128xf32>
    %218 = vector.broadcast %198 : vector<1x128xf32> to vector<8x128xf32>
    %219 = arith.mulf %217, %218 : vector<8x128xf32>
    %220 = vector.broadcast %199 : vector<1x128xf32> to vector<8x128xf32>
    %221 = arith.addf %219, %220 : vector<8x128xf32>
    %c0_72 = arith.constant 0 : index
    %c0_73 = arith.constant 0 : index
    %c0_74 = arith.constant 0 : index
    %222 = vector.load %arg12[%c0_72, %c0_73, %c0_74] : memref<1x8x128xf32, #tpu.memory_space<vmem>>, vector<1x8x128xf32>
    %223 = vector.shape_cast %222 : vector<1x8x128xf32> to vector<8x128xf32>
    %224 = vector.shape_cast %221 : vector<8x128xf32> to vector<1x8x128xf32>
    tpu.vector_store %arg12[%c0_72, %c0_73, %c0_74], %224 {strides = array<i32>} : memref<1x8x128xf32, #tpu.memory_space<vmem>>, vector<1x8x128xf32>,
    return
  }
  func.func @transform_0(%arg0: i32) -> (i32, i32, i32) {
    %c0_i32 = arith.constant 0 : i32
    %c0_i32_0 = arith.constant 0 : i32
    %c0_i32_1 = arith.constant 0 : i32
    return %arg0, %c0_i32, %c0_i32_0 : i32, i32, i32
  }
  func.func @transform_1(%arg0: i32) -> (i32, i32, i32) {
    %c0_i32 = arith.constant 0 : i32
    %c0_i32_0 = arith.constant 0 : i32
    %c0_i32_1 = arith.constant 0 : i32
    return %arg0, %c0_i32, %c0_i32_0 : i32, i32, i32
  }
  func.func @transform_2(%arg0: i32) -> (i32, i32, i32) {
    %c0_i32 = arith.constant 0 : i32
    %c0_i32_0 = arith.constant 0 : i32
    %c0_i32_1 = arith.constant 0 : i32
    return %arg0, %c0_i32, %c0_i32_0 : i32, i32, i32
  }
  func.func @transform_3(%arg0: i32) -> (i32, i32) {
    %c0_i32 = arith.constant 0 : i32
    %c0_i32_0 = arith.constant 0 : i32
    %c0_i32_1 = arith.constant 0 : i32
    return %c0_i32, %c0_i32_0 : i32, i32
  }
  func.func @transform_4(%arg0: i32) -> (i32, i32) {
    %c0_i32 = arith.constant 0 : i32
    %c0_i32_0 = arith.constant 0 : i32
    %c0_i32_1 = arith.constant 0 : i32
    return %c0_i32, %c0_i32_0 : i32, i32
  }
  func.func @transform_5(%arg0: i32) -> (i32, i32) {
    %c0_i32 = arith.constant 0 : i32
    %c0_i32_0 = arith.constant 0 : i32
    %c0_i32_1 = arith.constant 0 : i32
    return %c0_i32, %c0_i32_0 : i32, i32
  }
  func.func @transform_6(%arg0: i32) -> (i32, i32) {
    %c0_i32 = arith.constant 0 : i32
    %c0_i32_0 = arith.constant 0 : i32
    %c0_i32_1 = arith.constant 0 : i32
    return %c0_i32, %c0_i32_0 : i32, i32
  }
  func.func @transform_7(%arg0: i32) -> (i32, i32) {
    %c0_i32 = arith.constant 0 : i32
    %c0_i32_0 = arith.constant 0 : i32
    %c0_i32_1 = arith.constant 0 : i32
    return %c0_i32, %c0_i32_0 : i32, i32
  }
  func.func @transform_8(%arg0: i32) -> (i32, i32) {
    %c0_i32 = arith.constant 0 : i32
    %c0_i32_0 = arith.constant 0 : i32
    %c0_i32_1 = arith.constant 0 : i32
    return %c0_i32, %c0_i32_0 : i32, i32
  }
  func.func @transform_9(%arg0: i32) -> (i32, i32) {
    %c0_i32 = arith.constant 0 : i32
    %c0_i32_0 = arith.constant 0 : i32
    %c0_i32_1 = arith.constant 0 : i32
    return %c0_i32, %c0_i32_0 : i32, i32
  }
  func.func @transform_10(%arg0: i32) -> (i32, i32) {
    %c0_i32 = arith.constant 0 : i32
    %c0_i32_0 = arith.constant 0 : i32
    %c0_i32_1 = arith.constant 0 : i32
    return %c0_i32, %c0_i32_0 : i32, i32
  }
  func.func @transform_11(%arg0: i32) -> (i32, i32, i32) {
    %c0_i32 = arith.constant 0 : i32
    %c0_i32_0 = arith.constant 0 : i32
    %c0_i32_1 = arith.constant 0 : i32
    return %arg0, %c0_i32, %c0_i32_0 : i32, i32, i32
  }
}

</mosaic_0001>

<llo_original>
// kernel: decoder_layer_forward.5
$region0: #{decoder_layer_forward.5}
  #allocation0 [shape = 'u32[]', space=smem, size = 0x4, offset = 0x4, fixed_abs, tag = 'smem constant byte address 0x4 - core index']
  #allocation1 [shape = 'u32[144,128]{1,0:T(1,128)}', space=vmem, size = 0x12000, scoped, tag = 'internal scratch']
  %s0 = inlined_call_operand.vmem [shape: f32[2,8,128], index: 0, kind: input, shape index: {}]
  %s1 = inlined_call_operand.vmem [shape: bf16[128,512], index: 1, kind: input, shape index: {}]
  %s2 = inlined_call_operand.hbm [shape: f32[1,512], index: 2, kind: input, shape index: {}]
  %s3 = inlined_call_operand.vmem [shape: bf16[512,128], index: 3, kind: input, shape index: {}]
  %s4 = inlined_call_operand.hbm [shape: f32[1,128], index: 4, kind: input, shape index: {}]
  %s5 = inlined_call_operand.hbm [shape: f32[1,128], index: 5, kind: input, shape index: {}]
  %s6 = inlined_call_operand.hbm [shape: f32[1,128], index: 6, kind: input, shape index: {}]
  %s7 = inlined_call_operand.hbm [shape: f32[2,8,128], index: 7, kind: output, shape index: {}]
  %s8 = sld [smem:[#allocation0]]
  $region77: #{decoder_layer_forward.5} parent=0
    _
  %s10 = ssub.s32 1, %s8
  %s11 = scalar_select 0, %s10, %s8
  $region1: #{decoder_layer_forward.5} parent=0
    #allocation2 [shape = 'u8[2048]{0}', space=vmem, size = 0x800, scoped, tag = 'input window, operand 2, single buffered']
    #allocation3 [shape = 's32[2]{0}', space=sflag, size = 0x8, scoped, tag = 'scoped memory for decoder_layer_forward.5']
    #allocation4 [shape = 's32[2]{0}', space=sflag, size = 0x8, scoped, tag = 'scoped memory for decoder_layer_forward.5']
    #allocation5 [shape = 'u8[512]{0}', space=vmem, size = 0x400, scoped, tag = 'input window, operand 4, single buffered']
    #allocation6 [shape = 's32[1]{0}', space=sflag, size = 0x4, scoped, tag = 'scoped memory for decoder_layer_forward.5']
    #allocation7 [shape = 'u8[512]{0}', space=vmem, size = 0x400, scoped, tag = 'input window, operand 5, single buffered']
    #allocation8 [shape = 'u8[512]{0}', space=vmem, size = 0x400, scoped, tag = 'input window, operand 6, single buffered']
    #allocation9 [shape = 's32[1]{0}', space=sflag, size = 0x4, scoped, tag = 'scoped memory for decoder_layer_forward.5']
    #allocation10 [shape = 'u8[8192]{0}', space=vmem, size = 0x2000, scoped, tag = 'output window, operand 0']
    %12 = vsyncpa [#allocation3], 0
    %13 = vsyncpa [#allocation6], 0
    %14 = vsyncpa [#allocation9], 0
    %15 = vsyncpa [#allocation4], 0
    %s16 = scalar_lea.sflag [#allocation4], 1
    %17 = vsyncpa %s16, 0
    loop: start=0, step=1, limit=4
    $region2: #{decoder_layer_forward.5} parent=1 // loop_pre_header
      _
    $region3: #{decoder_layer_forward.5} parent=1 // loop_header
      %s19 = sphi 0, %s23
      %p20 = scmp.ge.s32.totalorder %s19, 4
      %s29 = sphi 0, %s31
      %s32 = sphi 0, %s29
      %s33 = sphi 0, %s32
      %s49 = sphi 0, %s33
      %s53 = sphi 0, %s53
      %s55 = sphi 0, %s53
      %s56 = sphi 0, %s55
      %s70 = sphi 0, %s56
      %s74 = sphi 0, %s74
      %s76 = sphi 0, %s74
      %s77 = sphi 0, %s76
      %s91 = sphi 0, %s77
      %s95 = sphi 0, %s95
      %s97 = sphi 0, %s95
      %s98 = sphi 0, %s97
      %s112 = sphi 0, %s98
      %s116 = sphi 0, %s116
      %s118 = sphi 0, %s116
      %s119 = sphi 0, %s118
      %s133 = sphi 0, %s119
      %s137 = sphi 0, %s137
      %s139 = sphi 0, %s137
      %s140 = sphi 0, %s139
      %s154 = sphi 0, %s140
      %s158 = sphi 0, %s158
      %s160 = sphi 0, %s158
      %s161 = sphi 0, %s160
      %s175 = sphi 0, %s161
      %s181 = sphi 0, %s183
      %s184 = sphi 0, %s181
      %s185 = sphi 0, %s184
      %s201 = sphi 0, %s185
    $region4: #{decoder_layer_forward.5} parent=1 // loop_header_branch
      %22 = sbr.rel (%p20) target = $region8
    $region5: #{decoder_layer_forward.5} parent=1 // loop_body
      %s24 = ssub.s32 %s19, 1
      %s25 = ssub.s32 %s19, 2
      %s26 = sadd.s32 %s19, 1
      %s27 = ssub.s32 %s19, %s26
      %p28 = scmp.eq.s32.totalorder %s27, 0
      %s30 = sadd.s32 %s29, 1
      %s31 = scalar_select %p28, %s29, %s30
      %p34 = pneg %p28
      %p35 = scmp.eq.s32.totalorder %s19, 1
      %p36 = por %p34, %p35
      %p37 = scmp.ne.s32.totalorder %s29, %s32
      %p38 = scmp.eq.s32.totalorder %s19, 0
      %p39 = por %p37, %p38
      %p40 = scmp.ne.s32.totalorder %s29, %s32
      %p41 = scmp.eq.s32.totalorder %s24, 1
      %p42 = por %p40, %p41
      %p43 = scmp.ne.s32.totalorder %s32, %s33
      %p44 = scmp.eq.s32.totalorder %s24, 0
      %p45 = por %p43, %p44
      %p46 = scmp.ne.s32.totalorder %s32, %s33
      %p47 = scmp.eq.s32.totalorder %s25, 1
      %p48 = por %p46, %p47
      %p50 = scmp.ne.s32.totalorder %s33, %s49
      %p51 = scmp.eq.s32.totalorder %s25, 0
      %p52 = por %p50, %p51
      %s54 = sadd.s32 %s53, 1
      %p57 = scmp.eq.s32.totalorder %s19, 1
      %p58 = scmp.ne.s32.totalorder %s53, %s55
      %p59 = scmp.eq.s32.totalorder %s19, 0
      %p60 = por %p58, %p59
      %p61 = scmp.ne.s32.totalorder %s53, %s55
      %p62 = scmp.eq.s32.totalorder %s24, 1
      %p63 = por %p61, %p62
      %p64 = scmp.ne.s32.totalorder %s55, %s56
      %p65 = scmp.eq.s32.totalorder %s24, 0
      %p66 = por %p64, %p65
      %p67 = scmp.ne.s32.totalorder %s55, %s56
      %p68 = scmp.eq.s32.totalorder %s25, 1
      %p69 = por %p67, %p68
      %p71 = scmp.ne.s32.totalorder %s56, %s70
      %p72 = scmp.eq.s32.totalorder %s25, 0
      %p73 = por %p71, %p72
      %s75 = sadd.s32 %s74, 1
      %p78 = scmp.eq.s32.totalorder %s19, 1
      %p79 = scmp.ne.s32.totalorder %s74, %s76
      %p80 = scmp.eq.s32.totalorder %s19, 0
      %p81 = por %p79, %p80
      %p82 = scmp.ne.s32.totalorder %s74, %s76
      %p83 = scmp.eq.s32.totalorder %s24, 1
      %p84 = por %p82, %p83
      %p85 = scmp.ne.s32.totalorder %s76, %s77
      %p86 = scmp.eq.s32.totalorder %s24, 0
      %p87 = por %p85, %p86
      %p88 = scmp.ne.s32.totalorder %s76, %s77
      %p89 = scmp.eq.s32.totalorder %s25, 1
      %p90 = por %p88, %p89
      %p92 = scmp.ne.s32.totalorder %s77, %s91
      %p93 = scmp.eq.s32.totalorder %s25, 0
      %p94 = por %p92, %p93
      %s96 = sadd.s32 %s95, 1
      %p99 = scmp.eq.s32.totalorder %s19, 1
      %p100 = scmp.ne.s32.totalorder %s95, %s97
      %p101 = scmp.eq.s32.totalorder %s19, 0
      %p102 = por %p100, %p101
      %p103 = scmp.ne.s32.totalorder %s95, %s97
      %p104 = scmp.eq.s32.totalorder %s24, 1
      %p105 = por %p103, %p104
      %p106 = scmp.ne.s32.totalorder %s97, %s98
      %p107 = scmp.eq.s32.totalorder %s24, 0
      %p108 = por %p106, %p107
      %p109 = scmp.ne.s32.totalorder %s97, %s98
      %p110 = scmp.eq.s32.totalorder %s25, 1
      %p111 = por %p109, %p110
      %p113 = scmp.ne.s32.totalorder %s98, %s112
      %p114 = scmp.eq.s32.totalorder %s25, 0
      %p115 = por %p113, %p114
      %s117 = sadd.s32 %s116, 1
      %p120 = scmp.eq.s32.totalorder %s19, 1
      %p121 = scmp.ne.s32.totalorder %s116, %s118
      %p122 = scmp.eq.s32.totalorder %s19, 0
      %p123 = por %p121, %p122
      %p124 = scmp.ne.s32.totalorder %s116, %s118
      %p125 = scmp.eq.s32.totalorder %s24, 1
      %p126 = por %p124, %p125
      %p127 = scmp.ne.s32.totalorder %s118, %s119
      %p128 = scmp.eq.s32.totalorder %s24, 0
      %p129 = por %p127, %p128
      %p130 = scmp.ne.s32.totalorder %s118, %s119
      %p131 = scmp.eq.s32.totalorder %s25, 1
      %p132 = por %p130, %p131
      %p134 = scmp.ne.s32.totalorder %s119, %s133
      %p135 = scmp.eq.s32.totalorder %s25, 0
      %p136 = por %p134, %p135
      %s138 = sadd.s32 %s137, 1
      %p141 = scmp.eq.s32.totalorder %s19, 1
      %p142 = scmp.ne.s32.totalorder %s137, %s139
      %p143 = scmp.eq.s32.totalorder %s19, 0
      %p144 = por %p142, %p143
      %p145 = scmp.ne.s32.totalorder %s137, %s139
      %p146 = scmp.eq.s32.totalorder %s24, 1
      %p147 = por %p145, %p146
      %p148 = scmp.ne.s32.totalorder %s139, %s140
      %p149 = scmp.eq.s32.totalorder %s24, 0
      %p150 = por %p148, %p149
      %p151 = scmp.ne.s32.totalorder %s139, %s140
      %p152 = scmp.eq.s32.totalorder %s25, 1
      %p153 = por %p151, %p152
      %p155 = scmp.ne.s32.totalorder %s140, %s154
      %p156 = scmp.eq.s32.totalorder %s25, 0
      %p157 = por %p155, %p156
      %s159 = sadd.s32 %s158, 1
      %p162 = scmp.eq.s32.totalorder %s19, 1
      %p163 = scmp.ne.s32.totalorder %s158, %s160
      %p164 = scmp.eq.s32.totalorder %s19, 0
      %p165 = por %p163, %p164
      %p166 = scmp.ne.s32.totalorder %s158, %s160
      %p167 = scmp.eq.s32.totalorder %s24, 1
      %p168 = por %p166, %p167
      %p169 = scmp.ne.s32.totalorder %s160, %s161
      %p170 = scmp.eq.s32.totalorder %s24, 0
      %p171 = por %p169, %p170
      %p172 = scmp.ne.s32.totalorder %s160, %s161
      %p173 = scmp.eq.s32.totalorder %s25, 1
      %p174 = por %p172, %p173
      %p176 = scmp.ne.s32.totalorder %s161, %s175
      %p177 = scmp.eq.s32.totalorder %s25, 0
      %p178 = por %p176, %p177
      %s179 = ssub.s32 %s19, %s26
      %p180 = scmp.eq.s32.totalorder %s179, 0
      %s182 = sadd.s32 %s181, 1
      %s183 = scalar_select %p180, %s181, %s182
      %p186 = pneg %p180
      %p187 = scmp.eq.s32.totalorder %s19, 1
      %p188 = por %p186, %p187
      %p189 = scmp.ne.s32.totalorder %s181, %s184
      %p190 = scmp.eq.s32.totalorder %s19, 0
      %p191 = por %p189, %p190
      %p192 = scmp.ne.s32.totalorder %s181, %s184
      %p193 = scmp.eq.s32.totalorder %s24, 1
      %p194 = por %p192, %p193
      %p195 = scmp.ne.s32.totalorder %s184, %s185
      %p196 = scmp.eq.s32.totalorder %s24, 0
      %p197 = por %p195, %p196
      %p198 = scmp.ne.s32.totalorder %s184, %s185
      %p199 = scmp.eq.s32.totalorder %s25, 1
      %p200 = por %p198, %p199
      %p202 = scmp.ne.s32.totalorder %s185, %s201
      %p203 = scmp.eq.s32.totalorder %s25, 0
      %p204 = por %p202, %p203
      %p205 = scmp.le.s32.totalorder 1, %s19
      %p206 = scmp.lt.s32.totalorder %s19, 3
      %p207 = pnand %p205, %p206
      %p208 = pneg %p207
      // Predicated region
      $region9: #{decoder_layer_forward.5} parent=5 // pred_check
        _
      $region10: #{decoder_layer_forward.5} parent=5 // pred_check_branch
        %210 = sbr.rel (%p207) target = $region12
      $region11: #{decoder_layer_forward.5} parent=5 // pred_region
        %s211 = ssub.s32 %s19, 1
        // Predicated region
        $region13: #{decoder_layer_forward.5} parent=11 // pred_check
          %p212 = pneg %p66
        $region14: #{decoder_layer_forward.5} parent=11 // pred_check_branch
          %214 = sbr.rel (%p212) target = $region16
        $region15: #{decoder_layer_forward.5} parent=11 // pred_region
          _
        $region16: #{decoder_layer_forward.5} parent=11 // pred_fallthru
          _
        // Predicated region
        $region17: #{decoder_layer_forward.5} parent=11 // pred_check
          %p215 = pneg %p87
        $region18: #{decoder_layer_forward.5} parent=11 // pred_check_branch
          %217 = sbr.rel (%p215) target = $region20
        $region19: #{decoder_layer_forward.5} parent=11 // pred_region
          %s219 = ssub.s32 64, 64
          %220 = vsyncadd [#allocation3], %s219
          %s222 = sshll.u32 [#allocation2], 4
          %s223 = int_to_ptr.vmem [resolvable:$true] %s222
          %225 = dma.hbm_to_vmem [thread:$0]  %s2, 64, %s223, [#allocation3]
        $region20: #{decoder_layer_forward.5} parent=11 // pred_fallthru
          _
        // Predicated region
        $region21: #{decoder_layer_forward.5} parent=11 // pred_check
          %p226 = pneg %p108
        $region22: #{decoder_layer_forward.5} parent=11 // pred_check_branch
          %228 = sbr.rel (%p226) target = $region24
        $region23: #{decoder_layer_forward.5} parent=11 // pred_region
          _
        $region24: #{decoder_layer_forward.5} parent=11 // pred_fallthru
          _
        // Predicated region
        $region25: #{decoder_layer_forward.5} parent=11 // pred_check
          %p229 = pneg %p129
        $region26: #{decoder_layer_forward.5} parent=11 // pred_check_branch
          %231 = sbr.rel (%p229) target = $region28
        $region27: #{decoder_layer_forward.5} parent=11 // pred_region
          %s233 = ssub.s32 16, 16
          %234 = vsyncadd [#allocation6], %s233
          %s236 = sshll.u32 [#allocation5], 4
          %s237 = int_to_ptr.vmem [resolvable:$true] %s236
          %239 = dma.hbm_to_vmem [thread:$0]  %s4, 16, %s237, [#allocation6]
        $region28: #{decoder_layer_forward.5} parent=11 // pred_fallthru
          _
        // Predicated region
        $region29: #{decoder_layer_forward.5} parent=11 // pred_check
          %p240 = pneg %p150
        $region30: #{decoder_layer_forward.5} parent=11 // pred_check_branch
          %242 = sbr.rel (%p240) target = $region32
        $region31: #{decoder_layer_forward.5} parent=11 // pred_region
          %s244 = ssub.s32 16, 16
          %245 = vsyncadd [#allocation6], %s244
          %s247 = sshll.u32 [#allocation7], 4
          %s248 = int_to_ptr.vmem [resolvable:$true] %s247
          %250 = dma.hbm_to_vmem [thread:$0]  %s5, 16, %s248, [#allocation6]
        $region32: #{decoder_layer_forward.5} parent=11 // pred_fallthru
          _
        // Predicated region
        $region33: #{decoder_layer_forward.5} parent=11 // pred_check
          %p251 = pneg %p171
        $region34: #{decoder_layer_forward.5} parent=11 // pred_check_branch
          %253 = sbr.rel (%p251) target = $region36
        $region35: #{decoder_layer_forward.5} parent=11 // pred_region
          %s255 = ssub.s32 16, 16
          %256 = vsyncadd [#allocation9], %s255
          %s258 = sshll.u32 [#allocation8], 4
          %s259 = int_to_ptr.vmem [resolvable:$true] %s258
          %261 = dma.hbm_to_vmem [thread:$0]  %s6, 16, %s259, [#allocation9]
        $region36: #{decoder_layer_forward.5} parent=11 // pred_fallthru
          _
      $region12: #{decoder_layer_forward.5} parent=5 // pred_fallthru
        _
      %p262 = scmp.lt.s32.totalorder %s19, 2
      // Predicated region
      $region37: #{decoder_layer_forward.5} parent=5 // pred_check
        %p263 = pneg %p262
      $region38: #{decoder_layer_forward.5} parent=5 // pred_check_branch
        %265 = sbr.rel (%p263) target = $region40
      $region39: #{decoder_layer_forward.5} parent=5 // pred_region
        // Predicated region
        $region41: #{decoder_layer_forward.5} parent=39 // pred_check
          %p266 = pneg %p39
        $region42: #{decoder_layer_forward.5} parent=39 // pred_check_branch
          %268 = sbr.rel (%p266) target = $region44
        $region43: #{decoder_layer_forward.5} parent=39 // pred_region
          %p269 = scmp.lt.s32.totalorder %s19, 1
          %s270 = scalar_select %p269, %s19, 1
          %s271 = smul.addr %s270, 8
          %s272 = scalar_lea.vmem %s0, %s271
        $region44: #{decoder_layer_forward.5} parent=39 // pred_fallthru
          _
      $region40: #{decoder_layer_forward.5} parent=5 // pred_fallthru
        _
      %p273 = scmp.le.s32.totalorder 1, %s19
      %p274 = scmp.lt.s32.totalorder %s19, 3
      %p275 = pnand %p273, %p274
      %p276 = pneg %p275
      // Predicated region
      $region45: #{decoder_layer_forward.5} parent=5 // pred_check
        _
      $region46: #{decoder_layer_forward.5} parent=5 // pred_check_branch
        %278 = sbr.rel (%p275) target = $region48
      $region47: #{decoder_layer_forward.5} parent=5 // pred_region
        %s279 = ssub.s32 %s19, 1
        // Predicated region
        $region49: #{decoder_layer_forward.5} parent=47 // pred_check
          %p280 = pneg %p87
        $region50: #{decoder_layer_forward.5} parent=47 // pred_check_branch
          %282 = sbr.rel (%p280) target = $region52
        $region51: #{decoder_layer_forward.5} parent=47 // pred_region
          %283 = dma.done [#allocation3], 64
        $region52: #{decoder_layer_forward.5} parent=47 // pred_fallthru
          _
        // Predicated region
        $region53: #{decoder_layer_forward.5} parent=47 // pred_check
          %p284 = pneg %p129
        $region54: #{decoder_layer_forward.5} parent=47 // pred_check_branch
          %286 = sbr.rel (%p284) target = $region56
        $region55: #{decoder_layer_forward.5} parent=47 // pred_region
          %287 = dma.done [#allocation6], 16
        $region56: #{decoder_layer_forward.5} parent=47 // pred_fallthru
          _
        // Predicated region
        $region57: #{decoder_layer_forward.5} parent=47 // pred_check
          %p288 = pneg %p150
        $region58: #{decoder_layer_forward.5} parent=47 // pred_check_branch
          %290 = sbr.rel (%p288) target = $region60
        $region59: #{decoder_layer_forward.5} parent=47 // pred_region
          %291 = dma.done [#allocation6], 16
        $region60: #{decoder_layer_forward.5} parent=47 // pred_fallthru
          _
        // Predicated region
        $region61: #{decoder_layer_forward.5} parent=47 // pred_check
          %p292 = pneg %p171
        $region62: #{decoder_layer_forward.5} parent=47 // pred_check_branch
          %294 = sbr.rel (%p292) target = $region64
        $region63: #{decoder_layer_forward.5} parent=47 // pred_region
          %295 = dma.done [#allocation9], 16
        $region64: #{decoder_layer_forward.5} parent=47 // pred_fallthru
          _
        %p296 = scmp.lt.s32.totalorder %s24, 1
        %s297 = scalar_select %p296, %s24, 1
        %s298 = smul.addr %s297, 8
        %s299 = scalar_lea.vmem %s0, %s298
        %p300 = pneg %p45
        %p301 = pneg %p42
        %p302 = pneg %p66
        %p303 = pneg %p63
        %p304 = pneg %p87
        %p305 = pneg %p84
        %p306 = pneg %p108
        %p307 = pneg %p105
        %p308 = pneg %p129
        %p309 = pneg %p126
        %p310 = pneg %p150
        %p311 = pneg %p147
        %p312 = pneg %p171
        %p313 = pneg %p168
        %p314 = pneg %p197
        %p315 = pneg %p194
        %s316 = sand.u32 %s184, 1
        %s317 = scalar_lea.sflag [#allocation4], %s316
        %s318 = sand.u32 %s184, 1
        %s319 = smul.addr %s318, 8
        %s320 = scalar_lea.vmem [#allocation10], %s319
        %p321 = scmp.lt.s32.totalorder %s24, 1
        %s322 = scalar_select %p321, %s24, 1
        %s323 = smul.addr %s322, 8
        %s324 = scalar_lea.vmem %s0, %s323
        %v326 = vld [vmem:[%s324] sm:$0xff]
        %v327 = vpack.c.bf16 %v326, %v326
        %v328 = vld [vmem:[%s1] sm:$0xff]
        %v329 = vld [vmem:[%s1 + $0x8] sm:$0xff]
        %v330 = vld [vmem:[%s1 + $0x10] sm:$0xff]
        %v331 = vld [vmem:[%s1 + $0x18] sm:$0xff]
        %v332 = vld [vmem:[%s1 + $0x20] sm:$0xff]
        %v333 = vld [vmem:[%s1 + $0x28] sm:$0xff]
        %v334 = vld [vmem:[%s1 + $0x30] sm:$0xff]
        %v335 = vld [vmem:[%s1 + $0x38] sm:$0xff]
        %v336 = vld [vmem:[%s1 + $0x40] sm:$0xff]
        %v337 = vld [vmem:[%s1 + $0x48] sm:$0xff]
        %v338 = vld [vmem:[%s1 + $0x50] sm:$0xff]
        %v339 = vld [vmem:[%s1 + $0x58] sm:$0xff]
        %v340 = vld [vmem:[%s1 + $0x60] sm:$0xff]
        %v341 = vld [vmem:[%s1 + $0x68] sm:$0xff]
        %v342 = vld [vmem:[%s1 + $0x70] sm:$0xff]
        %v343 = vld [vmem:[%s1 + $0x78] sm:$0xff]
        %v344 = vld [vmem:[%s1 + $0x80] sm:$0xff]
        %v345 = vld [vmem:[%s1 + $0x88] sm:$0xff]
        %v346 = vld [vmem:[%s1 + $0x90] sm:$0xff]
        %v347 = vld [vmem:[%s1 + $0x98] sm:$0xff]
        %v348 = vld [vmem:[%s1 + $0xa0] sm:$0xff]
        %v349 = vld [vmem:[%s1 + $0xa8] sm:$0xff]
        %v350 = vld [vmem:[%s1 + $0xb0] sm:$0xff]
        %v351 = vld [vmem:[%s1 + $0xb8] sm:$0xff]
        %v352 = vld [vmem:[%s1 + $0xc0] sm:$0xff]
        %v353 = vld [vmem:[%s1 + $0xc8] sm:$0xff]
        %v354 = vld [vmem:[%s1 + $0xd0] sm:$0xff]
        %v355 = vld [vmem:[%s1 + $0xd8] sm:$0xff]
        %v356 = vld [vmem:[%s1 + $0xe0] sm:$0xff]
        %v357 = vld [vmem:[%s1 + $0xe8] sm:$0xff]
        %v358 = vld [vmem:[%s1 + $0xf0] sm:$0xff]
        %v359 = vld [vmem:[%s1 + $0xf8] sm:$0xff]
        %v360 = vld [vmem:[#allocation2] sm:$0xf]
        %v362 = vlaneseq
        %v363 = vshrl.u32 %v362, 7
        %v364 = vsub.s32 0, %v363
        %v365 = vrot.slane %v360, %v364
        %v366 = vlaneseq
        %v367 = vshrl.u32 %v366, 7
        %v368 = vsub.s32 1, %v367
        %v369 = vrot.slane %v360, %v368
        %v370 = vlaneseq
        %v371 = vshrl.u32 %v370, 7
        %v372 = vsub.s32 2, %v371
        %v373 = vrot.slane %v360, %v372
        %v374 = vlaneseq
        %v375 = vshrl.u32 %v374, 7
        %v376 = vsub.s32 3, %v375
        %v377 = vrot.slane %v360, %v376
        %v414 = vunpack.c.l.b16 %v328
        %v415 = vunpack.c.h.b16 %v328
        %v416 = vunpack.c.l.b16 %v329
        %v417 = vunpack.c.h.b16 %v329
        %v418 = vunpack.c.l.b16 %v330
        %v419 = vunpack.c.h.b16 %v330
        %v420 = vunpack.c.l.b16 %v331
        %v421 = vunpack.c.h.b16 %v331
        %v422 = vunpack.c.l.b16 %v332
        %v423 = vunpack.c.h.b16 %v332
        %v424 = vunpack.c.l.b16 %v333
        %v425 = vunpack.c.h.b16 %v333
        %v426 = vunpack.c.l.b16 %v334
        %v427 = vunpack.c.h.b16 %v334
        %v428 = vunpack.c.l.b16 %v335
        %v429 = vunpack.c.h.b16 %v335
        %v430 = vunpack.c.l.b16 %v336
        %v431 = vunpack.c.h.b16 %v336
        %v432 = vunpack.c.l.b16 %v337
        %v433 = vunpack.c.h.b16 %v337
        %v434 = vunpack.c.l.b16 %v338
        %v435 = vunpack.c.h.b16 %v338
        %v436 = vunpack.c.l.b16 %v339
        %v437 = vunpack.c.h.b16 %v339
        %v438 = vunpack.c.l.b16 %v340
        %v439 = vunpack.c.h.b16 %v340
        %v440 = vunpack.c.l.b16 %v341
        %v441 = vunpack.c.h.b16 %v341
        %v442 = vunpack.c.l.b16 %v342
        %v443 = vunpack.c.h.b16 %v342
        %v444 = vunpack.c.l.b16 %v343
        %v445 = vunpack.c.h.b16 %v343
        %v446 = vunpack.c.l.b16 %v344
        %v447 = vunpack.c.h.b16 %v344
        %v448 = vunpack.c.l.b16 %v345
        %v449 = vunpack.c.h.b16 %v345
        %v450 = vunpack.c.l.b16 %v346
        %v451 = vunpack.c.h.b16 %v346
        %v452 = vunpack.c.l.b16 %v347
        %v453 = vunpack.c.h.b16 %v347
        %v454 = vunpack.c.l.b16 %v348
        %v455 = vunpack.c.h.b16 %v348
        %v456 = vunpack.c.l.b16 %v349
        %v457 = vunpack.c.h.b16 %v349
        %v458 = vunpack.c.l.b16 %v350
        %v459 = vunpack.c.h.b16 %v350
        %v460 = vunpack.c.l.b16 %v351
        %v461 = vunpack.c.h.b16 %v351
        %v462 = vunpack.c.l.b16 %v352
        %v463 = vunpack.c.h.b16 %v352
        %v464 = vunpack.c.l.b16 %v353
        %v465 = vunpack.c.h.b16 %v353
        %v466 = vunpack.c.l.b16 %v354
        %v467 = vunpack.c.h.b16 %v354
        %v468 = vunpack.c.l.b16 %v355
        %v469 = vunpack.c.h.b16 %v355
        %v470 = vunpack.c.l.b16 %v356
        %v471 = vunpack.c.h.b16 %v356
        %v472 = vunpack.c.l.b16 %v357
        %v473 = vunpack.c.h.b16 %v357
        %v474 = vunpack.c.l.b16 %v358
        %v475 = vunpack.c.h.b16 %v358
        %v476 = vunpack.c.l.b16 %v359
        %v477 = vunpack.c.h.b16 %v359
        %v478 = vpack.c.b16 %v418, %v414
        %v479 = vpack.c.b16 %v419, %v415
        %v480 = vpack.c.b16 %v420, %v416
        %v481 = vpack.c.b16 %v421, %v417
        %v482 = vpack.c.b16 %v426, %v422
        %v483 = vpack.c.b16 %v427, %v423
        %v484 = vpack.c.b16 %v428, %v424
        %v485 = vpack.c.b16 %v429, %v425
        %v486 = vpack.c.b16 %v434, %v430
        %v487 = vpack.c.b16 %v435, %v431
        %v488 = vpack.c.b16 %v436, %v432
        %v489 = vpack.c.b16 %v437, %v433
        %v490 = vpack.c.b16 %v442, %v438
        %v491 = vpack.c.b16 %v443, %v439
        %v492 = vpack.c.b16 %v444, %v440
        %v493 = vpack.c.b16 %v445, %v441
        %v494 = vpack.c.b16 %v450, %v446
        %v495 = vpack.c.b16 %v451, %v447
        %v496 = vpack.c.b16 %v452, %v448
        %v497 = vpack.c.b16 %v453, %v449
        %v498 = vpack.c.b16 %v458, %v454
        %v499 = vpack.c.b16 %v459, %v455
        %v500 = vpack.c.b16 %v460, %v456
        %v501 = vpack.c.b16 %v461, %v457
        %v502 = vpack.c.b16 %v466, %v462
        %v503 = vpack.c.b16 %v467, %v463
        %v504 = vpack.c.b16 %v468, %v464
        %v505 = vpack.c.b16 %v469, %v465
        %v506 = vpack.c.b16 %v474, %v470
        %v507 = vpack.c.b16 %v475, %v471
        %v508 = vpack.c.b16 %v476, %v472
        %v509 = vpack.c.b16 %v477, %v473
        %542 = vmatprep.subr.bf16.mxu0 %v479
        %543 = vmatpush1.bf16.msra.mxu0 %v478
        %544 = vmatprep.subr.bf16.mxu0 %v483
        %545 = vmatpush1.bf16.msra.mxu0 %v482
        %546 = vmatprep.subr.bf16.mxu0 %v487
        %547 = vmatpush1.bf16.msra.mxu0 %v486
        %548 = vmatprep.subr.bf16.mxu0 %v491
        %549 = vmatpush1.bf16.msra.mxu0 %v490
        %550 = vmatprep.subr.bf16.mxu0 %v495
        %551 = vmatpush1.bf16.msra.mxu0 %v494
        %552 = vmatprep.subr.bf16.mxu0 %v499
        %553 = vmatpush1.bf16.msra.mxu0 %v498
        %554 = vmatprep.subr.bf16.mxu0 %v503
        %555 = vmatpush1.bf16.msra.mxu0 %v502
        %556 = vmatprep.subr.bf16.mxu0 %v507
        %557 = vmatpush1.bf16.msra.mxu0 %v506
        %558 = vmatprep.subr.bf16.mxu0 0
        %559 = vmatpush1.bf16.msra.mxu0 0
        %560 = vmatprep.subr.bf16.mxu0 0
        %561 = vmatpush1.bf16.msra.mxu0 0
        %562 = vmatprep.subr.bf16.mxu0 0
        %563 = vmatpush1.bf16.msra.mxu0 0
        %564 = vmatprep.subr.bf16.mxu0 0
        %565 = vmatpush1.bf16.msra.mxu0 0
        %566 = vmatprep.subr.bf16.mxu0 0
        %567 = vmatpush1.bf16.msra.mxu0 0
        %568 = vmatprep.subr.bf16.mxu0 0
        %569 = vmatpush1.bf16.msra.mxu0 0
        %570 = vmatprep.subr.bf16.mxu0 0
        %571 = vmatpush1.bf16.msra.mxu0 0
        %572 = vmatprep.subr.bf16.mxu0 0
        %573 = vmatpush1.bf16.msra.mxu0 0
        %574 = vmatprep.mubr.bf16.mxu0 0
        %575 = vmatmul.mubr.bf16.gmra.mrb[0].mxu0 %v327
        %v576 = vpop.f32.mrb[0].mxu0
        %v577 = vadd.f32 %v365, %v576
        %v578 = vpop.f32.mrb[0].mxu0
        %v579 = vadd.f32 %v369, %v578
        %v580 = vpop.f32.mrb[0].mxu0
        %v581 = vpop.f32.mrb[0].mxu0
        %582 = vdwg.mxu0
        %583 = vmatprep.subr.bf16.mxu0 %v481
        %584 = vmatpush1.bf16.msra.mxu0 %v480
        %585 = vmatprep.subr.bf16.mxu0 %v485
        %586 = vmatpush1.bf16.msra.mxu0 %v484
        %587 = vmatprep.subr.bf16.mxu0 %v489
        %588 = vmatpush1.bf16.msra.mxu0 %v488
        %589 = vmatprep.subr.bf16.mxu0 %v493
        %590 = vmatpush1.bf16.msra.mxu0 %v492
        %591 = vmatprep.subr.bf16.mxu0 %v497
        %592 = vmatpush1.bf16.msra.mxu0 %v496
        %593 = vmatprep.subr.bf16.mxu0 %v501
        %594 = vmatpush1.bf16.msra.mxu0 %v500
        %595 = vmatprep.subr.bf16.mxu0 %v505
        %596 = vmatpush1.bf16.msra.mxu0 %v504
        %597 = vmatprep.subr.bf16.mxu0 %v509
        %598 = vmatpush1.bf16.msra.mxu0 %v508
        %599 = vmatprep.subr.bf16.mxu0 0
        %600 = vmatpush1.bf16.msra.mxu0 0
        %601 = vmatprep.subr.bf16.mxu0 0
        %602 = vmatpush1.bf16.msra.mxu0 0
        %603 = vmatprep.subr.bf16.mxu0 0
        %604 = vmatpush1.bf16.msra.mxu0 0
        %605 = vmatprep.subr.bf16.mxu0 0
        %606 = vmatpush1.bf16.msra.mxu0 0
        %607 = vmatprep.subr.bf16.mxu0 0
        %608 = vmatpush1.bf16.msra.mxu0 0
        %609 = vmatprep.subr.bf16.mxu0 0
        %610 = vmatpush1.bf16.msra.mxu0 0
        %611 = vmatprep.subr.bf16.mxu0 0
        %612 = vmatpush1.bf16.msra.mxu0 0
        %613 = vmatprep.subr.bf16.mxu0 0
        %614 = vmatpush1.bf16.msra.mxu0 0
        %615 = vmatprep.mubr.bf16.mxu0 0
        %616 = vmatmul.mubr.bf16.gmra.mrb[0].mxu0 %v327
        %v617 = vpop.f32.mrb[0].mxu0
        %v618 = vadd.f32 %v373, %v617
        %v619 = vpop.f32.mrb[0].mxu0
        %v620 = vadd.f32 %v377, %v619
        %v621 = vpop.f32.mrb[0].mxu0
        %v622 = vpop.f32.mrb[0].mxu0
        %623 = vdwg.mxu0
        %v624 = vmax.f32 %v577, 0.0
        %v625 = vmax.f32 %v579, 0.0
        %v626 = vmax.f32 %v618, 0.0
        %v627 = vmax.f32 %v620, 0.0
        %v628 = vpack.c.bf16 %v624, %v624
        %v629 = vpack.c.bf16 %v625, %v625
        %v630 = vpack.c.bf16 %v626, %v626
        %v631 = vpack.c.bf16 %v627, %v627
        %v632 = vld [vmem:[%s3] sm:$0xf]
        %v633 = vld [vmem:[%s3 + $0x4] sm:$0xf]
        %v634 = vld [vmem:[%s3 + $0x8] sm:$0xf]
        %v635 = vld [vmem:[%s3 + $0xc] sm:$0xf]
        %v636 = vld [vmem:[%s3 + $0x10] sm:$0xf]
        %v637 = vld [vmem:[%s3 + $0x14] sm:$0xf]
        %v638 = vld [vmem:[%s3 + $0x18] sm:$0xf]
        %v639 = vld [vmem:[%s3 + $0x1c] sm:$0xf]
        %v640 = vld [vmem:[%s3 + $0x20] sm:$0xf]
        %v641 = vld [vmem:[%s3 + $0x24] sm:$0xf]
        %v642 = vld [vmem:[%s3 + $0x28] sm:$0xf]
        %v643 = vld [vmem:[%s3 + $0x2c] sm:$0xf]
        %v644 = vld [vmem:[%s3 + $0x30] sm:$0xf]
        %v645 = vld [vmem:[%s3 + $0x34] sm:$0xf]
        %v646 = vld [vmem:[%s3 + $0x38] sm:$0xf]
        %v647 = vld [vmem:[%s3 + $0x3c] sm:$0xf]
        %v648 = vld [vmem:[%s3 + $0x40] sm:$0xf]
        %v649 = vld [vmem:[%s3 + $0x44] sm:$0xf]
        %v650 = vld [vmem:[%s3 + $0x48] sm:$0xf]
        %v651 = vld [vmem:[%s3 + $0x4c] sm:$0xf]
        %v652 = vld [vmem:[%s3 + $0x50] sm:$0xf]
        %v653 = vld [vmem:[%s3 + $0x54] sm:$0xf]
        %v654 = vld [vmem:[%s3 + $0x58] sm:$0xf]
        %v655 = vld [vmem:[%s3 + $0x5c] sm:$0xf]
        %v656 = vld [vmem:[%s3 + $0x60] sm:$0xf]
        %v657 = vld [vmem:[%s3 + $0x64] sm:$0xf]
        %v658 = vld [vmem:[%s3 + $0x68] sm:$0xf]
        %v659 = vld [vmem:[%s3 + $0x6c] sm:$0xf]
        %v660 = vld [vmem:[%s3 + $0x70] sm:$0xf]
        %v661 = vld [vmem:[%s3 + $0x74] sm:$0xf]
        %v662 = vld [vmem:[%s3 + $0x78] sm:$0xf]
        %v663 = vld [vmem:[%s3 + $0x7c] sm:$0xf]
        %v664 = vld [vmem:[%s3 + $0x80] sm:$0xf]
        %v665 = vld [vmem:[%s3 + $0x84] sm:$0xf]
        %v666 = vld [vmem:[%s3 + $0x88] sm:$0xf]
        %v667 = vld [vmem:[%s3 + $0x8c] sm:$0xf]
        %v668 = vld [vmem:[%s3 + $0x90] sm:$0xf]
        %v669 = vld [vmem:[%s3 + $0x94] sm:$0xf]
        %v670 = vld [vmem:[%s3 + $0x98] sm:$0xf]
        %v671 = vld [vmem:[%s3 + $0x9c] sm:$0xf]
        %v672 = vld [vmem:[%s3 + $0xa0] sm:$0xf]
        %v673 = vld [vmem:[%s3 + $0xa4] sm:$0xf]
        %v674 = vld [vmem:[%s3 + $0xa8] sm:$0xf]
        %v675 = vld [vmem:[%s3 + $0xac] sm:$0xf]
        %v676 = vld [vmem:[%s3 + $0xb0] sm:$0xf]
        %v677 = vld [vmem:[%s3 + $0xb4] sm:$0xf]
        %v678 = vld [vmem:[%s3 + $0xb8] sm:$0xf]
        %v679 = vld [vmem:[%s3 + $0xbc] sm:$0xf]
        %v680 = vld [vmem:[%s3 + $0xc0] sm:$0xf]
        %v681 = vld [vmem:[%s3 + $0xc4] sm:$0xf]
        %v682 = vld [vmem:[%s3 + $0xc8] sm:$0xf]
        %v683 = vld [vmem:[%s3 + $0xcc] sm:$0xf]
        %v684 = vld [vmem:[%s3 + $0xd0] sm:$0xf]
        %v685 = vld [vmem:[%s3 + $0xd4] sm:$0xf]
        %v686 = vld [vmem:[%s3 + $0xd8] sm:$0xf]
        %v687 = vld [vmem:[%s3 + $0xdc] sm:$0xf]
        %v688 = vld [vmem:[%s3 + $0xe0] sm:$0xf]
        %v689 = vld [vmem:[%s3 + $0xe4] sm:$0xf]
        %v690 = vld [vmem:[%s3 + $0xe8] sm:$0xf]
        %v691 = vld [vmem:[%s3 + $0xec] sm:$0xf]
        %v692 = vld [vmem:[%s3 + $0xf0] sm:$0xf]
        %v693 = vld [vmem:[%s3 + $0xf4] sm:$0xf]
        %v694 = vld [vmem:[%s3 + $0xf8] sm:$0xf]
        %v695 = vld [vmem:[%s3 + $0xfc] sm:$0xf]
        %v696 = vld [vmem:[#allocation5] sm:$0x1]
        %v698 = vlaneseq
        %v699 = vshrl.u32 %v698, 7
        %v700 = vsub.s32 0, %v699
        %v701 = vrot.slane %v696, %v700
        %v767 = vunpack.c.l.b16 %v632
        %v768 = vunpack.c.l.b16 %v633
        %v769 = vunpack.c.l.b16 %v634
        %v770 = vunpack.c.l.b16 %v635
        %v771 = vunpack.c.l.b16 %v636
        %v772 = vunpack.c.l.b16 %v637
        %v773 = vunpack.c.l.b16 %v638
        %v774 = vunpack.c.l.b16 %v639
        %v775 = vunpack.c.l.b16 %v640
        %v776 = vunpack.c.l.b16 %v641
        %v777 = vunpack.c.l.b16 %v642
        %v778 = vunpack.c.l.b16 %v643
        %v779 = vunpack.c.l.b16 %v644
        %v780 = vunpack.c.l.b16 %v645
        %v781 = vunpack.c.l.b16 %v646
        %v782 = vunpack.c.l.b16 %v647
        %v783 = vunpack.c.l.b16 %v648
        %v784 = vunpack.c.l.b16 %v649
        %v785 = vunpack.c.l.b16 %v650
        %v786 = vunpack.c.l.b16 %v651
        %v787 = vunpack.c.l.b16 %v652
        %v788 = vunpack.c.l.b16 %v653
        %v789 = vunpack.c.l.b16 %v654
        %v790 = vunpack.c.l.b16 %v655
        %v791 = vunpack.c.l.b16 %v656
        %v792 = vunpack.c.l.b16 %v657
        %v793 = vunpack.c.l.b16 %v658
        %v794 = vunpack.c.l.b16 %v659
        %v795 = vunpack.c.l.b16 %v660
        %v796 = vunpack.c.l.b16 %v661
        %v797 = vunpack.c.l.b16 %v662
        %v798 = vunpack.c.l.b16 %v663
        %v799 = vunpack.c.l.b16 %v664
        %v800 = vunpack.c.l.b16 %v665
        %v801 = vunpack.c.l.b16 %v666
        %v802 = vunpack.c.l.b16 %v667
        %v803 = vunpack.c.l.b16 %v668
        %v804 = vunpack.c.l.b16 %v669
        %v805 = vunpack.c.l.b16 %v670
        %v806 = vunpack.c.l.b16 %v671
        %v807 = vunpack.c.l.b16 %v672
        %v808 = vunpack.c.l.b16 %v673
        %v809 = vunpack.c.l.b16 %v674
        %v810 = vunpack.c.l.b16 %v675
        %v811 = vunpack.c.l.b16 %v676
        %v812 = vunpack.c.l.b16 %v677
        %v813 = vunpack.c.l.b16 %v678
        %v814 = vunpack.c.l.b16 %v679
        %v815 = vunpack.c.l.b16 %v680
        %v816 = vunpack.c.l.b16 %v681
        %v817 = vunpack.c.l.b16 %v682
        %v818 = vunpack.c.l.b16 %v683
        %v819 = vunpack.c.l.b16 %v684
        %v820 = vunpack.c.l.b16 %v685
        %v821 = vunpack.c.l.b16 %v686
        %v822 = vunpack.c.l.b16 %v687
        %v823 = vunpack.c.l.b16 %v688
        %v824 = vunpack.c.l.b16 %v689
        %v825 = vunpack.c.l.b16 %v690
        %v826 = vunpack.c.l.b16 %v691
        %v827 = vunpack.c.l.b16 %v692
        %v828 = vunpack.c.l.b16 %v693
        %v829 = vunpack.c.l.b16 %v694
        %v830 = vunpack.c.l.b16 %v695
        %v831 = vpack.c.b16 %v768, %v767
        %v832 = vpack.c.b16 %v770, %v769
        %v833 = vpack.c.b16 %v772, %v771
        %v834 = vpack.c.b16 %v774, %v773
        %v835 = vpack.c.b16 %v776, %v775
        %v836 = vpack.c.b16 %v778, %v777
        %v837 = vpack.c.b16 %v780, %v779
        %v838 = vpack.c.b16 %v782, %v781
        %v839 = vpack.c.b16 %v784, %v783
        %v840 = vpack.c.b16 %v786, %v785
        %v841 = vpack.c.b16 %v788, %v787
        %v842 = vpack.c.b16 %v790, %v789
        %v843 = vpack.c.b16 %v792, %v791
        %v844 = vpack.c.b16 %v794, %v793
        %v845 = vpack.c.b16 %v796, %v795
        %v846 = vpack.c.b16 %v798, %v797
        %v847 = vpack.c.b16 %v800, %v799
        %v848 = vpack.c.b16 %v802, %v801
        %v849 = vpack.c.b16 %v804, %v803
        %v850 = vpack.c.b16 %v806, %v805
        %v851 = vpack.c.b16 %v808, %v807
        %v852 = vpack.c.b16 %v810, %v809
        %v853 = vpack.c.b16 %v812, %v811
        %v854 = vpack.c.b16 %v814, %v813
        %v855 = vpack.c.b16 %v816, %v815
        %v856 = vpack.c.b16 %v818, %v817
        %v857 = vpack.c.b16 %v820, %v819
        %v858 = vpack.c.b16 %v822, %v821
        %v859 = vpack.c.b16 %v824, %v823
        %v860 = vpack.c.b16 %v826, %v825
        %v861 = vpack.c.b16 %v828, %v827
        %v862 = vpack.c.b16 %v830, %v829
        %895 = vmatprep.subr.bf16.mxu0 0
        %896 = vmatpush1.bf16.msra.mxu0 %v831
        %897 = vmatprep.subr.bf16.mxu0 0
        %898 = vmatpush1.bf16.msra.mxu0 %v832
        %899 = vmatprep.subr.bf16.mxu0 0
        %900 = vmatpush1.bf16.msra.mxu0 %v833
        %901 = vmatprep.subr.bf16.mxu0 0
        %902 = vmatpush1.bf16.msra.mxu0 %v834
        %903 = vmatprep.subr.bf16.mxu0 0
        %904 = vmatpush1.bf16.msra.mxu0 %v835
        %905 = vmatprep.subr.bf16.mxu0 0
        %906 = vmatpush1.bf16.msra.mxu0 %v836
        %907 = vmatprep.subr.bf16.mxu0 0
        %908 = vmatpush1.bf16.msra.mxu0 %v837
        %909 = vmatprep.subr.bf16.mxu0 0
        %910 = vmatpush1.bf16.msra.mxu0 %v838
        %911 = vmatprep.subr.bf16.mxu0 0
        %912 = vmatpush1.bf16.msra.mxu0 %v839
        %913 = vmatprep.subr.bf16.mxu0 0
        %914 = vmatpush1.bf16.msra.mxu0 %v840
        %915 = vmatprep.subr.bf16.mxu0 0
        %916 = vmatpush1.bf16.msra.mxu0 %v841
        %917 = vmatprep.subr.bf16.mxu0 0
        %918 = vmatpush1.bf16.msra.mxu0 %v842
        %919 = vmatprep.subr.bf16.mxu0 0
        %920 = vmatpush1.bf16.msra.mxu0 %v843
        %921 = vmatprep.subr.bf16.mxu0 0
        %922 = vmatpush1.bf16.msra.mxu0 %v844
        %923 = vmatprep.subr.bf16.mxu0 0
        %924 = vmatpush1.bf16.msra.mxu0 %v845
        %925 = vmatprep.subr.bf16.mxu0 0
        %926 = vmatpush1.bf16.msra.mxu0 %v846
        %927 = vmatprep.mubr.bf16.mxu0 %v629
        %928 = vmatmul.mubr.bf16.gmra.mrb[0].mxu0 %v628
        %v929 = vpop.f32.mrb[0].mxu0
        %v930 = vadd.f32 %v701, %v929
        %v931 = vpop.f32.mrb[0].mxu0
        %v932 = vpop.f32.mrb[0].mxu0
        %v933 = vpop.f32.mrb[0].mxu0
        %934 = vdwg.mxu0
        %935 = vmatprep.subr.bf16.mxu0 0
        %936 = vmatpush1.bf16.msra.mxu0 %v847
        %937 = vmatprep.subr.bf16.mxu0 0
        %938 = vmatpush1.bf16.msra.mxu0 %v848
        %939 = vmatprep.subr.bf16.mxu0 0
        %940 = vmatpush1.bf16.msra.mxu0 %v849
        %941 = vmatprep.subr.bf16.mxu0 0
        %942 = vmatpush1.bf16.msra.mxu0 %v850
        %943 = vmatprep.subr.bf16.mxu0 0
        %944 = vmatpush1.bf16.msra.mxu0 %v851
        %945 = vmatprep.subr.bf16.mxu0 0
        %946 = vmatpush1.bf16.msra.mxu0 %v852
        %947 = vmatprep.subr.bf16.mxu0 0
        %948 = vmatpush1.bf16.msra.mxu0 %v853
        %949 = vmatprep.subr.bf16.mxu0 0
        %950 = vmatpush1.bf16.msra.mxu0 %v854
        %951 = vmatprep.subr.bf16.mxu0 0
        %952 = vmatpush1.bf16.msra.mxu0 %v855
        %953 = vmatprep.subr.bf16.mxu0 0
        %954 = vmatpush1.bf16.msra.mxu0 %v856
        %955 = vmatprep.subr.bf16.mxu0 0
        %956 = vmatpush1.bf16.msra.mxu0 %v857
        %957 = vmatprep.subr.bf16.mxu0 0
        %958 = vmatpush1.bf16.msra.mxu0 %v858
        %959 = vmatprep.subr.bf16.mxu0 0
        %960 = vmatpush1.bf16.msra.mxu0 %v859
        %961 = vmatprep.subr.bf16.mxu0 0
        %962 = vmatpush1.bf16.msra.mxu0 %v860
        %963 = vmatprep.subr.bf16.mxu0 0
        %964 = vmatpush1.bf16.msra.mxu0 %v861
        %965 = vmatprep.subr.bf16.mxu0 0
        %966 = vmatpush1.bf16.msra.mxu0 %v862
        %967 = vmatprep.mubr.bf16.mxu0 %v631
        %968 = vmatmul.mubr.bf16.gmra.mrb[0].mxu0 %v630
        %v969 = vpop.f32.mrb[0].mxu0
        %v970 = vadd.f32 %v930, %v969
        %v971 = vpop.f32.mrb[0].mxu0
        %v972 = vpop.f32.mrb[0].mxu0
        %v973 = vpop.f32.mrb[0].mxu0
        %974 = vdwg.mxu0
        %v975 = vadd.f32 %v326, %v970
        %v976 = vld [vmem:[#allocation7] sm:$0x1]
        %v977 = vld [vmem:[#allocation8] sm:$0x1]
        %978 = vadd.xlane.f32.xlu0 %v975
        %v979 = vpop.xlane.xlu0 %978
        %v980 = vrcp.pop 128.0
        %v981 = vmul.f32 %v979, %v980
        %v982 = vsub.f32 %v975, %v981
        %v983 = vmul.f32 %v982, %v982
        %984 = vadd.xlane.f32.xlu0 %v983
        %v985 = vpop.xlane.xlu0 %984
        %v986 = vmul.f32 %v985, %v980
        %v987 = vadd.f32 %v986, 1e-05
        %v988 = vrsqrt.pop %v987
        %v989 = vmul.f32 %v982, %v988
        %v991 = vlaneseq
        %v992 = vshrl.u32 %v991, 7
        %v993 = vsub.s32 0, %v992
        %v994 = vrot.slane %v976, %v993
        %v996 = vmul.f32 %v989, %v994
        %v998 = vlaneseq
        %v999 = vshrl.u32 %v998, 7
        %v1000 = vsub.s32 0, %v999
        %v1001 = vrot.slane %v977, %v1000
        %v1003 = vadd.f32 %v996, %v1001
        %1004 = vst [vmem:[%s320] sm:$0xff] %v1003
        %s1005 = sand.u32 %s184, 1
        %s1006 = scalar_lea.sflag [#allocation4], %s1005
        %s1007 = sand.u32 %s184, 1
        %s1008 = smul.addr %s1007, 8
        %s1009 = scalar_lea.vmem [#allocation10], %s1008
        // Predicated region
        $region65: #{decoder_layer_forward.5} parent=47 // pred_check
          %p1010 = pneg %p194
        $region66: #{decoder_layer_forward.5} parent=47 // pred_check_branch
          %1012 = sbr.rel (%p1010) target = $region68
        $region67: #{decoder_layer_forward.5} parent=47 // pred_region
          %s1014 = ssub.s32 128, 128
          %1015 = vsyncadd %s1006, %s1014
          %s1016 = smul.addr %s24, 128
          %s1017 = scalar_lea.hbm %s7, %s1016
          %s1019 = sshll.u32 %s1009, 4
          %s1020 = int_to_ptr.vmem [resolvable:$true] %s1019
          %1022 = dma.vmem_to_hbm [thread:$0]  %s1020, 128, %s1017, %s1006
        $region68: #{decoder_layer_forward.5} parent=47 // pred_fallthru
          _
      $region48: #{decoder_layer_forward.5} parent=5 // pred_fallthru
        _
      %p1023 = scmp.le.s32.totalorder 2, %s19
      // Predicated region
      $region69: #{decoder_layer_forward.5} parent=5 // pred_check
        %p1024 = pneg %p1023
      $region70: #{decoder_layer_forward.5} parent=5 // pred_check_branch
        %1026 = sbr.rel (%p1024) target = $region72
      $region71: #{decoder_layer_forward.5} parent=5 // pred_region
        %s1027 = ssub.s32 %s19, 2
        // Predicated region
        $region73: #{decoder_layer_forward.5} parent=71 // pred_check
          %p1028 = pneg %p200
        $region74: #{decoder_layer_forward.5} parent=71 // pred_check_branch
          %1030 = sbr.rel (%p1028) target = $region76
        $region75: #{decoder_layer_forward.5} parent=71 // pred_region
          %s1031 = sand.u32 %s185, 1
          %s1032 = scalar_lea.sflag [#allocation4], %s1031
          %s1033 = sand.u32 %s185, 1
          %s1034 = smul.addr %s1033, 8
          %s1035 = scalar_lea.vmem [#allocation10], %s1034
          %1036 = dma.done %s1032, 128
        $region76: #{decoder_layer_forward.5} parent=71 // pred_fallthru
          _
      $region72: #{decoder_layer_forward.5} parent=5 // pred_fallthru
        _
    $region6: #{decoder_layer_forward.5} parent=1 // loop_footer
      %s23 = sadd.s32 1, %s19
    $region7: #{decoder_layer_forward.5} parent=1 // loop_footer_branch
      %18 = sbr.rel target = $region3
    $region8: #{decoder_layer_forward.5} parent=1 // loop_exit
      _
    %1037 = vsyncpa [#allocation3], 1
    %s1038 = scalar_lea.sflag [#allocation3], 1
    %1039 = vsyncpa %s1038, 1
    %1040 = vsyncpa [#allocation6], 1
    %1041 = vsyncpa [#allocation9], 1
    %1042 = vsyncpa [#allocation4], 1
    %s1043 = scalar_lea.sflag [#allocation4], 1
    %1044 = vsyncpa %s1043, 1

// kernel: decoder_layer_forward.3
$region0: #{decoder_layer_forward.3}
  #allocation0 [shape = 'u32[]', space=smem, size = 0x4, offset = 0x4, fixed_abs, tag = 'smem constant byte address 0x4 - core index']
  #allocation1 [shape = 'u32[144,128]{1,0:T(1,128)}', space=vmem, size = 0x12000, scoped, tag = 'internal scratch']
  %s0 = inlined_call_operand.vmem [shape: f32[2,8,128], index: 0, kind: input, shape index: {}, may-alias: {0,1}]
  %s1 = inlined_call_operand.vmem [shape: f32[2,8,128], index: 1, kind: input, shape index: {}, may-alias: {0,1}]
  %s2 = inlined_call_operand.vmem [shape: s32[2,8,8], index: 2, kind: input, shape index: {}]
  %s3 = inlined_call_operand.vmem [shape: bf16[128,128], index: 3, kind: input, shape index: {}]
  %s4 = inlined_call_operand.vmem [shape: f32[1,128], index: 4, kind: input, shape index: {}]
  %s5 = inlined_call_operand.hbm [shape: bf16[128,256], index: 5, kind: input, shape index: {}]
  %s6 = inlined_call_operand.vmem [shape: f32[1,256], index: 6, kind: input, shape index: {}]
  %s7 = inlined_call_operand.hbm [shape: bf16[128,128], index: 7, kind: input, shape index: {}]
  %s8 = inlined_call_operand.vmem [shape: f32[1,128], index: 8, kind: input, shape index: {}]
  %s9 = inlined_call_operand.vmem [shape: f32[1,128], index: 9, kind: input, shape index: {}]
  %s10 = inlined_call_operand.vmem [shape: f32[1,128], index: 10, kind: input, shape index: {}]
  %s11 = inlined_call_operand.vmem [shape: f32[2,8,128], index: 11, kind: output, shape index: {}]
  %s12 = sld [smem:[#allocation0]]
  $region85: #{decoder_layer_forward.3} parent=0
    _
  %s14 = ssub.s32 1, %s12
  %s15 = scalar_select 0, %s14, %s12
  $region1: #{decoder_layer_forward.3} parent=0
    #allocation2 [shape = 'u8[65536]{0}', space=vmem, size = 0x10000, scoped, tag = 'input window, operand 5, single buffered']
    #allocation3 [shape = 's32[2]{0}', space=sflag, size = 0x8, scoped, tag = 'scoped memory for decoder_layer_forward.3']
    #allocation4 [shape = 'u8[32768]{0}', space=vmem, size = 0x8000, scoped, tag = 'input window, operand 7, single buffered']
    #allocation5 [shape = 's32[1]{0}', space=sflag, size = 0x4, scoped, tag = 'scoped memory for decoder_layer_forward.3']
    %16 = vsyncpa [#allocation3], 0
    %17 = vsyncpa [#allocation5], 0
    loop: start=0, step=1, limit=4
    $region2: #{decoder_layer_forward.3} parent=1 // loop_pre_header
      _
    $region3: #{decoder_layer_forward.3} parent=1 // loop_header
      %s19 = sphi 0, %s23
      %p20 = scmp.ge.s32.totalorder %s19, 4
      %s29 = sphi 0, %s31
      %s32 = sphi 0, %s29
      %s33 = sphi 0, %s32
      %s49 = sphi 0, %s33
      %s55 = sphi 0, %s57
      %s58 = sphi 0, %s55
      %s59 = sphi 0, %s58
      %s75 = sphi 0, %s59
      %s81 = sphi 0, %s83
      %s84 = sphi 0, %s81
      %s85 = sphi 0, %s84
      %s101 = sphi 0, %s85
      %s105 = sphi 0, %s105
      %s107 = sphi 0, %s105
      %s108 = sphi 0, %s107
      %s122 = sphi 0, %s108
      %s126 = sphi 0, %s126
      %s128 = sphi 0, %s126
      %s129 = sphi 0, %s128
      %s143 = sphi 0, %s129
      %s147 = sphi 0, %s147
      %s149 = sphi 0, %s147
      %s150 = sphi 0, %s149
      %s164 = sphi 0, %s150
      %s168 = sphi 0, %s168
      %s170 = sphi 0, %s168
      %s171 = sphi 0, %s170
      %s185 = sphi 0, %s171
      %s189 = sphi 0, %s189
      %s191 = sphi 0, %s189
      %s192 = sphi 0, %s191
      %s206 = sphi 0, %s192
      %s210 = sphi 0, %s210
      %s212 = sphi 0, %s210
      %s213 = sphi 0, %s212
      %s227 = sphi 0, %s213
      %s231 = sphi 0, %s231
      %s233 = sphi 0, %s231
      %s234 = sphi 0, %s233
      %s248 = sphi 0, %s234
      %s252 = sphi 0, %s252
      %s254 = sphi 0, %s252
      %s255 = sphi 0, %s254
      %s269 = sphi 0, %s255
      %s275 = sphi 0, %s277
      %s278 = sphi 0, %s275
      %s279 = sphi 0, %s278
      %s295 = sphi 0, %s279
    $region4: #{decoder_layer_forward.3} parent=1 // loop_header_branch
      %22 = sbr.rel (%p20) target = $region8
    $region5: #{decoder_layer_forward.3} parent=1 // loop_body
      %s24 = ssub.s32 %s19, 1
      %s25 = ssub.s32 %s19, 2
      %s26 = sadd.s32 %s19, 1
      %s27 = ssub.s32 %s19, %s26
      %p28 = scmp.eq.s32.totalorder %s27, 0
      %s30 = sadd.s32 %s29, 1
      %s31 = scalar_select %p28, %s29, %s30
      %p34 = pneg %p28
      %p35 = scmp.eq.s32.totalorder %s19, 1
      %p36 = por %p34, %p35
      %p37 = scmp.ne.s32.totalorder %s29, %s32
      %p38 = scmp.eq.s32.totalorder %s19, 0
      %p39 = por %p37, %p38
      %p40 = scmp.ne.s32.totalorder %s29, %s32
      %p41 = scmp.eq.s32.totalorder %s24, 1
      %p42 = por %p40, %p41
      %p43 = scmp.ne.s32.totalorder %s32, %s33
      %p44 = scmp.eq.s32.totalorder %s24, 0
      %p45 = por %p43, %p44
      %p46 = scmp.ne.s32.totalorder %s32, %s33
      %p47 = scmp.eq.s32.totalorder %s25, 1
      %p48 = por %p46, %p47
      %p50 = scmp.ne.s32.totalorder %s33, %s49
      %p51 = scmp.eq.s32.totalorder %s25, 0
      %p52 = por %p50, %p51
      %s53 = ssub.s32 %s19, %s26
      %p54 = scmp.eq.s32.totalorder %s53, 0
      %s56 = sadd.s32 %s55, 1
      %s57 = scalar_select %p54, %s55, %s56
      %p60 = pneg %p54
      %p61 = scmp.eq.s32.totalorder %s19, 1
      %p62 = por %p60, %p61
      %p63 = scmp.ne.s32.totalorder %s55, %s58
      %p64 = scmp.eq.s32.totalorder %s19, 0
      %p65 = por %p63, %p64
      %p66 = scmp.ne.s32.totalorder %s55, %s58
      %p67 = scmp.eq.s32.totalorder %s24, 1
      %p68 = por %p66, %p67
      %p69 = scmp.ne.s32.totalorder %s58, %s59
      %p70 = scmp.eq.s32.totalorder %s24, 0
      %p71 = por %p69, %p70
      %p72 = scmp.ne.s32.totalorder %s58, %s59
      %p73 = scmp.eq.s32.totalorder %s25, 1
      %p74 = por %p72, %p73
      %p76 = scmp.ne.s32.totalorder %s59, %s75
      %p77 = scmp.eq.s32.totalorder %s25, 0
      %p78 = por %p76, %p77
      %s79 = ssub.s32 %s19, %s26
      %p80 = scmp.eq.s32.totalorder %s79, 0
      %s82 = sadd.s32 %s81, 1
      %s83 = scalar_select %p80, %s81, %s82
      %p86 = pneg %p80
      %p87 = scmp.eq.s32.totalorder %s19, 1
      %p88 = por %p86, %p87
      %p89 = scmp.ne.s32.totalorder %s81, %s84
      %p90 = scmp.eq.s32.totalorder %s19, 0
      %p91 = por %p89, %p90
      %p92 = scmp.ne.s32.totalorder %s81, %s84
      %p93 = scmp.eq.s32.totalorder %s24, 1
      %p94 = por %p92, %p93
      %p95 = scmp.ne.s32.totalorder %s84, %s85
      %p96 = scmp.eq.s32.totalorder %s24, 0
      %p97 = por %p95, %p96
      %p98 = scmp.ne.s32.totalorder %s84, %s85
      %p99 = scmp.eq.s32.totalorder %s25, 1
      %p100 = por %p98, %p99
      %p102 = scmp.ne.s32.totalorder %s85, %s101
      %p103 = scmp.eq.s32.totalorder %s25, 0
      %p104 = por %p102, %p103
      %s106 = sadd.s32 %s105, 1
      %p109 = scmp.eq.s32.totalorder %s19, 1
      %p110 = scmp.ne.s32.totalorder %s105, %s107
      %p111 = scmp.eq.s32.totalorder %s19, 0
      %p112 = por %p110, %p111
      %p113 = scmp.ne.s32.totalorder %s105, %s107
      %p114 = scmp.eq.s32.totalorder %s24, 1
      %p115 = por %p113, %p114
      %p116 = scmp.ne.s32.totalorder %s107, %s108
      %p117 = scmp.eq.s32.totalorder %s24, 0
      %p118 = por %p116, %p117
      %p119 = scmp.ne.s32.totalorder %s107, %s108
      %p120 = scmp.eq.s32.totalorder %s25, 1
      %p121 = por %p119, %p120
      %p123 = scmp.ne.s32.totalorder %s108, %s122
      %p124 = scmp.eq.s32.totalorder %s25, 0
      %p125 = por %p123, %p124
      %s127 = sadd.s32 %s126, 1
      %p130 = scmp.eq.s32.totalorder %s19, 1
      %p131 = scmp.ne.s32.totalorder %s126, %s128
      %p132 = scmp.eq.s32.totalorder %s19, 0
      %p133 = por %p131, %p132
      %p134 = scmp.ne.s32.totalorder %s126, %s128
      %p135 = scmp.eq.s32.totalorder %s24, 1
      %p136 = por %p134, %p135
      %p137 = scmp.ne.s32.totalorder %s128, %s129
      %p138 = scmp.eq.s32.totalorder %s24, 0
      %p139 = por %p137, %p138
      %p140 = scmp.ne.s32.totalorder %s128, %s129
      %p141 = scmp.eq.s32.totalorder %s25, 1
      %p142 = por %p140, %p141
      %p144 = scmp.ne.s32.totalorder %s129, %s143
      %p145 = scmp.eq.s32.totalorder %s25, 0
      %p146 = por %p144, %p145
      %s148 = sadd.s32 %s147, 1
      %p151 = scmp.eq.s32.totalorder %s19, 1
      %p152 = scmp.ne.s32.totalorder %s147, %s149
      %p153 = scmp.eq.s32.totalorder %s19, 0
      %p154 = por %p152, %p153
      %p155 = scmp.ne.s32.totalorder %s147, %s149
      %p156 = scmp.eq.s32.totalorder %s24, 1
      %p157 = por %p155, %p156
      %p158 = scmp.ne.s32.totalorder %s149, %s150
      %p159 = scmp.eq.s32.totalorder %s24, 0
      %p160 = por %p158, %p159
      %p161 = scmp.ne.s32.totalorder %s149, %s150
      %p162 = scmp.eq.s32.totalorder %s25, 1
      %p163 = por %p161, %p162
      %p165 = scmp.ne.s32.totalorder %s150, %s164
      %p166 = scmp.eq.s32.totalorder %s25, 0
      %p167 = por %p165, %p166
      %s169 = sadd.s32 %s168, 1
      %p172 = scmp.eq.s32.totalorder %s19, 1
      %p173 = scmp.ne.s32.totalorder %s168, %s170
      %p174 = scmp.eq.s32.totalorder %s19, 0
      %p175 = por %p173, %p174
      %p176 = scmp.ne.s32.totalorder %s168, %s170
      %p177 = scmp.eq.s32.totalorder %s24, 1
      %p178 = por %p176, %p177
      %p179 = scmp.ne.s32.totalorder %s170, %s171
      %p180 = scmp.eq.s32.totalorder %s24, 0
      %p181 = por %p179, %p180
      %p182 = scmp.ne.s32.totalorder %s170, %s171
      %p183 = scmp.eq.s32.totalorder %s25, 1
      %p184 = por %p182, %p183
      %p186 = scmp.ne.s32.totalorder %s171, %s185
      %p187 = scmp.eq.s32.totalorder %s25, 0
      %p188 = por %p186, %p187
      %s190 = sadd.s32 %s189, 1
      %p193 = scmp.eq.s32.totalorder %s19, 1
      %p194 = scmp.ne.s32.totalorder %s189, %s191
      %p195 = scmp.eq.s32.totalorder %s19, 0
      %p196 = por %p194, %p195
      %p197 = scmp.ne.s32.totalorder %s189, %s191
      %p198 = scmp.eq.s32.totalorder %s24, 1
      %p199 = por %p197, %p198
      %p200 = scmp.ne.s32.totalorder %s191, %s192
      %p201 = scmp.eq.s32.totalorder %s24, 0
      %p202 = por %p200, %p201
      %p203 = scmp.ne.s32.totalorder %s191, %s192
      %p204 = scmp.eq.s32.totalorder %s25, 1
      %p205 = por %p203, %p204
      %p207 = scmp.ne.s32.totalorder %s192, %s206
      %p208 = scmp.eq.s32.totalorder %s25, 0
      %p209 = por %p207, %p208
      %s211 = sadd.s32 %s210, 1
      %p214 = scmp.eq.s32.totalorder %s19, 1
      %p215 = scmp.ne.s32.totalorder %s210, %s212
      %p216 = scmp.eq.s32.totalorder %s19, 0
      %p217 = por %p215, %p216
      %p218 = scmp.ne.s32.totalorder %s210, %s212
      %p219 = scmp.eq.s32.totalorder %s24, 1
      %p220 = por %p218, %p219
      %p221 = scmp.ne.s32.totalorder %s212, %s213
      %p222 = scmp.eq.s32.totalorder %s24, 0
      %p223 = por %p221, %p222
      %p224 = scmp.ne.s32.totalorder %s212, %s213
      %p225 = scmp.eq.s32.totalorder %s25, 1
      %p226 = por %p224, %p225
      %p228 = scmp.ne.s32.totalorder %s213, %s227
      %p229 = scmp.eq.s32.totalorder %s25, 0
      %p230 = por %p228, %p229
      %s232 = sadd.s32 %s231, 1
      %p235 = scmp.eq.s32.totalorder %s19, 1
      %p236 = scmp.ne.s32.totalorder %s231, %s233
      %p237 = scmp.eq.s32.totalorder %s19, 0
      %p238 = por %p236, %p237
      %p239 = scmp.ne.s32.totalorder %s231, %s233
      %p240 = scmp.eq.s32.totalorder %s24, 1
      %p241 = por %p239, %p240
      %p242 = scmp.ne.s32.totalorder %s233, %s234
      %p243 = scmp.eq.s32.totalorder %s24, 0
      %p244 = por %p242, %p243
      %p245 = scmp.ne.s32.totalorder %s233, %s234
      %p246 = scmp.eq.s32.totalorder %s25, 1
      %p247 = por %p245, %p246
      %p249 = scmp.ne.s32.totalorder %s234, %s248
      %p250 = scmp.eq.s32.totalorder %s25, 0
      %p251 = por %p249, %p250
      %s253 = sadd.s32 %s252, 1
      %p256 = scmp.eq.s32.totalorder %s19, 1
      %p257 = scmp.ne.s32.totalorder %s252, %s254
      %p258 = scmp.eq.s32.totalorder %s19, 0
      %p259 = por %p257, %p258
      %p260 = scmp.ne.s32.totalorder %s252, %s254
      %p261 = scmp.eq.s32.totalorder %s24, 1
      %p262 = por %p260, %p261
      %p263 = scmp.ne.s32.totalorder %s254, %s255
      %p264 = scmp.eq.s32.totalorder %s24, 0
      %p265 = por %p263, %p264
      %p266 = scmp.ne.s32.totalorder %s254, %s255
      %p267 = scmp.eq.s32.totalorder %s25, 1
      %p268 = por %p266, %p267
      %p270 = scmp.ne.s32.totalorder %s255, %s269
      %p271 = scmp.eq.s32.totalorder %s25, 0
      %p272 = por %p270, %p271
      %s273 = ssub.s32 %s19, %s26
      %p274 = scmp.eq.s32.totalorder %s273, 0
      %s276 = sadd.s32 %s275, 1
      %s277 = scalar_select %p274, %s275, %s276
      %p280 = pneg %p274
      %p281 = scmp.eq.s32.totalorder %s19, 1
      %p282 = por %p280, %p281
      %p283 = scmp.ne.s32.totalorder %s275, %s278
      %p284 = scmp.eq.s32.totalorder %s19, 0
      %p285 = por %p283, %p284
      %p286 = scmp.ne.s32.totalorder %s275, %s278
      %p287 = scmp.eq.s32.totalorder %s24, 1
      %p288 = por %p286, %p287
      %p289 = scmp.ne.s32.totalorder %s278, %s279
      %p290 = scmp.eq.s32.totalorder %s24, 0
      %p291 = por %p289, %p290
      %p292 = scmp.ne.s32.totalorder %s278, %s279
      %p293 = scmp.eq.s32.totalorder %s25, 1
      %p294 = por %p292, %p293
      %p296 = scmp.ne.s32.totalorder %s279, %s295
      %p297 = scmp.eq.s32.totalorder %s25, 0
      %p298 = por %p296, %p297
      %p299 = scmp.le.s32.totalorder 1, %s19
      %p300 = scmp.lt.s32.totalorder %s19, 3
      %p301 = pnand %p299, %p300
      %p302 = pneg %p301
      // Predicated region
      $region9: #{decoder_layer_forward.3} parent=5 // pred_check
        _
      $region10: #{decoder_layer_forward.3} parent=5 // pred_check_branch
        %304 = sbr.rel (%p301) target = $region12
      $region11: #{decoder_layer_forward.3} parent=5 // pred_region
        %s305 = ssub.s32 %s19, 1
        // Predicated region
        $region13: #{decoder_layer_forward.3} parent=11 // pred_check
          %p306 = pneg %p118
        $region14: #{decoder_layer_forward.3} parent=11 // pred_check_branch
          %308 = sbr.rel (%p306) target = $region16
        $region15: #{decoder_layer_forward.3} parent=11 // pred_region
          _
        $region16: #{decoder_layer_forward.3} parent=11 // pred_fallthru
          _
        // Predicated region
        $region17: #{decoder_layer_forward.3} parent=11 // pred_check
          %p309 = pneg %p139
        $region18: #{decoder_layer_forward.3} parent=11 // pred_check_branch
          %311 = sbr.rel (%p309) target = $region20
        $region19: #{decoder_layer_forward.3} parent=11 // pred_region
          _
        $region20: #{decoder_layer_forward.3} parent=11 // pred_fallthru
          _
        // Predicated region
        $region21: #{decoder_layer_forward.3} parent=11 // pred_check
          %p312 = pneg %p160
        $region22: #{decoder_layer_forward.3} parent=11 // pred_check_branch
          %314 = sbr.rel (%p312) target = $region24
        $region23: #{decoder_layer_forward.3} parent=11 // pred_region
          %s316 = ssub.s32 2048, 2048
          %317 = vsyncadd [#allocation3], %s316
          %s318 = sshll.u32 [#allocation2], 4
          %s319 = int_to_ptr.vmem [resolvable:$true] %s318
          %324 = dma.hbm_to_vmem [thread:$0]  %s5, 2048, %s319, [#allocation3], 128, 128, 8
        $region24: #{decoder_layer_forward.3} parent=11 // pred_fallthru
          _
        // Predicated region
        $region25: #{decoder_layer_forward.3} parent=11 // pred_check
          %p325 = pneg %p181
        $region26: #{decoder_layer_forward.3} parent=11 // pred_check_branch
          %327 = sbr.rel (%p325) target = $region28
        $region27: #{decoder_layer_forward.3} parent=11 // pred_region
          _
        $region28: #{decoder_layer_forward.3} parent=11 // pred_fallthru
          _
        // Predicated region
        $region29: #{decoder_layer_forward.3} parent=11 // pred_check
          %p328 = pneg %p202
        $region30: #{decoder_layer_forward.3} parent=11 // pred_check_branch
          %330 = sbr.rel (%p328) target = $region32
        $region31: #{decoder_layer_forward.3} parent=11 // pred_region
          %s332 = ssub.s32 1024, 1024
          %333 = vsyncadd [#allocation5], %s332
          %s334 = sshll.u32 [#allocation4], 4
          %s335 = int_to_ptr.vmem [resolvable:$true] %s334
          %340 = dma.hbm_to_vmem [thread:$0]  %s7, 1024, %s335, [#allocation5], 64, 64, 4
        $region32: #{decoder_layer_forward.3} parent=11 // pred_fallthru
          _
        // Predicated region
        $region33: #{decoder_layer_forward.3} parent=11 // pred_check
          %p341 = pneg %p223
        $region34: #{decoder_layer_forward.3} parent=11 // pred_check_branch
          %343 = sbr.rel (%p341) target = $region36
        $region35: #{decoder_layer_forward.3} parent=11 // pred_region
          _
        $region36: #{decoder_layer_forward.3} parent=11 // pred_fallthru
          _
        // Predicated region
        $region37: #{decoder_layer_forward.3} parent=11 // pred_check
          %p344 = pneg %p244
        $region38: #{decoder_layer_forward.3} parent=11 // pred_check_branch
          %346 = sbr.rel (%p344) target = $region40
        $region39: #{decoder_layer_forward.3} parent=11 // pred_region
          _
        $region40: #{decoder_layer_forward.3} parent=11 // pred_fallthru
          _
        // Predicated region
        $region41: #{decoder_layer_forward.3} parent=11 // pred_check
          %p347 = pneg %p265
        $region42: #{decoder_layer_forward.3} parent=11 // pred_check_branch
          %349 = sbr.rel (%p347) target = $region44
        $region43: #{decoder_layer_forward.3} parent=11 // pred_region
          _
        $region44: #{decoder_layer_forward.3} parent=11 // pred_fallthru
          _
      $region12: #{decoder_layer_forward.3} parent=5 // pred_fallthru
        _
      %p350 = scmp.lt.s32.totalorder %s19, 2
      // Predicated region
      $region45: #{decoder_layer_forward.3} parent=5 // pred_check
        %p351 = pneg %p350
      $region46: #{decoder_layer_forward.3} parent=5 // pred_check_branch
        %353 = sbr.rel (%p351) target = $region48
      $region47: #{decoder_layer_forward.3} parent=5 // pred_region
        // Predicated region
        $region49: #{decoder_layer_forward.3} parent=47 // pred_check
          %p354 = pneg %p39
        $region50: #{decoder_layer_forward.3} parent=47 // pred_check_branch
          %356 = sbr.rel (%p354) target = $region52
        $region51: #{decoder_layer_forward.3} parent=47 // pred_region
          %p357 = scmp.lt.s32.totalorder %s19, 1
          %s358 = scalar_select %p357, %s19, 1
          %s359 = smul.addr %s358, 8
          %s360 = scalar_lea.vmem %s0, %s359
        $region52: #{decoder_layer_forward.3} parent=47 // pred_fallthru
          _
        // Predicated region
        $region53: #{decoder_layer_forward.3} parent=47 // pred_check
          %p361 = pneg %p65
        $region54: #{decoder_layer_forward.3} parent=47 // pred_check_branch
          %363 = sbr.rel (%p361) target = $region56
        $region55: #{decoder_layer_forward.3} parent=47 // pred_region
          %p364 = scmp.lt.s32.totalorder %s19, 1
          %s365 = scalar_select %p364, %s19, 1
          %s366 = smul.addr %s365, 8
          %s367 = scalar_lea.vmem %s1, %s366
        $region56: #{decoder_layer_forward.3} parent=47 // pred_fallthru
          _
        // Predicated region
        $region57: #{decoder_layer_forward.3} parent=47 // pred_check
          %p368 = pneg %p91
        $region58: #{decoder_layer_forward.3} parent=47 // pred_check_branch
          %370 = sbr.rel (%p368) target = $region60
        $region59: #{decoder_layer_forward.3} parent=47 // pred_region
          %p371 = scmp.lt.s32.totalorder %s19, 1
          %s372 = scalar_select %p371, %s19, 1
          %s373 = smul.addr %s372, 8
          %s374 = scalar_lea.vmem %s2, %s373
        $region60: #{decoder_layer_forward.3} parent=47 // pred_fallthru
          _
      $region48: #{decoder_layer_forward.3} parent=5 // pred_fallthru
        _
      %p375 = scmp.le.s32.totalorder 1, %s19
      %p376 = scmp.lt.s32.totalorder %s19, 3
      %p377 = pnand %p375, %p376
      %p378 = pneg %p377
      // Predicated region
      $region61: #{decoder_layer_forward.3} parent=5 // pred_check
        _
      $region62: #{decoder_layer_forward.3} parent=5 // pred_check_branch
        %380 = sbr.rel (%p377) target = $region64
      $region63: #{decoder_layer_forward.3} parent=5 // pred_region
        %s381 = ssub.s32 %s19, 1
        // Predicated region
        $region65: #{decoder_layer_forward.3} parent=63 // pred_check
          %p382 = pneg %p160
        $region66: #{decoder_layer_forward.3} parent=63 // pred_check_branch
          %384 = sbr.rel (%p382) target = $region68
        $region67: #{decoder_layer_forward.3} parent=63 // pred_region
          %385 = dma.done [#allocation3], 2048
        $region68: #{decoder_layer_forward.3} parent=63 // pred_fallthru
          _
        // Predicated region
        $region69: #{decoder_layer_forward.3} parent=63 // pred_check
          %p386 = pneg %p202
        $region70: #{decoder_layer_forward.3} parent=63 // pred_check_branch
          %388 = sbr.rel (%p386) target = $region72
        $region71: #{decoder_layer_forward.3} parent=63 // pred_region
          %389 = dma.done [#allocation5], 1024
        $region72: #{decoder_layer_forward.3} parent=63 // pred_fallthru
          _
        %p390 = scmp.lt.s32.totalorder %s24, 1
        %s391 = scalar_select %p390, %s24, 1
        %s392 = smul.addr %s391, 8
        %s393 = scalar_lea.vmem %s0, %s392
        %p394 = pneg %p45
        %p395 = pneg %p42
        %p396 = scmp.lt.s32.totalorder %s24, 1
        %s397 = scalar_select %p396, %s24, 1
        %s398 = smul.addr %s397, 8
        %s399 = scalar_lea.vmem %s1, %s398
        %p400 = pneg %p71
        %p401 = pneg %p68
        %p402 = scmp.lt.s32.totalorder %s24, 1
        %s403 = scalar_select %p402, %s24, 1
        %s404 = smul.addr %s403, 8
        %s405 = scalar_lea.vmem %s2, %s404
        %p406 = pneg %p97
        %p407 = pneg %p94
        %p408 = pneg %p118
        %p409 = pneg %p115
        %p410 = pneg %p139
        %p411 = pneg %p136
        %p412 = pneg %p160
        %p413 = pneg %p157
        %p414 = pneg %p181
        %p415 = pneg %p178
        %p416 = pneg %p202
        %p417 = pneg %p199
        %p418 = pneg %p223
        %p419 = pneg %p220
        %p420 = pneg %p244
        %p421 = pneg %p241
        %p422 = pneg %p265
        %p423 = pneg %p262
        %p424 = pneg %p291
        %p425 = pneg %p288
        %p426 = scmp.lt.s32.totalorder %s24, 1
        %s427 = scalar_select %p426, %s24, 1
        %s428 = smul.addr %s427, 8
        %s429 = scalar_lea.vmem %s11, %s428
        %p430 = scmp.lt.s32.totalorder %s24, 1
        %s431 = scalar_select %p430, %s24, 1
        %s432 = smul.addr %s431, 8
        %s433 = scalar_lea.vmem %s0, %s432
        %p434 = scmp.lt.s32.totalorder %s24, 1
        %s435 = scalar_select %p434, %s24, 1
        %s436 = smul.addr %s435, 8
        %s437 = scalar_lea.vmem %s1, %s436
        %p438 = scmp.lt.s32.totalorder %s24, 1
        %s439 = scalar_select %p438, %s24, 1
        %s440 = smul.addr %s439, 8
        %s441 = scalar_lea.vmem %s2, %s440
        %p442 = scmp.lt.s32.totalorder %s24, 1
        %s443 = scalar_select %p442, %s24, 1
        %s444 = smul.addr %s443, 8
        %s445 = scalar_lea.vmem %s11, %s444
        %v447 = vld [vmem:[%s433] sm:$0xff]
        %v448 = vld [vmem:[%s437] sm:$0xff]
        %v449 = vld [vmem:[%s441] sm:$0xff]
        %vm450 = vcmp.eq.s32.totalorder %v449, 0
        %v451 = vpack.c.bf16 %v447, %v447
        %v452 = vld [vmem:[%s3] sm:$0xf]
        %v453 = vld [vmem:[%s3 + $0x4] sm:$0xf]
        %v454 = vld [vmem:[%s3 + $0x8] sm:$0xf]
        %v455 = vld [vmem:[%s3 + $0xc] sm:$0xf]
        %v456 = vld [vmem:[%s3 + $0x10] sm:$0xf]
        %v457 = vld [vmem:[%s3 + $0x14] sm:$0xf]
        %v458 = vld [vmem:[%s3 + $0x18] sm:$0xf]
        %v459 = vld [vmem:[%s3 + $0x1c] sm:$0xf]
        %v460 = vld [vmem:[%s3 + $0x20] sm:$0xf]
        %v461 = vld [vmem:[%s3 + $0x24] sm:$0xf]
        %v462 = vld [vmem:[%s3 + $0x28] sm:$0xf]
        %v463 = vld [vmem:[%s3 + $0x2c] sm:$0xf]
        %v464 = vld [vmem:[%s3 + $0x30] sm:$0xf]
        %v465 = vld [vmem:[%s3 + $0x34] sm:$0xf]
        %v466 = vld [vmem:[%s3 + $0x38] sm:$0xf]
        %v467 = vld [vmem:[%s3 + $0x3c] sm:$0xf]
        %v468 = vld [vmem:[%s4] sm:$0x1]
        %v470 = vlaneseq
        %v471 = vshrl.u32 %v470, 7
        %v472 = vsub.s32 0, %v471
        %v473 = vrot.slane %v468, %v472
        %v491 = vunpack.c.l.b16 %v452
        %v492 = vunpack.c.l.b16 %v453
        %v493 = vunpack.c.l.b16 %v454
        %v494 = vunpack.c.l.b16 %v455
        %v495 = vunpack.c.l.b16 %v456
        %v496 = vunpack.c.l.b16 %v457
        %v497 = vunpack.c.l.b16 %v458
        %v498 = vunpack.c.l.b16 %v459
        %v499 = vunpack.c.l.b16 %v460
        %v500 = vunpack.c.l.b16 %v461
        %v501 = vunpack.c.l.b16 %v462
        %v502 = vunpack.c.l.b16 %v463
        %v503 = vunpack.c.l.b16 %v464
        %v504 = vunpack.c.l.b16 %v465
        %v505 = vunpack.c.l.b16 %v466
        %v506 = vunpack.c.l.b16 %v467
        %v507 = vpack.c.b16 %v492, %v491
        %v508 = vpack.c.b16 %v494, %v493
        %v509 = vpack.c.b16 %v496, %v495
        %v510 = vpack.c.b16 %v498, %v497
        %v511 = vpack.c.b16 %v500, %v499
        %v512 = vpack.c.b16 %v502, %v501
        %v513 = vpack.c.b16 %v504, %v503
        %v514 = vpack.c.b16 %v506, %v505
        %523 = vmatprep.subr.bf16.mxu0 0
        %524 = vmatpush1.bf16.msra.mxu0 %v507
        %525 = vmatprep.subr.bf16.mxu0 0
        %526 = vmatpush1.bf16.msra.mxu0 %v508
        %527 = vmatprep.subr.bf16.mxu0 0
        %528 = vmatpush1.bf16.msra.mxu0 %v509
        %529 = vmatprep.subr.bf16.mxu0 0
        %530 = vmatpush1.bf16.msra.mxu0 %v510
        %531 = vmatprep.subr.bf16.mxu0 0
        %532 = vmatpush1.bf16.msra.mxu0 %v511
        %533 = vmatprep.subr.bf16.mxu0 0
        %534 = vmatpush1.bf16.msra.mxu0 %v512
        %535 = vmatprep.subr.bf16.mxu0 0
        %536 = vmatpush1.bf16.msra.mxu0 %v513
        %537 = vmatprep.subr.bf16.mxu0 0
        %538 = vmatpush1.bf16.msra.mxu0 %v514
        %539 = vmatprep.subr.bf16.mxu0 0
        %540 = vmatpush1.bf16.msra.mxu0 0
        %541 = vmatprep.subr.bf16.mxu0 0
        %542 = vmatpush1.bf16.msra.mxu0 0
        %543 = vmatprep.subr.bf16.mxu0 0
        %544 = vmatpush1.bf16.msra.mxu0 0
        %545 = vmatprep.subr.bf16.mxu0 0
        %546 = vmatpush1.bf16.msra.mxu0 0
        %547 = vmatprep.subr.bf16.mxu0 0
        %548 = vmatpush1.bf16.msra.mxu0 0
        %549 = vmatprep.subr.bf16.mxu0 0
        %550 = vmatpush1.bf16.msra.mxu0 0
        %551 = vmatprep.subr.bf16.mxu0 0
        %552 = vmatpush1.bf16.msra.mxu0 0
        %553 = vmatprep.subr.bf16.mxu0 0
        %554 = vmatpush1.bf16.msra.mxu0 0
        %555 = vmatprep.mubr.bf16.mxu0 0
        %556 = vmatmul.mubr.bf16.gmra.mrb[0].mxu0 %v451
        %v557 = vpop.f32.mrb[0].mxu0
        %v558 = vadd.f32 %v473, %v557
        %v559 = vpop.f32.mrb[0].mxu0
        %v560 = vpop.f32.mrb[0].mxu0
        %v561 = vpop.f32.mrb[0].mxu0
        %562 = vdwg.mxu0
        %v563 = vpack.c.bf16 %v448, %v448
        %v564 = vld [vmem:[#allocation2] sm:$0xff]
        %v565 = vld [vmem:[#allocation2 + $0x8] sm:$0xff]
        %v566 = vld [vmem:[#allocation2 + $0x10] sm:$0xff]
        %v567 = vld [vmem:[#allocation2 + $0x18] sm:$0xff]
        %v568 = vld [vmem:[#allocation2 + $0x20] sm:$0xff]
        %v569 = vld [vmem:[#allocation2 + $0x28] sm:$0xff]
        %v570 = vld [vmem:[#allocation2 + $0x30] sm:$0xff]
        %v571 = vld [vmem:[#allocation2 + $0x38] sm:$0xff]
        %v572 = vld [vmem:[#allocation2 + $0x40] sm:$0xff]
        %v573 = vld [vmem:[#allocation2 + $0x48] sm:$0xff]
        %v574 = vld [vmem:[#allocation2 + $0x50] sm:$0xff]
        %v575 = vld [vmem:[#allocation2 + $0x58] sm:$0xff]
        %v576 = vld [vmem:[#allocation2 + $0x60] sm:$0xff]
        %v577 = vld [vmem:[#allocation2 + $0x68] sm:$0xff]
        %v578 = vld [vmem:[#allocation2 + $0x70] sm:$0xff]
        %v579 = vld [vmem:[#allocation2 + $0x78] sm:$0xff]
        %v580 = vld [vmem:[%s6] sm:$0x3]
        %v582 = vlaneseq
        %v583 = vshrl.u32 %v582, 7
        %v584 = vsub.s32 0, %v583
        %v585 = vrot.slane %v580, %v584
        %v586 = vlaneseq
        %v587 = vshrl.u32 %v586, 7
        %v588 = vsub.s32 1, %v587
        %v589 = vrot.slane %v580, %v588
        %v608 = vunpack.c.l.b16 %v564
        %v609 = vunpack.c.h.b16 %v564
        %v610 = vunpack.c.l.b16 %v565
        %v611 = vunpack.c.h.b16 %v565
        %v612 = vunpack.c.l.b16 %v566
        %v613 = vunpack.c.h.b16 %v566
        %v614 = vunpack.c.l.b16 %v567
        %v615 = vunpack.c.h.b16 %v567
        %v616 = vunpack.c.l.b16 %v568
        %v617 = vunpack.c.h.b16 %v568
        %v618 = vunpack.c.l.b16 %v569
        %v619 = vunpack.c.h.b16 %v569
        %v620 = vunpack.c.l.b16 %v570
        %v621 = vunpack.c.h.b16 %v570
        %v622 = vunpack.c.l.b16 %v571
        %v623 = vunpack.c.h.b16 %v571
        %v624 = vunpack.c.l.b16 %v572
        %v625 = vunpack.c.h.b16 %v572
        %v626 = vunpack.c.l.b16 %v573
        %v627 = vunpack.c.h.b16 %v573
        %v628 = vunpack.c.l.b16 %v574
        %v629 = vunpack.c.h.b16 %v574
        %v630 = vunpack.c.l.b16 %v575
        %v631 = vunpack.c.h.b16 %v575
        %v632 = vunpack.c.l.b16 %v576
        %v633 = vunpack.c.h.b16 %v576
        %v634 = vunpack.c.l.b16 %v577
        %v635 = vunpack.c.h.b16 %v577
        %v636 = vunpack.c.l.b16 %v578
        %v637 = vunpack.c.h.b16 %v578
        %v638 = vunpack.c.l.b16 %v579
        %v639 = vunpack.c.h.b16 %v579
        %v640 = vpack.c.b16 %v610, %v608
        %v641 = vpack.c.b16 %v611, %v609
        %v642 = vpack.c.b16 %v614, %v612
        %v643 = vpack.c.b16 %v615, %v613
        %v644 = vpack.c.b16 %v618, %v616
        %v645 = vpack.c.b16 %v619, %v617
        %v646 = vpack.c.b16 %v622, %v620
        %v647 = vpack.c.b16 %v623, %v621
        %v648 = vpack.c.b16 %v626, %v624
        %v649 = vpack.c.b16 %v627, %v625
        %v650 = vpack.c.b16 %v630, %v628
        %v651 = vpack.c.b16 %v631, %v629
        %v652 = vpack.c.b16 %v634, %v632
        %v653 = vpack.c.b16 %v635, %v633
        %v654 = vpack.c.b16 %v638, %v636
        %v655 = vpack.c.b16 %v639, %v637
        %672 = vmatprep.subr.bf16.mxu0 %v641
        %673 = vmatpush1.bf16.msra.mxu0 %v640
        %674 = vmatprep.subr.bf16.mxu0 %v643
        %675 = vmatpush1.bf16.msra.mxu0 %v642
        %676 = vmatprep.subr.bf16.mxu0 %v645
        %677 = vmatpush1.bf16.msra.mxu0 %v644
        %678 = vmatprep.subr.bf16.mxu0 %v647
        %679 = vmatpush1.bf16.msra.mxu0 %v646
        %680 = vmatprep.subr.bf16.mxu0 %v649
        %681 = vmatpush1.bf16.msra.mxu0 %v648
        %682 = vmatprep.subr.bf16.mxu0 %v651
        %683 = vmatpush1.bf16.msra.mxu0 %v650
        %684 = vmatprep.subr.bf16.mxu0 %v653
        %685 = vmatpush1.bf16.msra.mxu0 %v652
        %686 = vmatprep.subr.bf16.mxu0 %v655
        %687 = vmatpush1.bf16.msra.mxu0 %v654
        %688 = vmatprep.subr.bf16.mxu0 0
        %689 = vmatpush1.bf16.msra.mxu0 0
        %690 = vmatprep.subr.bf16.mxu0 0
        %691 = vmatpush1.bf16.msra.mxu0 0
        %692 = vmatprep.subr.bf16.mxu0 0
        %693 = vmatpush1.bf16.msra.mxu0 0
        %694 = vmatprep.subr.bf16.mxu0 0
        %695 = vmatpush1.bf16.msra.mxu0 0
        %696 = vmatprep.subr.bf16.mxu0 0
        %697 = vmatpush1.bf16.msra.mxu0 0
        %698 = vmatprep.subr.bf16.mxu0 0
        %699 = vmatpush1.bf16.msra.mxu0 0
        %700 = vmatprep.subr.bf16.mxu0 0
        %701 = vmatpush1.bf16.msra.mxu0 0
        %702 = vmatprep.subr.bf16.mxu0 0
        %703 = vmatpush1.bf16.msra.mxu0 0
        %704 = vmatprep.mubr.bf16.mxu0 0
        %705 = vmatmul.mubr.bf16.gmra.mrb[0].mxu0 %v563
        %v706 = vpop.f32.mrb[0].mxu0
        %v707 = vadd.f32 %v585, %v706
        %v708 = vpop.f32.mrb[0].mxu0
        %v709 = vadd.f32 %v589, %v708
        %v710 = vpop.f32.mrb[0].mxu0
        %v711 = vpop.f32.mrb[0].mxu0
        %712 = vdwg.mxu0
        %v713 = vmul.f32 %v558, 0.25
        %v714 = vpack.c.bf16 %v713, %v713
        %v715 = vpack.c.bf16 %v707, %v707
        %v716 = vpack.c.bf16 %v709, %v709
        %vm717 = vcmask 130048
        %v719 = vsel %vm717, %v714, 0
        %v722 = vsel %vm717, %v715, 0
        %724 = vmatprep.subr.bf16.mxu0 0
        %725 = vmatpush1.bf16.xpose.msra.mxu0 %v722
        %726 = vmatprep.subr.bf16.mxu0 0
        %727 = vmatpush1.bf16.xpose.msra.mxu0 0
        %728 = vmatprep.subr.bf16.mxu0 0
        %729 = vmatpush1.bf16.xpose.msra.mxu0 0
        %730 = vmatprep.subr.bf16.mxu0 0
        %731 = vmatpush1.bf16.xpose.msra.mxu0 0
        %732 = vmatprep.subr.bf16.mxu0 0
        %733 = vmatpush1.bf16.xpose.msra.mxu0 0
        %734 = vmatprep.subr.bf16.mxu0 0
        %735 = vmatpush1.bf16.xpose.msra.mxu0 0
        %736 = vmatprep.subr.bf16.mxu0 0
        %737 = vmatpush1.bf16.xpose.msra.mxu0 0
        %738 = vmatprep.subr.bf16.mxu0 0
        %739 = vmatpush1.bf16.xpose.msra.mxu0 0
        %740 = vmatprep.subr.bf16.mxu0 0
        %741 = vmatpush1.bf16.xpose.msra.mxu0 0
        %742 = vmatprep.subr.bf16.mxu0 0
        %743 = vmatpush1.bf16.xpose.msra.mxu0 0
        %744 = vmatprep.subr.bf16.mxu0 0
        %745 = vmatpush1.bf16.xpose.msra.mxu0 0
        %746 = vmatprep.subr.bf16.mxu0 0
        %747 = vmatpush1.bf16.xpose.msra.mxu0 0
        %748 = vmatprep.subr.bf16.mxu0 0
        %749 = vmatpush1.bf16.xpose.msra.mxu0 0
        %750 = vmatprep.subr.bf16.mxu0 0
        %751 = vmatpush1.bf16.xpose.msra.mxu0 0
        %752 = vmatprep.subr.bf16.mxu0 0
        %753 = vmatpush1.bf16.xpose.msra.mxu0 0
        %754 = vmatprep.subr.bf16.mxu0 0
        %755 = vmatpush1.bf16.xpose.msra.mxu0 0
        %756 = vmatprep.mubr.bf16.mxu0 0
        %757 = vmatmul.mubr.bf16.gmra.mrb[0].mxu0 %v719
        %v758 = vpop.f32.mrb[0].mxu0
        %v759 = vadd.f32 0.0, %v758
        %v760 = vpop.f32.mrb[0].mxu0
        %v761 = vpop.f32.mrb[0].mxu0
        %v762 = vpop.f32.mrb[0].mxu0
        %763 = vdwg.mxu0
        %v764 = vsel %vm450, -1e+09, %v759
        %vm765 = vcmask 64512
        %v766 = vsel %vm765, %v764, -inf
        %767 = vmax.xlane.f32.xlu0 %v766
        %v768 = vpop.xlane.xlu0 %767
        %v769 = vsub.f32 %v764, %v768
        %v770 = vmul.f32 %v769, 1.442695
        %v771 = vpow.pop %v770
        %v772 = vsel %vm765, %v771, 0.0
        %773 = vadd.xlane.f32.xlu0 %v772
        %v774 = vpop.xlane.xlu0 %773
        %v775 = vrcp.pop %v774
        %v776 = vmul.f32 %v771, %v775
        %v777 = vpack.c.bf16 %v776, %v776
        %v779 = vsel %vm765, %v777, 0
        %vm781 = vcmask 1043456
        %v783 = vsel %vm781, %v716, 0
        %785 = vmatprep.subr.bf16.mxu0 0
        %786 = vmatpush1.bf16.msra.mxu0 %v783
        %787 = vmatprep.subr.bf16.mxu0 0
        %788 = vmatpush1.bf16.msra.mxu0 0
        %789 = vmatprep.subr.bf16.mxu0 0
        %790 = vmatpush1.bf16.msra.mxu0 0
        %791 = vmatprep.subr.bf16.mxu0 0
        %792 = vmatpush1.bf16.msra.mxu0 0
        %793 = vmatprep.subr.bf16.mxu0 0
        %794 = vmatpush1.bf16.msra.mxu0 0
        %795 = vmatprep.subr.bf16.mxu0 0
        %796 = vmatpush1.bf16.msra.mxu0 0
        %797 = vmatprep.subr.bf16.mxu0 0
        %798 = vmatpush1.bf16.msra.mxu0 0
        %799 = vmatprep.subr.bf16.mxu0 0
        %800 = vmatpush1.bf16.msra.mxu0 0
        %801 = vmatprep.subr.bf16.mxu0 0
        %802 = vmatpush1.bf16.msra.mxu0 0
        %803 = vmatprep.subr.bf16.mxu0 0
        %804 = vmatpush1.bf16.msra.mxu0 0
        %805 = vmatprep.subr.bf16.mxu0 0
        %806 = vmatpush1.bf16.msra.mxu0 0
        %807 = vmatprep.subr.bf16.mxu0 0
        %808 = vmatpush1.bf16.msra.mxu0 0
        %809 = vmatprep.subr.bf16.mxu0 0
        %810 = vmatpush1.bf16.msra.mxu0 0
        %811 = vmatprep.subr.bf16.mxu0 0
        %812 = vmatpush1.bf16.msra.mxu0 0
        %813 = vmatprep.subr.bf16.mxu0 0
        %814 = vmatpush1.bf16.msra.mxu0 0
        %815 = vmatprep.subr.bf16.mxu0 0
        %816 = vmatpush1.bf16.msra.mxu0 0
        %817 = vmatprep.mubr.bf16.mxu0 0
        %818 = vmatmul.mubr.bf16.gmra.mrb[0].mxu0 %v779
        %v819 = vpop.f32.mrb[0].mxu0
        %v820 = vadd.f32 0.0, %v819
        %v821 = vpop.f32.mrb[0].mxu0
        %v822 = vpop.f32.mrb[0].mxu0
        %v823 = vpop.f32.mrb[0].mxu0
        %824 = vdwg.mxu0
        %826 = vrot.lane.b32.xlu0 %v714, 112
        %v827 = vpop.permute.xlu0 %826
        %829 = vrot.lane.b32.xlu0 %v715, 112
        %v830 = vpop.permute.xlu0 %829
        %v832 = vsel %vm717, %v827, 0
        %v835 = vsel %vm717, %v830, 0
        %837 = vmatprep.subr.bf16.mxu0 0
        %838 = vmatpush1.bf16.xpose.msra.mxu0 %v835
        %839 = vmatprep.subr.bf16.mxu0 0
        %840 = vmatpush1.bf16.xpose.msra.mxu0 0
        %841 = vmatprep.subr.bf16.mxu0 0
        %842 = vmatpush1.bf16.xpose.msra.mxu0 0
        %843 = vmatprep.subr.bf16.mxu0 0
        %844 = vmatpush1.bf16.xpose.msra.mxu0 0
        %845 = vmatprep.subr.bf16.mxu0 0
        %846 = vmatpush1.bf16.xpose.msra.mxu0 0
        %847 = vmatprep.subr.bf16.mxu0 0
        %848 = vmatpush1.bf16.xpose.msra.mxu0 0
        %849 = vmatprep.subr.bf16.mxu0 0
        %850 = vmatpush1.bf16.xpose.msra.mxu0 0
        %851 = vmatprep.subr.bf16.mxu0 0
        %852 = vmatpush1.bf16.xpose.msra.mxu0 0
        %853 = vmatprep.subr.bf16.mxu0 0
        %854 = vmatpush1.bf16.xpose.msra.mxu0 0
        %855 = vmatprep.subr.bf16.mxu0 0
        %856 = vmatpush1.bf16.xpose.msra.mxu0 0
        %857 = vmatprep.subr.bf16.mxu0 0
        %858 = vmatpush1.bf16.xpose.msra.mxu0 0
        %859 = vmatprep.subr.bf16.mxu0 0
        %860 = vmatpush1.bf16.xpose.msra.mxu0 0
        %861 = vmatprep.subr.bf16.mxu0 0
        %862 = vmatpush1.bf16.xpose.msra.mxu0 0
        %863 = vmatprep.subr.bf16.mxu0 0
        %864 = vmatpush1.bf16.xpose.msra.mxu0 0
        %865 = vmatprep.subr.bf16.mxu0 0
        %866 = vmatpush1.bf16.xpose.msra.mxu0 0
        %867 = vmatprep.subr.bf16.mxu0 0
        %868 = vmatpush1.bf16.xpose.msra.mxu0 0
        %869 = vmatprep.mubr.bf16.mxu0 0
        %870 = vmatmul.mubr.bf16.gmra.mrb[0].mxu0 %v832
        %v871 = vpop.f32.mrb[0].mxu0
        %v872 = vadd.f32 0.0, %v871
        %v873 = vpop.f32.mrb[0].mxu0
        %v874 = vpop.f32.mrb[0].mxu0
        %v875 = vpop.f32.mrb[0].mxu0
        %876 = vdwg.mxu0
        %v877 = vsel %vm450, -1e+09, %v872
        %v878 = vsel %vm765, %v877, -inf
        %879 = vmax.xlane.f32.xlu0 %v878
        %v880 = vpop.xlane.xlu0 %879
        %v881 = vsub.f32 %v877, %v880
        %v882 = vmul.f32 %v881, 1.442695
        %v883 = vpow.pop %v882
        %v884 = vsel %vm765, %v883, 0.0
        %885 = vadd.xlane.f32.xlu0 %v884
        %v886 = vpop.xlane.xlu0 %885
        %v887 = vrcp.pop %v886
        %v888 = vmul.f32 %v883, %v887
        %v889 = vpack.c.bf16 %v888, %v888
        %891 = vrot.lane.b32.xlu0 %v716, 112
        %v892 = vpop.permute.xlu0 %891
        %v894 = vsel %vm765, %v889, 0
        %v897 = vsel %vm781, %v892, 0
        %899 = vmatprep.subr.bf16.mxu0 0
        %900 = vmatpush1.bf16.msra.mxu0 %v897
        %901 = vmatprep.subr.bf16.mxu0 0
        %902 = vmatpush1.bf16.msra.mxu0 0
        %903 = vmatprep.subr.bf16.mxu0 0
        %904 = vmatpush1.bf16.msra.mxu0 0
        %905 = vmatprep.subr.bf16.mxu0 0
        %906 = vmatpush1.bf16.msra.mxu0 0
        %907 = vmatprep.subr.bf16.mxu0 0
        %908 = vmatpush1.bf16.msra.mxu0 0
        %909 = vmatprep.subr.bf16.mxu0 0
        %910 = vmatpush1.bf16.msra.mxu0 0
        %911 = vmatprep.subr.bf16.mxu0 0
        %912 = vmatpush1.bf16.msra.mxu0 0
        %913 = vmatprep.subr.bf16.mxu0 0
        %914 = vmatpush1.bf16.msra.mxu0 0
        %915 = vmatprep.subr.bf16.mxu0 0
        %916 = vmatpush1.bf16.msra.mxu0 0
        %917 = vmatprep.subr.bf16.mxu0 0
        %918 = vmatpush1.bf16.msra.mxu0 0
        %919 = vmatprep.subr.bf16.mxu0 0
        %920 = vmatpush1.bf16.msra.mxu0 0
        %921 = vmatprep.subr.bf16.mxu0 0
        %922 = vmatpush1.bf16.msra.mxu0 0
        %923 = vmatprep.subr.bf16.mxu0 0
        %924 = vmatpush1.bf16.msra.mxu0 0
        %925 = vmatprep.subr.bf16.mxu0 0
        %926 = vmatpush1.bf16.msra.mxu0 0
        %927 = vmatprep.subr.bf16.mxu0 0
        %928 = vmatpush1.bf16.msra.mxu0 0
        %929 = vmatprep.subr.bf16.mxu0 0
        %930 = vmatpush1.bf16.msra.mxu0 0
        %931 = vmatprep.mubr.bf16.mxu0 0
        %932 = vmatmul.mubr.bf16.gmra.mrb[0].mxu0 %v894
        %v933 = vpop.f32.mrb[0].mxu0
        %v934 = vadd.f32 0.0, %v933
        %v935 = vpop.f32.mrb[0].mxu0
        %v936 = vpop.f32.mrb[0].mxu0
        %v937 = vpop.f32.mrb[0].mxu0
        %938 = vdwg.mxu0
        %939 = vrot.lane.b32.xlu0 %v714, 96
        %v940 = vpop.permute.xlu0 %939
        %941 = vrot.lane.b32.xlu0 %v715, 96
        %v942 = vpop.permute.xlu0 %941
        %v944 = vsel %vm717, %v940, 0
        %v947 = vsel %vm717, %v942, 0
        %949 = vmatprep.subr.bf16.mxu0 0
        %950 = vmatpush1.bf16.xpose.msra.mxu0 %v947
        %951 = vmatprep.subr.bf16.mxu0 0
        %952 = vmatpush1.bf16.xpose.msra.mxu0 0
        %953 = vmatprep.subr.bf16.mxu0 0
        %954 = vmatpush1.bf16.xpose.msra.mxu0 0
        %955 = vmatprep.subr.bf16.mxu0 0
        %956 = vmatpush1.bf16.xpose.msra.mxu0 0
        %957 = vmatprep.subr.bf16.mxu0 0
        %958 = vmatpush1.bf16.xpose.msra.mxu0 0
        %959 = vmatprep.subr.bf16.mxu0 0
        %960 = vmatpush1.bf16.xpose.msra.mxu0 0
        %961 = vmatprep.subr.bf16.mxu0 0
        %962 = vmatpush1.bf16.xpose.msra.mxu0 0
        %963 = vmatprep.subr.bf16.mxu0 0
        %964 = vmatpush1.bf16.xpose.msra.mxu0 0
        %965 = vmatprep.subr.bf16.mxu0 0
        %966 = vmatpush1.bf16.xpose.msra.mxu0 0
        %967 = vmatprep.subr.bf16.mxu0 0
        %968 = vmatpush1.bf16.xpose.msra.mxu0 0
        %969 = vmatprep.subr.bf16.mxu0 0
        %970 = vmatpush1.bf16.xpose.msra.mxu0 0
        %971 = vmatprep.subr.bf16.mxu0 0
        %972 = vmatpush1.bf16.xpose.msra.mxu0 0
        %973 = vmatprep.subr.bf16.mxu0 0
        %974 = vmatpush1.bf16.xpose.msra.mxu0 0
        %975 = vmatprep.subr.bf16.mxu0 0
        %976 = vmatpush1.bf16.xpose.msra.mxu0 0
        %977 = vmatprep.subr.bf16.mxu0 0
        %978 = vmatpush1.bf16.xpose.msra.mxu0 0
        %979 = vmatprep.subr.bf16.mxu0 0
        %980 = vmatpush1.bf16.xpose.msra.mxu0 0
        %981 = vmatprep.mubr.bf16.mxu0 0
        %982 = vmatmul.mubr.bf16.gmra.mrb[0].mxu0 %v944
        %v983 = vpop.f32.mrb[0].mxu0
        %v984 = vadd.f32 0.0, %v983
        %v985 = vpop.f32.mrb[0].mxu0
        %v986 = vpop.f32.mrb[0].mxu0
        %v987 = vpop.f32.mrb[0].mxu0
        %988 = vdwg.mxu0
        %v989 = vsel %vm450, -1e+09, %v984
        %v990 = vsel %vm765, %v989, -inf
        %991 = vmax.xlane.f32.xlu0 %v990
        %v992 = vpop.xlane.xlu0 %991
        %v993 = vsub.f32 %v989, %v992
        %v994 = vmul.f32 %v993, 1.442695
        %v995 = vpow.pop %v994
        %v996 = vsel %vm765, %v995, 0.0
        %997 = vadd.xlane.f32.xlu0 %v996
        %v998 = vpop.xlane.xlu0 %997
        %v999 = vrcp.pop %v998
        %v1000 = vmul.f32 %v995, %v999
        %v1001 = vpack.c.bf16 %v1000, %v1000
        %1002 = vrot.lane.b32.xlu0 %v716, 96
        %v1003 = vpop.permute.xlu0 %1002
        %v1005 = vsel %vm765, %v1001, 0
        %v1008 = vsel %vm781, %v1003, 0
        %1010 = vmatprep.subr.bf16.mxu0 0
        %1011 = vmatpush1.bf16.msra.mxu0 %v1008
        %1012 = vmatprep.subr.bf16.mxu0 0
        %1013 = vmatpush1.bf16.msra.mxu0 0
        %1014 = vmatprep.subr.bf16.mxu0 0
        %1015 = vmatpush1.bf16.msra.mxu0 0
        %1016 = vmatprep.subr.bf16.mxu0 0
        %1017 = vmatpush1.bf16.msra.mxu0 0
        %1018 = vmatprep.subr.bf16.mxu0 0
        %1019 = vmatpush1.bf16.msra.mxu0 0
        %1020 = vmatprep.subr.bf16.mxu0 0
        %1021 = vmatpush1.bf16.msra.mxu0 0
        %1022 = vmatprep.subr.bf16.mxu0 0
        %1023 = vmatpush1.bf16.msra.mxu0 0
        %1024 = vmatprep.subr.bf16.mxu0 0
        %1025 = vmatpush1.bf16.msra.mxu0 0
        %1026 = vmatprep.subr.bf16.mxu0 0
        %1027 = vmatpush1.bf16.msra.mxu0 0
        %1028 = vmatprep.subr.bf16.mxu0 0
        %1029 = vmatpush1.bf16.msra.mxu0 0
        %1030 = vmatprep.subr.bf16.mxu0 0
        %1031 = vmatpush1.bf16.msra.mxu0 0
        %1032 = vmatprep.subr.bf16.mxu0 0
        %1033 = vmatpush1.bf16.msra.mxu0 0
        %1034 = vmatprep.subr.bf16.mxu0 0
        %1035 = vmatpush1.bf16.msra.mxu0 0
        %1036 = vmatprep.subr.bf16.mxu0 0
        %1037 = vmatpush1.bf16.msra.mxu0 0
        %1038 = vmatprep.subr.bf16.mxu0 0
        %1039 = vmatpush1.bf16.msra.mxu0 0
        %1040 = vmatprep.subr.bf16.mxu0 0
        %1041 = vmatpush1.bf16.msra.mxu0 0
        %1042 = vmatprep.mubr.bf16.mxu0 0
        %1043 = vmatmul.mubr.bf16.gmra.mrb[0].mxu0 %v1005
        %v1044 = vpop.f32.mrb[0].mxu0
        %v1045 = vadd.f32 0.0, %v1044
        %v1046 = vpop.f32.mrb[0].mxu0
        %v1047 = vpop.f32.mrb[0].mxu0
        %v1048 = vpop.f32.mrb[0].mxu0
        %1049 = vdwg.mxu0
        %1050 = vrot.lane.b32.xlu0 %v714, 80
        %v1051 = vpop.permute.xlu0 %1050
        %1052 = vrot.lane.b32.xlu0 %v715, 80
        %v1053 = vpop.permute.xlu0 %1052
        %v1055 = vsel %vm717, %v1051, 0
        %v1058 = vsel %vm717, %v1053, 0
        %1060 = vmatprep.subr.bf16.mxu0 0
        %1061 = vmatpush1.bf16.xpose.msra.mxu0 %v1058
        %1062 = vmatprep.subr.bf16.mxu0 0
        %1063 = vmatpush1.bf16.xpose.msra.mxu0 0
        %1064 = vmatprep.subr.bf16.mxu0 0
        %1065 = vmatpush1.bf16.xpose.msra.mxu0 0
        %1066 = vmatprep.subr.bf16.mxu0 0
        %1067 = vmatpush1.bf16.xpose.msra.mxu0 0
        %1068 = vmatprep.subr.bf16.mxu0 0
        %1069 = vmatpush1.bf16.xpose.msra.mxu0 0
        %1070 = vmatprep.subr.bf16.mxu0 0
        %1071 = vmatpush1.bf16.xpose.msra.mxu0 0
        %1072 = vmatprep.subr.bf16.mxu0 0
        %1073 = vmatpush1.bf16.xpose.msra.mxu0 0
        %1074 = vmatprep.subr.bf16.mxu0 0
        %1075 = vmatpush1.bf16.xpose.msra.mxu0 0
        %1076 = vmatprep.subr.bf16.mxu0 0
        %1077 = vmatpush1.bf16.xpose.msra.mxu0 0
        %1078 = vmatprep.subr.bf16.mxu0 0
        %1079 = vmatpush1.bf16.xpose.msra.mxu0 0
        %1080 = vmatprep.subr.bf16.mxu0 0
        %1081 = vmatpush1.bf16.xpose.msra.mxu0 0
        %1082 = vmatprep.subr.bf16.mxu0 0
        %1083 = vmatpush1.bf16.xpose.msra.mxu0 0
        %1084 = vmatprep.subr.bf16.mxu0 0
        %1085 = vmatpush1.bf16.xpose.msra.mxu0 0
        %1086 = vmatprep.subr.bf16.mxu0 0
        %1087 = vmatpush1.bf16.xpose.msra.mxu0 0
        %1088 = vmatprep.subr.bf16.mxu0 0
        %1089 = vmatpush1.bf16.xpose.msra.mxu0 0
        %1090 = vmatprep.subr.bf16.mxu0 0
        %1091 = vmatpush1.bf16.xpose.msra.mxu0 0
        %1092 = vmatprep.mubr.bf16.mxu0 0
        %1093 = vmatmul.mubr.bf16.gmra.mrb[0].mxu0 %v1055
        %v1094 = vpop.f32.mrb[0].mxu0
        %v1095 = vadd.f32 0.0, %v1094
        %v1096 = vpop.f32.mrb[0].mxu0
        %v1097 = vpop.f32.mrb[0].mxu0
        %v1098 = vpop.f32.mrb[0].mxu0
        %1099 = vdwg.mxu0
        %v1100 = vsel %vm450, -1e+09, %v1095
        %v1101 = vsel %vm765, %v1100, -inf
        %1102 = vmax.xlane.f32.xlu0 %v1101
        %v1103 = vpop.xlane.xlu0 %1102
        %v1104 = vsub.f32 %v1100, %v1103
        %v1105 = vmul.f32 %v1104, 1.442695
        %v1106 = vpow.pop %v1105
        %v1107 = vsel %vm765, %v1106, 0.0
        %1108 = vadd.xlane.f32.xlu0 %v1107
        %v1109 = vpop.xlane.xlu0 %1108
        %v1110 = vrcp.pop %v1109
        %v1111 = vmul.f32 %v1106, %v1110
        %v1112 = vpack.c.bf16 %v1111, %v1111
        %1113 = vrot.lane.b32.xlu0 %v716, 80
        %v1114 = vpop.permute.xlu0 %1113
        %v1116 = vsel %vm765, %v1112, 0
        %v1119 = vsel %vm781, %v1114, 0
        %1121 = vmatprep.subr.bf16.mxu0 0
        %1122 = vmatpush1.bf16.msra.mxu0 %v1119
        %1123 = vmatprep.subr.bf16.mxu0 0
        %1124 = vmatpush1.bf16.msra.mxu0 0
        %1125 = vmatprep.subr.bf16.mxu0 0
        %1126 = vmatpush1.bf16.msra.mxu0 0
        %1127 = vmatprep.subr.bf16.mxu0 0
        %1128 = vmatpush1.bf16.msra.mxu0 0
        %1129 = vmatprep.subr.bf16.mxu0 0
        %1130 = vmatpush1.bf16.msra.mxu0 0
        %1131 = vmatprep.subr.bf16.mxu0 0
        %1132 = vmatpush1.bf16.msra.mxu0 0
        %1133 = vmatprep.subr.bf16.mxu0 0
        %1134 = vmatpush1.bf16.msra.mxu0 0
        %1135 = vmatprep.subr.bf16.mxu0 0
        %1136 = vmatpush1.bf16.msra.mxu0 0
        %1137 = vmatprep.subr.bf16.mxu0 0
        %1138 = vmatpush1.bf16.msra.mxu0 0
        %1139 = vmatprep.subr.bf16.mxu0 0
        %1140 = vmatpush1.bf16.msra.mxu0 0
        %1141 = vmatprep.subr.bf16.mxu0 0
        %1142 = vmatpush1.bf16.msra.mxu0 0
        %1143 = vmatprep.subr.bf16.mxu0 0
        %1144 = vmatpush1.bf16.msra.mxu0 0
        %1145 = vmatprep.subr.bf16.mxu0 0
        %1146 = vmatpush1.bf16.msra.mxu0 0
        %1147 = vmatprep.subr.bf16.mxu0 0
        %1148 = vmatpush1.bf16.msra.mxu0 0
        %1149 = vmatprep.subr.bf16.mxu0 0
        %1150 = vmatpush1.bf16.msra.mxu0 0
        %1151 = vmatprep.subr.bf16.mxu0 0
        %1152 = vmatpush1.bf16.msra.mxu0 0
        %1153 = vmatprep.mubr.bf16.mxu0 0
        %1154 = vmatmul.mubr.bf16.gmra.mrb[0].mxu0 %v1116
        %v1155 = vpop.f32.mrb[0].mxu0
        %v1156 = vadd.f32 0.0, %v1155
        %v1157 = vpop.f32.mrb[0].mxu0
        %v1158 = vpop.f32.mrb[0].mxu0
        %v1159 = vpop.f32.mrb[0].mxu0
        %1160 = vdwg.mxu0
        %1161 = vrot.lane.b32.xlu0 %v714, 64
        %v1162 = vpop.permute.xlu0 %1161
        %1163 = vrot.lane.b32.xlu0 %v715, 64
        %v1164 = vpop.permute.xlu0 %1163
        %v1166 = vsel %vm717, %v1162, 0
        %v1169 = vsel %vm717, %v1164, 0
        %1171 = vmatprep.subr.bf16.mxu0 0
        %1172 = vmatpush1.bf16.xpose.msra.mxu0 %v1169
        %1173 = vmatprep.subr.bf16.mxu0 0
        %1174 = vmatpush1.bf16.xpose.msra.mxu0 0
        %1175 = vmatprep.subr.bf16.mxu0 0
        %1176 = vmatpush1.bf16.xpose.msra.mxu0 0
        %1177 = vmatprep.subr.bf16.mxu0 0
        %1178 = vmatpush1.bf16.xpose.msra.mxu0 0
        %1179 = vmatprep.subr.bf16.mxu0 0
        %1180 = vmatpush1.bf16.xpose.msra.mxu0 0
        %1181 = vmatprep.subr.bf16.mxu0 0
        %1182 = vmatpush1.bf16.xpose.msra.mxu0 0
        %1183 = vmatprep.subr.bf16.mxu0 0
        %1184 = vmatpush1.bf16.xpose.msra.mxu0 0
        %1185 = vmatprep.subr.bf16.mxu0 0
        %1186 = vmatpush1.bf16.xpose.msra.mxu0 0
        %1187 = vmatprep.subr.bf16.mxu0 0
        %1188 = vmatpush1.bf16.xpose.msra.mxu0 0
        %1189 = vmatprep.subr.bf16.mxu0 0
        %1190 = vmatpush1.bf16.xpose.msra.mxu0 0
        %1191 = vmatprep.subr.bf16.mxu0 0
        %1192 = vmatpush1.bf16.xpose.msra.mxu0 0
        %1193 = vmatprep.subr.bf16.mxu0 0
        %1194 = vmatpush1.bf16.xpose.msra.mxu0 0
        %1195 = vmatprep.subr.bf16.mxu0 0
        %1196 = vmatpush1.bf16.xpose.msra.mxu0 0
        %1197 = vmatprep.subr.bf16.mxu0 0
        %1198 = vmatpush1.bf16.xpose.msra.mxu0 0
        %1199 = vmatprep.subr.bf16.mxu0 0
        %1200 = vmatpush1.bf16.xpose.msra.mxu0 0
        %1201 = vmatprep.subr.bf16.mxu0 0
        %1202 = vmatpush1.bf16.xpose.msra.mxu0 0
        %1203 = vmatprep.mubr.bf16.mxu0 0
        %1204 = vmatmul.mubr.bf16.gmra.mrb[0].mxu0 %v1166
        %v1205 = vpop.f32.mrb[0].mxu0
        %v1206 = vadd.f32 0.0, %v1205
        %v1207 = vpop.f32.mrb[0].mxu0
        %v1208 = vpop.f32.mrb[0].mxu0
        %v1209 = vpop.f32.mrb[0].mxu0
        %1210 = vdwg.mxu0
        %v1211 = vsel %vm450, -1e+09, %v1206
        %v1212 = vsel %vm765, %v1211, -inf
        %1213 = vmax.xlane.f32.xlu0 %v1212
        %v1214 = vpop.xlane.xlu0 %1213
        %v1215 = vsub.f32 %v1211, %v1214
        %v1216 = vmul.f32 %v1215, 1.442695
        %v1217 = vpow.pop %v1216
        %v1218 = vsel %vm765, %v1217, 0.0
        %1219 = vadd.xlane.f32.xlu0 %v1218
        %v1220 = vpop.xlane.xlu0 %1219
        %v1221 = vrcp.pop %v1220
        %v1222 = vmul.f32 %v1217, %v1221
        %v1223 = vpack.c.bf16 %v1222, %v1222
        %1224 = vrot.lane.b32.xlu0 %v716, 64
        %v1225 = vpop.permute.xlu0 %1224
        %v1227 = vsel %vm765, %v1223, 0
        %v1230 = vsel %vm781, %v1225, 0
        %1232 = vmatprep.subr.bf16.mxu0 0
        %1233 = vmatpush1.bf16.msra.mxu0 %v1230
        %1234 = vmatprep.subr.bf16.mxu0 0
        %1235 = vmatpush1.bf16.msra.mxu0 0
        %1236 = vmatprep.subr.bf16.mxu0 0
        %1237 = vmatpush1.bf16.msra.mxu0 0
        %1238 = vmatprep.subr.bf16.mxu0 0
        %1239 = vmatpush1.bf16.msra.mxu0 0
        %1240 = vmatprep.subr.bf16.mxu0 0
        %1241 = vmatpush1.bf16.msra.mxu0 0
        %1242 = vmatprep.subr.bf16.mxu0 0
        %1243 = vmatpush1.bf16.msra.mxu0 0
        %1244 = vmatprep.subr.bf16.mxu0 0
        %1245 = vmatpush1.bf16.msra.mxu0 0
        %1246 = vmatprep.subr.bf16.mxu0 0
        %1247 = vmatpush1.bf16.msra.mxu0 0
        %1248 = vmatprep.subr.bf16.mxu0 0
        %1249 = vmatpush1.bf16.msra.mxu0 0
        %1250 = vmatprep.subr.bf16.mxu0 0
        %1251 = vmatpush1.bf16.msra.mxu0 0
        %1252 = vmatprep.subr.bf16.mxu0 0
        %1253 = vmatpush1.bf16.msra.mxu0 0
        %1254 = vmatprep.subr.bf16.mxu0 0
        %1255 = vmatpush1.bf16.msra.mxu0 0
        %1256 = vmatprep.subr.bf16.mxu0 0
        %1257 = vmatpush1.bf16.msra.mxu0 0
        %1258 = vmatprep.subr.bf16.mxu0 0
        %1259 = vmatpush1.bf16.msra.mxu0 0
        %1260 = vmatprep.subr.bf16.mxu0 0
        %1261 = vmatpush1.bf16.msra.mxu0 0
        %1262 = vmatprep.subr.bf16.mxu0 0
        %1263 = vmatpush1.bf16.msra.mxu0 0
        %1264 = vmatprep.mubr.bf16.mxu0 0
        %1265 = vmatmul.mubr.bf16.gmra.mrb[0].mxu0 %v1227
        %v1266 = vpop.f32.mrb[0].mxu0
        %v1267 = vadd.f32 0.0, %v1266
        %v1268 = vpop.f32.mrb[0].mxu0
        %v1269 = vpop.f32.mrb[0].mxu0
        %v1270 = vpop.f32.mrb[0].mxu0
        %1271 = vdwg.mxu0
        %1272 = vrot.lane.b32.xlu0 %v714, 48
        %v1273 = vpop.permute.xlu0 %1272
        %1274 = vrot.lane.b32.xlu0 %v715, 48
        %v1275 = vpop.permute.xlu0 %1274
        %v1277 = vsel %vm717, %v1273, 0
        %v1280 = vsel %vm717, %v1275, 0
        %1282 = vmatprep.subr.bf16.mxu0 0
        %1283 = vmatpush1.bf16.xpose.msra.mxu0 %v1280
        %1284 = vmatprep.subr.bf16.mxu0 0
        %1285 = vmatpush1.bf16.xpose.msra.mxu0 0
        %1286 = vmatprep.subr.bf16.mxu0 0
        %1287 = vmatpush1.bf16.xpose.msra.mxu0 0
        %1288 = vmatprep.subr.bf16.mxu0 0
        %1289 = vmatpush1.bf16.xpose.msra.mxu0 0
        %1290 = vmatprep.subr.bf16.mxu0 0
        %1291 = vmatpush1.bf16.xpose.msra.mxu0 0
        %1292 = vmatprep.subr.bf16.mxu0 0
        %1293 = vmatpush1.bf16.xpose.msra.mxu0 0
        %1294 = vmatprep.subr.bf16.mxu0 0
        %1295 = vmatpush1.bf16.xpose.msra.mxu0 0
        %1296 = vmatprep.subr.bf16.mxu0 0
        %1297 = vmatpush1.bf16.xpose.msra.mxu0 0
        %1298 = vmatprep.subr.bf16.mxu0 0
        %1299 = vmatpush1.bf16.xpose.msra.mxu0 0
        %1300 = vmatprep.subr.bf16.mxu0 0
        %1301 = vmatpush1.bf16.xpose.msra.mxu0 0
        %1302 = vmatprep.subr.bf16.mxu0 0
        %1303 = vmatpush1.bf16.xpose.msra.mxu0 0
        %1304 = vmatprep.subr.bf16.mxu0 0
        %1305 = vmatpush1.bf16.xpose.msra.mxu0 0
        %1306 = vmatprep.subr.bf16.mxu0 0
        %1307 = vmatpush1.bf16.xpose.msra.mxu0 0
        %1308 = vmatprep.subr.bf16.mxu0 0
        %1309 = vmatpush1.bf16.xpose.msra.mxu0 0
        %1310 = vmatprep.subr.bf16.mxu0 0
        %1311 = vmatpush1.bf16.xpose.msra.mxu0 0
        %1312 = vmatprep.subr.bf16.mxu0 0
        %1313 = vmatpush1.bf16.xpose.msra.mxu0 0
        %1314 = vmatprep.mubr.bf16.mxu0 0
        %1315 = vmatmul.mubr.bf16.gmra.mrb[0].mxu0 %v1277
        %v1316 = vpop.f32.mrb[0].mxu0
        %v1317 = vadd.f32 0.0, %v1316
        %v1318 = vpop.f32.mrb[0].mxu0
        %v1319 = vpop.f32.mrb[0].mxu0
        %v1320 = vpop.f32.mrb[0].mxu0
        %1321 = vdwg.mxu0
        %v1322 = vsel %vm450, -1e+09, %v1317
        %v1323 = vsel %vm765, %v1322, -inf
        %1324 = vmax.xlane.f32.xlu0 %v1323
        %v1325 = vpop.xlane.xlu0 %1324
        %v1326 = vsub.f32 %v1322, %v1325
        %v1327 = vmul.f32 %v1326, 1.442695
        %v1328 = vpow.pop %v1327
        %v1329 = vsel %vm765, %v1328, 0.0
        %1330 = vadd.xlane.f32.xlu0 %v1329
        %v1331 = vpop.xlane.xlu0 %1330
        %v1332 = vrcp.pop %v1331
        %v1333 = vmul.f32 %v1328, %v1332
        %v1334 = vpack.c.bf16 %v1333, %v1333
        %1335 = vrot.lane.b32.xlu0 %v716, 48
        %v1336 = vpop.permute.xlu0 %1335
        %v1338 = vsel %vm765, %v1334, 0
        %v1341 = vsel %vm781, %v1336, 0
        %1343 = vmatprep.subr.bf16.mxu0 0
        %1344 = vmatpush1.bf16.msra.mxu0 %v1341
        %1345 = vmatprep.subr.bf16.mxu0 0
        %1346 = vmatpush1.bf16.msra.mxu0 0
        %1347 = vmatprep.subr.bf16.mxu0 0
        %1348 = vmatpush1.bf16.msra.mxu0 0
        %1349 = vmatprep.subr.bf16.mxu0 0
        %1350 = vmatpush1.bf16.msra.mxu0 0
        %1351 = vmatprep.subr.bf16.mxu0 0
        %1352 = vmatpush1.bf16.msra.mxu0 0
        %1353 = vmatprep.subr.bf16.mxu0 0
        %1354 = vmatpush1.bf16.msra.mxu0 0
        %1355 = vmatprep.subr.bf16.mxu0 0
        %1356 = vmatpush1.bf16.msra.mxu0 0
        %1357 = vmatprep.subr.bf16.mxu0 0
        %1358 = vmatpush1.bf16.msra.mxu0 0
        %1359 = vmatprep.subr.bf16.mxu0 0
        %1360 = vmatpush1.bf16.msra.mxu0 0
        %1361 = vmatprep.subr.bf16.mxu0 0
        %1362 = vmatpush1.bf16.msra.mxu0 0
        %1363 = vmatprep.subr.bf16.mxu0 0
        %1364 = vmatpush1.bf16.msra.mxu0 0
        %1365 = vmatprep.subr.bf16.mxu0 0
        %1366 = vmatpush1.bf16.msra.mxu0 0
        %1367 = vmatprep.subr.bf16.mxu0 0
        %1368 = vmatpush1.bf16.msra.mxu0 0
        %1369 = vmatprep.subr.bf16.mxu0 0
        %1370 = vmatpush1.bf16.msra.mxu0 0
        %1371 = vmatprep.subr.bf16.mxu0 0
        %1372 = vmatpush1.bf16.msra.mxu0 0
        %1373 = vmatprep.subr.bf16.mxu0 0
        %1374 = vmatpush1.bf16.msra.mxu0 0
        %1375 = vmatprep.mubr.bf16.mxu0 0
        %1376 = vmatmul.mubr.bf16.gmra.mrb[0].mxu0 %v1338
        %v1377 = vpop.f32.mrb[0].mxu0
        %v1378 = vadd.f32 0.0, %v1377
        %v1379 = vpop.f32.mrb[0].mxu0
        %v1380 = vpop.f32.mrb[0].mxu0
        %v1381 = vpop.f32.mrb[0].mxu0
        %1382 = vdwg.mxu0
        %1383 = vrot.lane.b32.xlu0 %v714, 32
        %v1384 = vpop.permute.xlu0 %1383
        %1385 = vrot.lane.b32.xlu0 %v715, 32
        %v1386 = vpop.permute.xlu0 %1385
        %v1388 = vsel %vm717, %v1384, 0
        %v1391 = vsel %vm717, %v1386, 0
        %1393 = vmatprep.subr.bf16.mxu0 0
        %1394 = vmatpush1.bf16.xpose.msra.mxu0 %v1391
        %1395 = vmatprep.subr.bf16.mxu0 0
        %1396 = vmatpush1.bf16.xpose.msra.mxu0 0
        %1397 = vmatprep.subr.bf16.mxu0 0
        %1398 = vmatpush1.bf16.xpose.msra.mxu0 0
        %1399 = vmatprep.subr.bf16.mxu0 0
        %1400 = vmatpush1.bf16.xpose.msra.mxu0 0
        %1401 = vmatprep.subr.bf16.mxu0 0
        %1402 = vmatpush1.bf16.xpose.msra.mxu0 0
        %1403 = vmatprep.subr.bf16.mxu0 0
        %1404 = vmatpush1.bf16.xpose.msra.mxu0 0
        %1405 = vmatprep.subr.bf16.mxu0 0
        %1406 = vmatpush1.bf16.xpose.msra.mxu0 0
        %1407 = vmatprep.subr.bf16.mxu0 0
        %1408 = vmatpush1.bf16.xpose.msra.mxu0 0
        %1409 = vmatprep.subr.bf16.mxu0 0
        %1410 = vmatpush1.bf16.xpose.msra.mxu0 0
        %1411 = vmatprep.subr.bf16.mxu0 0
        %1412 = vmatpush1.bf16.xpose.msra.mxu0 0
        %1413 = vmatprep.subr.bf16.mxu0 0
        %1414 = vmatpush1.bf16.xpose.msra.mxu0 0
        %1415 = vmatprep.subr.bf16.mxu0 0
        %1416 = vmatpush1.bf16.xpose.msra.mxu0 0
        %1417 = vmatprep.subr.bf16.mxu0 0
        %1418 = vmatpush1.bf16.xpose.msra.mxu0 0
        %1419 = vmatprep.subr.bf16.mxu0 0
        %1420 = vmatpush1.bf16.xpose.msra.mxu0 0
        %1421 = vmatprep.subr.bf16.mxu0 0
        %1422 = vmatpush1.bf16.xpose.msra.mxu0 0
        %1423 = vmatprep.subr.bf16.mxu0 0
        %1424 = vmatpush1.bf16.xpose.msra.mxu0 0
        %1425 = vmatprep.mubr.bf16.mxu0 0
        %1426 = vmatmul.mubr.bf16.gmra.mrb[0].mxu0 %v1388
        %v1427 = vpop.f32.mrb[0].mxu0
        %v1428 = vadd.f32 0.0, %v1427
        %v1429 = vpop.f32.mrb[0].mxu0
        %v1430 = vpop.f32.mrb[0].mxu0
        %v1431 = vpop.f32.mrb[0].mxu0
        %1432 = vdwg.mxu0
        %v1433 = vsel %vm450, -1e+09, %v1428
        %v1434 = vsel %vm765, %v1433, -inf
        %1435 = vmax.xlane.f32.xlu0 %v1434
        %v1436 = vpop.xlane.xlu0 %1435
        %v1437 = vsub.f32 %v1433, %v1436
        %v1438 = vmul.f32 %v1437, 1.442695
        %v1439 = vpow.pop %v1438
        %v1440 = vsel %vm765, %v1439, 0.0
        %1441 = vadd.xlane.f32.xlu0 %v1440
        %v1442 = vpop.xlane.xlu0 %1441
        %v1443 = vrcp.pop %v1442
        %v1444 = vmul.f32 %v1439, %v1443
        %v1445 = vpack.c.bf16 %v1444, %v1444
        %1446 = vrot.lane.b32.xlu0 %v716, 32
        %v1447 = vpop.permute.xlu0 %1446
        %v1449 = vsel %vm765, %v1445, 0
        %v1452 = vsel %vm781, %v1447, 0
        %1454 = vmatprep.subr.bf16.mxu0 0
        %1455 = vmatpush1.bf16.msra.mxu0 %v1452
        %1456 = vmatprep.subr.bf16.mxu0 0
        %1457 = vmatpush1.bf16.msra.mxu0 0
        %1458 = vmatprep.subr.bf16.mxu0 0
        %1459 = vmatpush1.bf16.msra.mxu0 0
        %1460 = vmatprep.subr.bf16.mxu0 0
        %1461 = vmatpush1.bf16.msra.mxu0 0
        %1462 = vmatprep.subr.bf16.mxu0 0
        %1463 = vmatpush1.bf16.msra.mxu0 0
        %1464 = vmatprep.subr.bf16.mxu0 0
        %1465 = vmatpush1.bf16.msra.mxu0 0
        %1466 = vmatprep.subr.bf16.mxu0 0
        %1467 = vmatpush1.bf16.msra.mxu0 0
        %1468 = vmatprep.subr.bf16.mxu0 0
        %1469 = vmatpush1.bf16.msra.mxu0 0
        %1470 = vmatprep.subr.bf16.mxu0 0
        %1471 = vmatpush1.bf16.msra.mxu0 0
        %1472 = vmatprep.subr.bf16.mxu0 0
        %1473 = vmatpush1.bf16.msra.mxu0 0
        %1474 = vmatprep.subr.bf16.mxu0 0
        %1475 = vmatpush1.bf16.msra.mxu0 0
        %1476 = vmatprep.subr.bf16.mxu0 0
        %1477 = vmatpush1.bf16.msra.mxu0 0
        %1478 = vmatprep.subr.bf16.mxu0 0
        %1479 = vmatpush1.bf16.msra.mxu0 0
        %1480 = vmatprep.subr.bf16.mxu0 0
        %1481 = vmatpush1.bf16.msra.mxu0 0
        %1482 = vmatprep.subr.bf16.mxu0 0
        %1483 = vmatpush1.bf16.msra.mxu0 0
        %1484 = vmatprep.subr.bf16.mxu0 0
        %1485 = vmatpush1.bf16.msra.mxu0 0
        %1486 = vmatprep.mubr.bf16.mxu0 0
        %1487 = vmatmul.mubr.bf16.gmra.mrb[0].mxu0 %v1449
        %v1488 = vpop.f32.mrb[0].mxu0
        %v1489 = vadd.f32 0.0, %v1488
        %v1490 = vpop.f32.mrb[0].mxu0
        %v1491 = vpop.f32.mrb[0].mxu0
        %v1492 = vpop.f32.mrb[0].mxu0
        %1493 = vdwg.mxu0
        %1494 = vrot.lane.b32.xlu0 %v714, 16
        %v1495 = vpop.permute.xlu0 %1494
        %1496 = vrot.lane.b32.xlu0 %v715, 16
        %v1497 = vpop.permute.xlu0 %1496
        %v1499 = vsel %vm717, %v1495, 0
        %v1502 = vsel %vm717, %v1497, 0
        %1504 = vmatprep.subr.bf16.mxu0 0
        %1505 = vmatpush1.bf16.xpose.msra.mxu0 %v1502
        %1506 = vmatprep.subr.bf16.mxu0 0
        %1507 = vmatpush1.bf16.xpose.msra.mxu0 0
        %1508 = vmatprep.subr.bf16.mxu0 0
        %1509 = vmatpush1.bf16.xpose.msra.mxu0 0
        %1510 = vmatprep.subr.bf16.mxu0 0
        %1511 = vmatpush1.bf16.xpose.msra.mxu0 0
        %1512 = vmatprep.subr.bf16.mxu0 0
        %1513 = vmatpush1.bf16.xpose.msra.mxu0 0
        %1514 = vmatprep.subr.bf16.mxu0 0
        %1515 = vmatpush1.bf16.xpose.msra.mxu0 0
        %1516 = vmatprep.subr.bf16.mxu0 0
        %1517 = vmatpush1.bf16.xpose.msra.mxu0 0
        %1518 = vmatprep.subr.bf16.mxu0 0
        %1519 = vmatpush1.bf16.xpose.msra.mxu0 0
        %1520 = vmatprep.subr.bf16.mxu0 0
        %1521 = vmatpush1.bf16.xpose.msra.mxu0 0
        %1522 = vmatprep.subr.bf16.mxu0 0
        %1523 = vmatpush1.bf16.xpose.msra.mxu0 0
        %1524 = vmatprep.subr.bf16.mxu0 0
        %1525 = vmatpush1.bf16.xpose.msra.mxu0 0
        %1526 = vmatprep.subr.bf16.mxu0 0
        %1527 = vmatpush1.bf16.xpose.msra.mxu0 0
        %1528 = vmatprep.subr.bf16.mxu0 0
        %1529 = vmatpush1.bf16.xpose.msra.mxu0 0
        %1530 = vmatprep.subr.bf16.mxu0 0
        %1531 = vmatpush1.bf16.xpose.msra.mxu0 0
        %1532 = vmatprep.subr.bf16.mxu0 0
        %1533 = vmatpush1.bf16.xpose.msra.mxu0 0
        %1534 = vmatprep.subr.bf16.mxu0 0
        %1535 = vmatpush1.bf16.xpose.msra.mxu0 0
        %1536 = vmatprep.mubr.bf16.mxu0 0
        %1537 = vmatmul.mubr.bf16.gmra.mrb[0].mxu0 %v1499
        %v1538 = vpop.f32.mrb[0].mxu0
        %v1539 = vadd.f32 0.0, %v1538
        %v1540 = vpop.f32.mrb[0].mxu0
        %v1541 = vpop.f32.mrb[0].mxu0
        %v1542 = vpop.f32.mrb[0].mxu0
        %1543 = vdwg.mxu0
        %v1544 = vsel %vm450, -1e+09, %v1539
        %v1545 = vsel %vm765, %v1544, -inf
        %1546 = vmax.xlane.f32.xlu0 %v1545
        %v1547 = vpop.xlane.xlu0 %1546
        %v1548 = vsub.f32 %v1544, %v1547
        %v1549 = vmul.f32 %v1548, 1.442695
        %v1550 = vpow.pop %v1549
        %v1551 = vsel %vm765, %v1550, 0.0
        %1552 = vadd.xlane.f32.xlu0 %v1551
        %v1553 = vpop.xlane.xlu0 %1552
        %v1554 = vrcp.pop %v1553
        %v1555 = vmul.f32 %v1550, %v1554
        %v1556 = vpack.c.bf16 %v1555, %v1555
        %1557 = vrot.lane.b32.xlu0 %v716, 16
        %v1558 = vpop.permute.xlu0 %1557
        %v1560 = vsel %vm765, %v1556, 0
        %v1563 = vsel %vm781, %v1558, 0
        %1565 = vmatprep.subr.bf16.mxu0 0
        %1566 = vmatpush1.bf16.msra.mxu0 %v1563
        %1567 = vmatprep.subr.bf16.mxu0 0
        %1568 = vmatpush1.bf16.msra.mxu0 0
        %1569 = vmatprep.subr.bf16.mxu0 0
        %1570 = vmatpush1.bf16.msra.mxu0 0
        %1571 = vmatprep.subr.bf16.mxu0 0
        %1572 = vmatpush1.bf16.msra.mxu0 0
        %1573 = vmatprep.subr.bf16.mxu0 0
        %1574 = vmatpush1.bf16.msra.mxu0 0
        %1575 = vmatprep.subr.bf16.mxu0 0
        %1576 = vmatpush1.bf16.msra.mxu0 0
        %1577 = vmatprep.subr.bf16.mxu0 0
        %1578 = vmatpush1.bf16.msra.mxu0 0
        %1579 = vmatprep.subr.bf16.mxu0 0
        %1580 = vmatpush1.bf16.msra.mxu0 0
        %1581 = vmatprep.subr.bf16.mxu0 0
        %1582 = vmatpush1.bf16.msra.mxu0 0
        %1583 = vmatprep.subr.bf16.mxu0 0
        %1584 = vmatpush1.bf16.msra.mxu0 0
        %1585 = vmatprep.subr.bf16.mxu0 0
        %1586 = vmatpush1.bf16.msra.mxu0 0
        %1587 = vmatprep.subr.bf16.mxu0 0
        %1588 = vmatpush1.bf16.msra.mxu0 0
        %1589 = vmatprep.subr.bf16.mxu0 0
        %1590 = vmatpush1.bf16.msra.mxu0 0
        %1591 = vmatprep.subr.bf16.mxu0 0
        %1592 = vmatpush1.bf16.msra.mxu0 0
        %1593 = vmatprep.subr.bf16.mxu0 0
        %1594 = vmatpush1.bf16.msra.mxu0 0
        %1595 = vmatprep.subr.bf16.mxu0 0
        %1596 = vmatpush1.bf16.msra.mxu0 0
        %1597 = vmatprep.mubr.bf16.mxu0 0
        %1598 = vmatmul.mubr.bf16.gmra.mrb[0].mxu0 %v1560
        %v1599 = vpop.f32.mrb[0].mxu0
        %v1600 = vadd.f32 0.0, %v1599
        %v1601 = vpop.f32.mrb[0].mxu0
        %v1602 = vpop.f32.mrb[0].mxu0
        %v1603 = vpop.f32.mrb[0].mxu0
        %1604 = vdwg.mxu0
        %1606 = vrot.lane.b32.xlu0 %v934, 16
        %v1607 = vpop.permute.xlu0 %1606
        %1610 = vrot.lane.b32.xlu0 %v1045, 32
        %v1611 = vpop.permute.xlu0 %1610
        %1614 = vrot.lane.b32.xlu0 %v1156, 48
        %v1615 = vpop.permute.xlu0 %1614
        %1618 = vrot.lane.b32.xlu0 %v1267, 64
        %v1619 = vpop.permute.xlu0 %1618
        %1622 = vrot.lane.b32.xlu0 %v1378, 80
        %v1623 = vpop.permute.xlu0 %1622
        %1626 = vrot.lane.b32.xlu0 %v1489, 96
        %v1627 = vpop.permute.xlu0 %1626
        %1630 = vrot.lane.b32.xlu0 %v1600, 112
        %v1631 = vpop.permute.xlu0 %1630
        %v1633 = vsel %vm717, %v820, %v1607
        %vm1634 = vcmask 261120
        %v1635 = vsel %vm1634, %v1633, %v1611
        %vm1636 = vcmask 392192
        %v1637 = vsel %vm1636, %v1635, %v1615
        %vm1638 = vcmask 523264
        %v1639 = vsel %vm1638, %v1637, %v1619
        %vm1640 = vcmask 654336
        %v1641 = vsel %vm1640, %v1639, %v1623
        %vm1642 = vcmask 785408
        %v1643 = vsel %vm1642, %v1641, %v1627
        %vm1644 = vcmask 916480
        %v1645 = vsel %vm1644, %v1643, %v1631
        %v1646 = vpack.c.bf16 %v1645, %v1645
        %v1647 = vld [vmem:[#allocation4] sm:$0xf]
        %v1648 = vld [vmem:[#allocation4 + $0x4] sm:$0xf]
        %v1649 = vld [vmem:[#allocation4 + $0x8] sm:$0xf]
        %v1650 = vld [vmem:[#allocation4 + $0xc] sm:$0xf]
        %v1651 = vld [vmem:[#allocation4 + $0x10] sm:$0xf]
        %v1652 = vld [vmem:[#allocation4 + $0x14] sm:$0xf]
        %v1653 = vld [vmem:[#allocation4 + $0x18] sm:$0xf]
        %v1654 = vld [vmem:[#allocation4 + $0x1c] sm:$0xf]
        %v1655 = vld [vmem:[#allocation4 + $0x20] sm:$0xf]
        %v1656 = vld [vmem:[#allocation4 + $0x24] sm:$0xf]
        %v1657 = vld [vmem:[#allocation4 + $0x28] sm:$0xf]
        %v1658 = vld [vmem:[#allocation4 + $0x2c] sm:$0xf]
        %v1659 = vld [vmem:[#allocation4 + $0x30] sm:$0xf]
        %v1660 = vld [vmem:[#allocation4 + $0x34] sm:$0xf]
        %v1661 = vld [vmem:[#allocation4 + $0x38] sm:$0xf]
        %v1662 = vld [vmem:[#allocation4 + $0x3c] sm:$0xf]
        %v1663 = vld [vmem:[%s8] sm:$0x1]
        %v1665 = vlaneseq
        %v1666 = vshrl.u32 %v1665, 7
        %v1667 = vsub.s32 0, %v1666
        %v1668 = vrot.slane %v1663, %v1667
        %v1686 = vunpack.c.l.b16 %v1647
        %v1687 = vunpack.c.l.b16 %v1648
        %v1688 = vunpack.c.l.b16 %v1649
        %v1689 = vunpack.c.l.b16 %v1650
        %v1690 = vunpack.c.l.b16 %v1651
        %v1691 = vunpack.c.l.b16 %v1652
        %v1692 = vunpack.c.l.b16 %v1653
        %v1693 = vunpack.c.l.b16 %v1654
        %v1694 = vunpack.c.l.b16 %v1655
        %v1695 = vunpack.c.l.b16 %v1656
        %v1696 = vunpack.c.l.b16 %v1657
        %v1697 = vunpack.c.l.b16 %v1658
        %v1698 = vunpack.c.l.b16 %v1659
        %v1699 = vunpack.c.l.b16 %v1660
        %v1700 = vunpack.c.l.b16 %v1661
        %v1701 = vunpack.c.l.b16 %v1662
        %v1702 = vpack.c.b16 %v1687, %v1686
        %v1703 = vpack.c.b16 %v1689, %v1688
        %v1704 = vpack.c.b16 %v1691, %v1690
        %v1705 = vpack.c.b16 %v1693, %v1692
        %v1706 = vpack.c.b16 %v1695, %v1694
        %v1707 = vpack.c.b16 %v1697, %v1696
        %v1708 = vpack.c.b16 %v1699, %v1698
        %v1709 = vpack.c.b16 %v1701, %v1700
        %1718 = vmatprep.subr.bf16.mxu0 0
        %1719 = vmatpush1.bf16.msra.mxu0 %v1702
        %1720 = vmatprep.subr.bf16.mxu0 0
        %1721 = vmatpush1.bf16.msra.mxu0 %v1703
        %1722 = vmatprep.subr.bf16.mxu0 0
        %1723 = vmatpush1.bf16.msra.mxu0 %v1704
        %1724 = vmatprep.subr.bf16.mxu0 0
        %1725 = vmatpush1.bf16.msra.mxu0 %v1705
        %1726 = vmatprep.subr.bf16.mxu0 0
        %1727 = vmatpush1.bf16.msra.mxu0 %v1706
        %1728 = vmatprep.subr.bf16.mxu0 0
        %1729 = vmatpush1.bf16.msra.mxu0 %v1707
        %1730 = vmatprep.subr.bf16.mxu0 0
        %1731 = vmatpush1.bf16.msra.mxu0 %v1708
        %1732 = vmatprep.subr.bf16.mxu0 0
        %1733 = vmatpush1.bf16.msra.mxu0 %v1709
        %1734 = vmatprep.subr.bf16.mxu0 0
        %1735 = vmatpush1.bf16.msra.mxu0 0
        %1736 = vmatprep.subr.bf16.mxu0 0
        %1737 = vmatpush1.bf16.msra.mxu0 0
        %1738 = vmatprep.subr.bf16.mxu0 0
        %1739 = vmatpush1.bf16.msra.mxu0 0
        %1740 = vmatprep.subr.bf16.mxu0 0
        %1741 = vmatpush1.bf16.msra.mxu0 0
        %1742 = vmatprep.subr.bf16.mxu0 0
        %1743 = vmatpush1.bf16.msra.mxu0 0
        %1744 = vmatprep.subr.bf16.mxu0 0
        %1745 = vmatpush1.bf16.msra.mxu0 0
        %1746 = vmatprep.subr.bf16.mxu0 0
        %1747 = vmatpush1.bf16.msra.mxu0 0
        %1748 = vmatprep.subr.bf16.mxu0 0
        %1749 = vmatpush1.bf16.msra.mxu0 0
        %1750 = vmatprep.mubr.bf16.mxu0 0
        %1751 = vmatmul.mubr.bf16.gmra.mrb[0].mxu0 %v1646
        %v1752 = vpop.f32.mrb[0].mxu0
        %v1753 = vadd.f32 %v1668, %v1752
        %v1754 = vpop.f32.mrb[0].mxu0
        %v1755 = vpop.f32.mrb[0].mxu0
        %v1756 = vpop.f32.mrb[0].mxu0
        %1757 = vdwg.mxu0
        %v1758 = vadd.f32 %v447, %v1753
        %v1759 = vld [vmem:[%s9] sm:$0x1]
        %v1760 = vld [vmem:[%s10] sm:$0x1]
        %1761 = vadd.xlane.f32.xlu0 %v1758
        %v1762 = vpop.xlane.xlu0 %1761
        %v1763 = vrcp.pop 128.0
        %v1764 = vmul.f32 %v1762, %v1763
        %v1765 = vsub.f32 %v1758, %v1764
        %v1766 = vmul.f32 %v1765, %v1765
        %1767 = vadd.xlane.f32.xlu0 %v1766
        %v1768 = vpop.xlane.xlu0 %1767
        %v1769 = vmul.f32 %v1768, %v1763
        %v1770 = vadd.f32 %v1769, 1e-05
        %v1771 = vrsqrt.pop %v1770
        %v1772 = vmul.f32 %v1765, %v1771
        %v1774 = vlaneseq
        %v1775 = vshrl.u32 %v1774, 7
        %v1776 = vsub.s32 0, %v1775
        %v1777 = vrot.slane %v1759, %v1776
        %v1779 = vmul.f32 %v1772, %v1777
        %v1781 = vlaneseq
        %v1782 = vshrl.u32 %v1781, 7
        %v1783 = vsub.s32 0, %v1782
        %v1784 = vrot.slane %v1760, %v1783
        %v1786 = vadd.f32 %v1779, %v1784
        %1787 = vst [vmem:[%s445] sm:$0xff] %v1786
        %p1788 = scmp.lt.s32.totalorder %s24, 1
        %s1789 = scalar_select %p1788, %s24, 1
        %s1790 = smul.addr %s1789, 8
        %s1791 = scalar_lea.vmem %s11, %s1790
        // Predicated region
        $region73: #{decoder_layer_forward.3} parent=63 // pred_check
          %p1792 = pneg %p288
        $region74: #{decoder_layer_forward.3} parent=63 // pred_check_branch
          %1794 = sbr.rel (%p1792) target = $region76
        $region75: #{decoder_layer_forward.3} parent=63 // pred_region
          _
        $region76: #{decoder_layer_forward.3} parent=63 // pred_fallthru
          _
      $region64: #{decoder_layer_forward.3} parent=5 // pred_fallthru
        _
      %p1795 = scmp.le.s32.totalorder 2, %s19
      // Predicated region
      $region77: #{decoder_layer_forward.3} parent=5 // pred_check
        %p1796 = pneg %p1795
      $region78: #{decoder_layer_forward.3} parent=5 // pred_check_branch
        %1798 = sbr.rel (%p1796) target = $region80
      $region79: #{decoder_layer_forward.3} parent=5 // pred_region
        %s1799 = ssub.s32 %s19, 2
        // Predicated region
        $region81: #{decoder_layer_forward.3} parent=79 // pred_check
          %p1800 = pneg %p294
        $region82: #{decoder_layer_forward.3} parent=79 // pred_check_branch
          %1802 = sbr.rel (%p1800) target = $region84
        $region83: #{decoder_layer_forward.3} parent=79 // pred_region
          %p1803 = scmp.lt.s32.totalorder %s25, 1
          %s1804 = scalar_select %p1803, %s25, 1
          %s1805 = smul.addr %s1804, 8
          %s1806 = scalar_lea.vmem %s11, %s1805
        $region84: #{decoder_layer_forward.3} parent=79 // pred_fallthru
          _
      $region80: #{decoder_layer_forward.3} parent=5 // pred_fallthru
        _
    $region6: #{decoder_layer_forward.3} parent=1 // loop_footer
      %s23 = sadd.s32 1, %s19
    $region7: #{decoder_layer_forward.3} parent=1 // loop_footer_branch
      %18 = sbr.rel target = $region3
    $region8: #{decoder_layer_forward.3} parent=1 // loop_exit
      _
    %1807 = vsyncpa [#allocation3], 1
    %s1808 = scalar_lea.sflag [#allocation3], 1
    %1809 = vsyncpa %s1808, 1
    %1810 = vsyncpa [#allocation5], 1

// kernel: decoder_layer_forward.4
$region0: #{decoder_layer_forward.4}
  #allocation0 [shape = 'u32[]', space=smem, size = 0x4, offset = 0x4, fixed_abs, tag = 'smem constant byte address 0x4 - core index']
  #allocation1 [shape = 'u32[144,128]{1,0:T(1,128)}', space=vmem, size = 0x12000, scoped, tag = 'internal scratch']
  %s0 = inlined_call_operand.vmem [shape: f32[2,8,128], index: 0, kind: input, shape index: {}]
  %s1 = inlined_call_operand.hbm [shape: f32[2,16,128], index: 1, kind: input, shape index: {}]
  %s2 = inlined_call_operand.vmem [shape: s32[2,8,16], index: 2, kind: input, shape index: {}]
  %s3 = inlined_call_operand.vmem [shape: bf16[128,128], index: 3, kind: input, shape index: {}]
  %s4 = inlined_call_operand.vmem [shape: f32[1,128], index: 4, kind: input, shape index: {}]
  %s5 = inlined_call_operand.vmem [shape: bf16[128,256], index: 5, kind: input, shape index: {}]
  %s6 = inlined_call_operand.vmem [shape: f32[1,256], index: 6, kind: input, shape index: {}]
  %s7 = inlined_call_operand.hbm [shape: bf16[128,128], index: 7, kind: input, shape index: {}]
  %s8 = inlined_call_operand.hbm [shape: f32[1,128], index: 8, kind: input, shape index: {}]
  %s9 = inlined_call_operand.hbm [shape: f32[1,128], index: 9, kind: input, shape index: {}]
  %s10 = inlined_call_operand.hbm [shape: f32[1,128], index: 10, kind: input, shape index: {}]
  %s11 = inlined_call_operand.vmem [shape: f32[2,8,128], index: 11, kind: output, shape index: {}]
  %s12 = sld [smem:[#allocation0]]
  $region97: #{decoder_layer_forward.4} parent=0
    _
  %s14 = ssub.s32 1, %s12
  %s15 = scalar_select 0, %s14, %s12
  $region1: #{decoder_layer_forward.4} parent=0
    #allocation2 [shape = 'u8[16384]{0}', space=vmem, size = 0x4000, scoped, tag = 'input window, operand 1']
    #allocation3 [shape = 's32[2]{0}', space=sflag, size = 0x8, scoped, tag = 'scoped memory for decoder_layer_forward.4']
    #allocation4 [shape = 'u8[32768]{0}', space=vmem, size = 0x8000, scoped, tag = 'input window, operand 7, single buffered']
    #allocation5 [shape = 's32[1]{0}', space=sflag, size = 0x4, scoped, tag = 'scoped memory for decoder_layer_forward.4']
    #allocation6 [shape = 'u8[512]{0}', space=vmem, size = 0x400, scoped, tag = 'input window, operand 8, single buffered']
    #allocation7 [shape = 'u8[512]{0}', space=vmem, size = 0x400, scoped, tag = 'input window, operand 9, single buffered']
    #allocation8 [shape = 's32[1]{0}', space=sflag, size = 0x4, scoped, tag = 'scoped memory for decoder_layer_forward.4']
    #allocation9 [shape = 'u8[512]{0}', space=vmem, size = 0x400, scoped, tag = 'input window, operand 10, single buffered']
    %16 = vsyncpa [#allocation3], 0
    %s17 = scalar_lea.sflag [#allocation3], 1
    %18 = vsyncpa %s17, 0
    %19 = vsyncpa [#allocation5], 0
    %20 = vsyncpa [#allocation8], 0
    loop: start=0, step=1, limit=4
    $region2: #{decoder_layer_forward.4} parent=1 // loop_pre_header
      _
    $region3: #{decoder_layer_forward.4} parent=1 // loop_header
      %s22 = sphi 0, %s26
      %p23 = scmp.ge.s32.totalorder %s22, 4
      %s32 = sphi 0, %s34
      %s35 = sphi 0, %s32
      %s36 = sphi 0, %s35
      %s52 = sphi 0, %s36
      %s58 = sphi 0, %s60
      %s61 = sphi 0, %s58
      %s62 = sphi 0, %s61
      %s78 = sphi 0, %s62
      %s84 = sphi 0, %s86
      %s87 = sphi 0, %s84
      %s88 = sphi 0, %s87
      %s104 = sphi 0, %s88
      %s108 = sphi 0, %s108
      %s110 = sphi 0, %s108
      %s111 = sphi 0, %s110
      %s125 = sphi 0, %s111
      %s129 = sphi 0, %s129
      %s131 = sphi 0, %s129
      %s132 = sphi 0, %s131
      %s146 = sphi 0, %s132
      %s150 = sphi 0, %s150
      %s152 = sphi 0, %s150
      %s153 = sphi 0, %s152
      %s167 = sphi 0, %s153
      %s171 = sphi 0, %s171
      %s173 = sphi 0, %s171
      %s174 = sphi 0, %s173
      %s188 = sphi 0, %s174
      %s192 = sphi 0, %s192
      %s194 = sphi 0, %s192
      %s195 = sphi 0, %s194
      %s209 = sphi 0, %s195
      %s213 = sphi 0, %s213
      %s215 = sphi 0, %s213
      %s216 = sphi 0, %s215
      %s230 = sphi 0, %s216
      %s234 = sphi 0, %s234
      %s236 = sphi 0, %s234
      %s237 = sphi 0, %s236
      %s251 = sphi 0, %s237
      %s255 = sphi 0, %s255
      %s257 = sphi 0, %s255
      %s258 = sphi 0, %s257
      %s272 = sphi 0, %s258
      %s278 = sphi 0, %s280
      %s281 = sphi 0, %s278
      %s282 = sphi 0, %s281
      %s298 = sphi 0, %s282
    $region4: #{decoder_layer_forward.4} parent=1 // loop_header_branch
      %25 = sbr.rel (%p23) target = $region8
    $region5: #{decoder_layer_forward.4} parent=1 // loop_body
      %s27 = ssub.s32 %s22, 1
      %s28 = ssub.s32 %s22, 2
      %s29 = sadd.s32 %s22, 1
      %s30 = ssub.s32 %s22, %s29
      %p31 = scmp.eq.s32.totalorder %s30, 0
      %s33 = sadd.s32 %s32, 1
      %s34 = scalar_select %p31, %s32, %s33
      %p37 = pneg %p31
      %p38 = scmp.eq.s32.totalorder %s22, 1
      %p39 = por %p37, %p38
      %p40 = scmp.ne.s32.totalorder %s32, %s35
      %p41 = scmp.eq.s32.totalorder %s22, 0
      %p42 = por %p40, %p41
      %p43 = scmp.ne.s32.totalorder %s32, %s35
      %p44 = scmp.eq.s32.totalorder %s27, 1
      %p45 = por %p43, %p44
      %p46 = scmp.ne.s32.totalorder %s35, %s36
      %p47 = scmp.eq.s32.totalorder %s27, 0
      %p48 = por %p46, %p47
      %p49 = scmp.ne.s32.totalorder %s35, %s36
      %p50 = scmp.eq.s32.totalorder %s28, 1
      %p51 = por %p49, %p50
      %p53 = scmp.ne.s32.totalorder %s36, %s52
      %p54 = scmp.eq.s32.totalorder %s28, 0
      %p55 = por %p53, %p54
      %s56 = ssub.s32 %s22, %s29
      %p57 = scmp.eq.s32.totalorder %s56, 0
      %s59 = sadd.s32 %s58, 1
      %s60 = scalar_select %p57, %s58, %s59
      %p63 = pneg %p57
      %p64 = scmp.eq.s32.totalorder %s22, 1
      %p65 = por %p63, %p64
      %p66 = scmp.ne.s32.totalorder %s58, %s61
      %p67 = scmp.eq.s32.totalorder %s22, 0
      %p68 = por %p66, %p67
      %p69 = scmp.ne.s32.totalorder %s58, %s61
      %p70 = scmp.eq.s32.totalorder %s27, 1
      %p71 = por %p69, %p70
      %p72 = scmp.ne.s32.totalorder %s61, %s62
      %p73 = scmp.eq.s32.totalorder %s27, 0
      %p74 = por %p72, %p73
      %p75 = scmp.ne.s32.totalorder %s61, %s62
      %p76 = scmp.eq.s32.totalorder %s28, 1
      %p77 = por %p75, %p76
      %p79 = scmp.ne.s32.totalorder %s62, %s78
      %p80 = scmp.eq.s32.totalorder %s28, 0
      %p81 = por %p79, %p80
      %s82 = ssub.s32 %s22, %s29
      %p83 = scmp.eq.s32.totalorder %s82, 0
      %s85 = sadd.s32 %s84, 1
      %s86 = scalar_select %p83, %s84, %s85
      %p89 = pneg %p83
      %p90 = scmp.eq.s32.totalorder %s22, 1
      %p91 = por %p89, %p90
      %p92 = scmp.ne.s32.totalorder %s84, %s87
      %p93 = scmp.eq.s32.totalorder %s22, 0
      %p94 = por %p92, %p93
      %p95 = scmp.ne.s32.totalorder %s84, %s87
      %p96 = scmp.eq.s32.totalorder %s27, 1
      %p97 = por %p95, %p96
      %p98 = scmp.ne.s32.totalorder %s87, %s88
      %p99 = scmp.eq.s32.totalorder %s27, 0
      %p100 = por %p98, %p99
      %p101 = scmp.ne.s32.totalorder %s87, %s88
      %p102 = scmp.eq.s32.totalorder %s28, 1
      %p103 = por %p101, %p102
      %p105 = scmp.ne.s32.totalorder %s88, %s104
      %p106 = scmp.eq.s32.totalorder %s28, 0
      %p107 = por %p105, %p106
      %s109 = sadd.s32 %s108, 1
      %p112 = scmp.eq.s32.totalorder %s22, 1
      %p113 = scmp.ne.s32.totalorder %s108, %s110
      %p114 = scmp.eq.s32.totalorder %s22, 0
      %p115 = por %p113, %p114
      %p116 = scmp.ne.s32.totalorder %s108, %s110
      %p117 = scmp.eq.s32.totalorder %s27, 1
      %p118 = por %p116, %p117
      %p119 = scmp.ne.s32.totalorder %s110, %s111
      %p120 = scmp.eq.s32.totalorder %s27, 0
      %p121 = por %p119, %p120
      %p122 = scmp.ne.s32.totalorder %s110, %s111
      %p123 = scmp.eq.s32.totalorder %s28, 1
      %p124 = por %p122, %p123
      %p126 = scmp.ne.s32.totalorder %s111, %s125
      %p127 = scmp.eq.s32.totalorder %s28, 0
      %p128 = por %p126, %p127
      %s130 = sadd.s32 %s129, 1
      %p133 = scmp.eq.s32.totalorder %s22, 1
      %p134 = scmp.ne.s32.totalorder %s129, %s131
      %p135 = scmp.eq.s32.totalorder %s22, 0
      %p136 = por %p134, %p135
      %p137 = scmp.ne.s32.totalorder %s129, %s131
      %p138 = scmp.eq.s32.totalorder %s27, 1
      %p139 = por %p137, %p138
      %p140 = scmp.ne.s32.totalorder %s131, %s132
      %p141 = scmp.eq.s32.totalorder %s27, 0
      %p142 = por %p140, %p141
      %p143 = scmp.ne.s32.totalorder %s131, %s132
      %p144 = scmp.eq.s32.totalorder %s28, 1
      %p145 = por %p143, %p144
      %p147 = scmp.ne.s32.totalorder %s132, %s146
      %p148 = scmp.eq.s32.totalorder %s28, 0
      %p149 = por %p147, %p148
      %s151 = sadd.s32 %s150, 1
      %p154 = scmp.eq.s32.totalorder %s22, 1
      %p155 = scmp.ne.s32.totalorder %s150, %s152
      %p156 = scmp.eq.s32.totalorder %s22, 0
      %p157 = por %p155, %p156
      %p158 = scmp.ne.s32.totalorder %s150, %s152
      %p159 = scmp.eq.s32.totalorder %s27, 1
      %p160 = por %p158, %p159
      %p161 = scmp.ne.s32.totalorder %s152, %s153
      %p162 = scmp.eq.s32.totalorder %s27, 0
      %p163 = por %p161, %p162
      %p164 = scmp.ne.s32.totalorder %s152, %s153
      %p165 = scmp.eq.s32.totalorder %s28, 1
      %p166 = por %p164, %p165
      %p168 = scmp.ne.s32.totalorder %s153, %s167
      %p169 = scmp.eq.s32.totalorder %s28, 0
      %p170 = por %p168, %p169
      %s172 = sadd.s32 %s171, 1
      %p175 = scmp.eq.s32.totalorder %s22, 1
      %p176 = scmp.ne.s32.totalorder %s171, %s173
      %p177 = scmp.eq.s32.totalorder %s22, 0
      %p178 = por %p176, %p177
      %p179 = scmp.ne.s32.totalorder %s171, %s173
      %p180 = scmp.eq.s32.totalorder %s27, 1
      %p181 = por %p179, %p180
      %p182 = scmp.ne.s32.totalorder %s173, %s174
      %p183 = scmp.eq.s32.totalorder %s27, 0
      %p184 = por %p182, %p183
      %p185 = scmp.ne.s32.totalorder %s173, %s174
      %p186 = scmp.eq.s32.totalorder %s28, 1
      %p187 = por %p185, %p186
      %p189 = scmp.ne.s32.totalorder %s174, %s188
      %p190 = scmp.eq.s32.totalorder %s28, 0
      %p191 = por %p189, %p190
      %s193 = sadd.s32 %s192, 1
      %p196 = scmp.eq.s32.totalorder %s22, 1
      %p197 = scmp.ne.s32.totalorder %s192, %s194
      %p198 = scmp.eq.s32.totalorder %s22, 0
      %p199 = por %p197, %p198
      %p200 = scmp.ne.s32.totalorder %s192, %s194
      %p201 = scmp.eq.s32.totalorder %s27, 1
      %p202 = por %p200, %p201
      %p203 = scmp.ne.s32.totalorder %s194, %s195
      %p204 = scmp.eq.s32.totalorder %s27, 0
      %p205 = por %p203, %p204
      %p206 = scmp.ne.s32.totalorder %s194, %s195
      %p207 = scmp.eq.s32.totalorder %s28, 1
      %p208 = por %p206, %p207
      %p210 = scmp.ne.s32.totalorder %s195, %s209
      %p211 = scmp.eq.s32.totalorder %s28, 0
      %p212 = por %p210, %p211
      %s214 = sadd.s32 %s213, 1
      %p217 = scmp.eq.s32.totalorder %s22, 1
      %p218 = scmp.ne.s32.totalorder %s213, %s215
      %p219 = scmp.eq.s32.totalorder %s22, 0
      %p220 = por %p218, %p219
      %p221 = scmp.ne.s32.totalorder %s213, %s215
      %p222 = scmp.eq.s32.totalorder %s27, 1
      %p223 = por %p221, %p222
      %p224 = scmp.ne.s32.totalorder %s215, %s216
      %p225 = scmp.eq.s32.totalorder %s27, 0
      %p226 = por %p224, %p225
      %p227 = scmp.ne.s32.totalorder %s215, %s216
      %p228 = scmp.eq.s32.totalorder %s28, 1
      %p229 = por %p227, %p228
      %p231 = scmp.ne.s32.totalorder %s216, %s230
      %p232 = scmp.eq.s32.totalorder %s28, 0
      %p233 = por %p231, %p232
      %s235 = sadd.s32 %s234, 1
      %p238 = scmp.eq.s32.totalorder %s22, 1
      %p239 = scmp.ne.s32.totalorder %s234, %s236
      %p240 = scmp.eq.s32.totalorder %s22, 0
      %p241 = por %p239, %p240
      %p242 = scmp.ne.s32.totalorder %s234, %s236
      %p243 = scmp.eq.s32.totalorder %s27, 1
      %p244 = por %p242, %p243
      %p245 = scmp.ne.s32.totalorder %s236, %s237
      %p246 = scmp.eq.s32.totalorder %s27, 0
      %p247 = por %p245, %p246
      %p248 = scmp.ne.s32.totalorder %s236, %s237
      %p249 = scmp.eq.s32.totalorder %s28, 1
      %p250 = por %p248, %p249
      %p252 = scmp.ne.s32.totalorder %s237, %s251
      %p253 = scmp.eq.s32.totalorder %s28, 0
      %p254 = por %p252, %p253
      %s256 = sadd.s32 %s255, 1
      %p259 = scmp.eq.s32.totalorder %s22, 1
      %p260 = scmp.ne.s32.totalorder %s255, %s257
      %p261 = scmp.eq.s32.totalorder %s22, 0
      %p262 = por %p260, %p261
      %p263 = scmp.ne.s32.totalorder %s255, %s257
      %p264 = scmp.eq.s32.totalorder %s27, 1
      %p265 = por %p263, %p264
      %p266 = scmp.ne.s32.totalorder %s257, %s258
      %p267 = scmp.eq.s32.totalorder %s27, 0
      %p268 = por %p266, %p267
      %p269 = scmp.ne.s32.totalorder %s257, %s258
      %p270 = scmp.eq.s32.totalorder %s28, 1
      %p271 = por %p269, %p270
      %p273 = scmp.ne.s32.totalorder %s258, %s272
      %p274 = scmp.eq.s32.totalorder %s28, 0
      %p275 = por %p273, %p274
      %s276 = ssub.s32 %s22, %s29
      %p277 = scmp.eq.s32.totalorder %s276, 0
      %s279 = sadd.s32 %s278, 1
      %s280 = scalar_select %p277, %s278, %s279
      %p283 = pneg %p277
      %p284 = scmp.eq.s32.totalorder %s22, 1
      %p285 = por %p283, %p284
      %p286 = scmp.ne.s32.totalorder %s278, %s281
      %p287 = scmp.eq.s32.totalorder %s22, 0
      %p288 = por %p286, %p287
      %p289 = scmp.ne.s32.totalorder %s278, %s281
      %p290 = scmp.eq.s32.totalorder %s27, 1
      %p291 = por %p289, %p290
      %p292 = scmp.ne.s32.totalorder %s281, %s282
      %p293 = scmp.eq.s32.totalorder %s27, 0
      %p294 = por %p292, %p293
      %p295 = scmp.ne.s32.totalorder %s281, %s282
      %p296 = scmp.eq.s32.totalorder %s28, 1
      %p297 = por %p295, %p296
      %p299 = scmp.ne.s32.totalorder %s282, %s298
      %p300 = scmp.eq.s32.totalorder %s28, 0
      %p301 = por %p299, %p300
      %p302 = scmp.le.s32.totalorder 1, %s22
      %p303 = scmp.lt.s32.totalorder %s22, 3
      %p304 = pnand %p302, %p303
      %p305 = pneg %p304
      // Predicated region
      $region9: #{decoder_layer_forward.4} parent=5 // pred_check
        _
      $region10: #{decoder_layer_forward.4} parent=5 // pred_check_branch
        %307 = sbr.rel (%p304) target = $region12
      $region11: #{decoder_layer_forward.4} parent=5 // pred_region
        %s308 = ssub.s32 %s22, 1
        // Predicated region
        $region13: #{decoder_layer_forward.4} parent=11 // pred_check
          %p309 = pneg %p121
        $region14: #{decoder_layer_forward.4} parent=11 // pred_check_branch
          %311 = sbr.rel (%p309) target = $region16
        $region15: #{decoder_layer_forward.4} parent=11 // pred_region
          _
        $region16: #{decoder_layer_forward.4} parent=11 // pred_fallthru
          _
        // Predicated region
        $region17: #{decoder_layer_forward.4} parent=11 // pred_check
          %p312 = pneg %p142
        $region18: #{decoder_layer_forward.4} parent=11 // pred_check_branch
          %314 = sbr.rel (%p312) target = $region20
        $region19: #{decoder_layer_forward.4} parent=11 // pred_region
          _
        $region20: #{decoder_layer_forward.4} parent=11 // pred_fallthru
          _
        // Predicated region
        $region21: #{decoder_layer_forward.4} parent=11 // pred_check
          %p315 = pneg %p163
        $region22: #{decoder_layer_forward.4} parent=11 // pred_check_branch
          %317 = sbr.rel (%p315) target = $region24
        $region23: #{decoder_layer_forward.4} parent=11 // pred_region
          _
        $region24: #{decoder_layer_forward.4} parent=11 // pred_fallthru
          _
        // Predicated region
        $region25: #{decoder_layer_forward.4} parent=11 // pred_check
          %p318 = pneg %p184
        $region26: #{decoder_layer_forward.4} parent=11 // pred_check_branch
          %320 = sbr.rel (%p318) target = $region28
        $region27: #{decoder_layer_forward.4} parent=11 // pred_region
          _
        $region28: #{decoder_layer_forward.4} parent=11 // pred_fallthru
          _
        // Predicated region
        $region29: #{decoder_layer_forward.4} parent=11 // pred_check
          %p321 = pneg %p205
        $region30: #{decoder_layer_forward.4} parent=11 // pred_check_branch
          %323 = sbr.rel (%p321) target = $region32
        $region31: #{decoder_layer_forward.4} parent=11 // pred_region
          %s325 = ssub.s32 1024, 1024
          %326 = vsyncadd [#allocation5], %s325
          %s327 = sshll.u32 [#allocation4], 4
          %s328 = int_to_ptr.vmem [resolvable:$true] %s327
          %333 = dma.hbm_to_vmem [thread:$0]  %s7, 1024, %s328, [#allocation5], 64, 64, 4
        $region32: #{decoder_layer_forward.4} parent=11 // pred_fallthru
          _
        // Predicated region
        $region33: #{decoder_layer_forward.4} parent=11 // pred_check
          %p334 = pneg %p226
        $region34: #{decoder_layer_forward.4} parent=11 // pred_check_branch
          %336 = sbr.rel (%p334) target = $region36
        $region35: #{decoder_layer_forward.4} parent=11 // pred_region
          %s338 = ssub.s32 16, 16
          %339 = vsyncadd [#allocation5], %s338
          %s341 = sshll.u32 [#allocation6], 4
          %s342 = int_to_ptr.vmem [resolvable:$true] %s341
          %344 = dma.hbm_to_vmem [thread:$0]  %s8, 16, %s342, [#allocation5]
        $region36: #{decoder_layer_forward.4} parent=11 // pred_fallthru
          _
        // Predicated region
        $region37: #{decoder_layer_forward.4} parent=11 // pred_check
          %p345 = pneg %p247
        $region38: #{decoder_layer_forward.4} parent=11 // pred_check_branch
          %347 = sbr.rel (%p345) target = $region40
        $region39: #{decoder_layer_forward.4} parent=11 // pred_region
          %s349 = ssub.s32 16, 16
          %350 = vsyncadd [#allocation8], %s349
          %s352 = sshll.u32 [#allocation7], 4
          %s353 = int_to_ptr.vmem [resolvable:$true] %s352
          %355 = dma.hbm_to_vmem [thread:$0]  %s9, 16, %s353, [#allocation8]
        $region40: #{decoder_layer_forward.4} parent=11 // pred_fallthru
          _
        // Predicated region
        $region41: #{decoder_layer_forward.4} parent=11 // pred_check
          %p356 = pneg %p268
        $region42: #{decoder_layer_forward.4} parent=11 // pred_check_branch
          %358 = sbr.rel (%p356) target = $region44
        $region43: #{decoder_layer_forward.4} parent=11 // pred_region
          %s360 = ssub.s32 16, 16
          %361 = vsyncadd [#allocation8], %s360
          %s363 = sshll.u32 [#allocation9], 4
          %s364 = int_to_ptr.vmem [resolvable:$true] %s363
          %366 = dma.hbm_to_vmem [thread:$0]  %s10, 16, %s364, [#allocation8]
        $region44: #{decoder_layer_forward.4} parent=11 // pred_fallthru
          _
      $region12: #{decoder_layer_forward.4} parent=5 // pred_fallthru
        _
      %p367 = scmp.lt.s32.totalorder %s22, 2
      // Predicated region
      $region45: #{decoder_layer_forward.4} parent=5 // pred_check
        %p368 = pneg %p367
      $region46: #{decoder_layer_forward.4} parent=5 // pred_check_branch
        %370 = sbr.rel (%p368) target = $region48
      $region47: #{decoder_layer_forward.4} parent=5 // pred_region
        // Predicated region
        $region49: #{decoder_layer_forward.4} parent=47 // pred_check
          %p371 = pneg %p42
        $region50: #{decoder_layer_forward.4} parent=47 // pred_check_branch
          %373 = sbr.rel (%p371) target = $region52
        $region51: #{decoder_layer_forward.4} parent=47 // pred_region
          %p374 = scmp.lt.s32.totalorder %s22, 1
          %s375 = scalar_select %p374, %s22, 1
          %s376 = smul.addr %s375, 8
          %s377 = scalar_lea.vmem %s0, %s376
        $region52: #{decoder_layer_forward.4} parent=47 // pred_fallthru
          _
        // Predicated region
        $region53: #{decoder_layer_forward.4} parent=47 // pred_check
          %p378 = pneg %p68
        $region54: #{decoder_layer_forward.4} parent=47 // pred_check_branch
          %380 = sbr.rel (%p378) target = $region56
        $region55: #{decoder_layer_forward.4} parent=47 // pred_region
          %s381 = sand.u32 %s58, 1
          %s382 = scalar_lea.sflag [#allocation3], %s381
          %s383 = sand.u32 %s58, 1
          %s384 = smul.addr %s383, 16
          %s385 = scalar_lea.vmem [#allocation2], %s384
          %s387 = ssub.s32 256, 256
          %388 = vsyncadd %s382, %s387
          %s389 = smul.addr %s22, 2
          %s390 = smul.addr %s389, 128
          %s391 = scalar_lea.hbm %s1, %s390
          %s392 = sshll.u32 %s385, 4
          %s393 = int_to_ptr.vmem [resolvable:$true] %s392
          %398 = dma.hbm_to_vmem [thread:$0]  %s391, 256, %s393, %s382, 128, 128, 8
        $region56: #{decoder_layer_forward.4} parent=47 // pred_fallthru
          _
        // Predicated region
        $region57: #{decoder_layer_forward.4} parent=47 // pred_check
          %p399 = pneg %p94
        $region58: #{decoder_layer_forward.4} parent=47 // pred_check_branch
          %401 = sbr.rel (%p399) target = $region60
        $region59: #{decoder_layer_forward.4} parent=47 // pred_region
          %p402 = scmp.lt.s32.totalorder %s22, 1
          %s403 = scalar_select %p402, %s22, 1
          %s404 = smul.addr %s403, 8
          %s405 = scalar_lea.vmem %s2, %s404
        $region60: #{decoder_layer_forward.4} parent=47 // pred_fallthru
          _
      $region48: #{decoder_layer_forward.4} parent=5 // pred_fallthru
        _
      %p406 = scmp.le.s32.totalorder 1, %s22
      %p407 = scmp.lt.s32.totalorder %s22, 3
      %p408 = pnand %p406, %p407
      %p409 = pneg %p408
      // Predicated region
      $region61: #{decoder_layer_forward.4} parent=5 // pred_check
        _
      $region62: #{decoder_layer_forward.4} parent=5 // pred_check_branch
        %411 = sbr.rel (%p408) target = $region64
      $region63: #{decoder_layer_forward.4} parent=5 // pred_region
        %s412 = ssub.s32 %s22, 1
        %s413 = sand.u32 %s61, 1
        %s414 = scalar_lea.sflag [#allocation3], %s413
        %s415 = sand.u32 %s61, 1
        %s416 = smul.addr %s415, 16
        %s417 = scalar_lea.vmem [#allocation2], %s416
        // Predicated region
        $region65: #{decoder_layer_forward.4} parent=63 // pred_check
          %p418 = pneg %p74
        $region66: #{decoder_layer_forward.4} parent=63 // pred_check_branch
          %420 = sbr.rel (%p418) target = $region68
        $region67: #{decoder_layer_forward.4} parent=63 // pred_region
          %421 = dma.done %s414, 256
        $region68: #{decoder_layer_forward.4} parent=63 // pred_fallthru
          _
        // Predicated region
        $region69: #{decoder_layer_forward.4} parent=63 // pred_check
          %p422 = pneg %p205
        $region70: #{decoder_layer_forward.4} parent=63 // pred_check_branch
          %424 = sbr.rel (%p422) target = $region72
        $region71: #{decoder_layer_forward.4} parent=63 // pred_region
          %425 = dma.done [#allocation5], 1024
        $region72: #{decoder_layer_forward.4} parent=63 // pred_fallthru
          _
        // Predicated region
        $region73: #{decoder_layer_forward.4} parent=63 // pred_check
          %p426 = pneg %p226
        $region74: #{decoder_layer_forward.4} parent=63 // pred_check_branch
          %428 = sbr.rel (%p426) target = $region76
        $region75: #{decoder_layer_forward.4} parent=63 // pred_region
          %429 = dma.done [#allocation5], 16
        $region76: #{decoder_layer_forward.4} parent=63 // pred_fallthru
          _
        // Predicated region
        $region77: #{decoder_layer_forward.4} parent=63 // pred_check
          %p430 = pneg %p247
        $region78: #{decoder_layer_forward.4} parent=63 // pred_check_branch
          %432 = sbr.rel (%p430) target = $region80
        $region79: #{decoder_layer_forward.4} parent=63 // pred_region
          %433 = dma.done [#allocation8], 16
        $region80: #{decoder_layer_forward.4} parent=63 // pred_fallthru
          _
        // Predicated region
        $region81: #{decoder_layer_forward.4} parent=63 // pred_check
          %p434 = pneg %p268
        $region82: #{decoder_layer_forward.4} parent=63 // pred_check_branch
          %436 = sbr.rel (%p434) target = $region84
        $region83: #{decoder_layer_forward.4} parent=63 // pred_region
          %437 = dma.done [#allocation8], 16
        $region84: #{decoder_layer_forward.4} parent=63 // pred_fallthru
          _
        %p438 = scmp.lt.s32.totalorder %s27, 1
        %s439 = scalar_select %p438, %s27, 1
        %s440 = smul.addr %s439, 8
        %s441 = scalar_lea.vmem %s0, %s440
        %p442 = pneg %p48
        %p443 = pneg %p45
        %s444 = sand.u32 %s61, 1
        %s445 = scalar_lea.sflag [#allocation3], %s444
        %s446 = sand.u32 %s61, 1
        %s447 = smul.addr %s446, 16
        %s448 = scalar_lea.vmem [#allocation2], %s447
        %p449 = pneg %p74
        %p450 = pneg %p71
        %p451 = scmp.lt.s32.totalorder %s27, 1
        %s452 = scalar_select %p451, %s27, 1
        %s453 = smul.addr %s452, 8
        %s454 = scalar_lea.vmem %s2, %s453
        %p455 = pneg %p100
        %p456 = pneg %p97
        %p457 = pneg %p121
        %p458 = pneg %p118
        %p459 = pneg %p142
        %p460 = pneg %p139
        %p461 = pneg %p163
        %p462 = pneg %p160
        %p463 = pneg %p184
        %p464 = pneg %p181
        %p465 = pneg %p205
        %p466 = pneg %p202
        %p467 = pneg %p226
        %p468 = pneg %p223
        %p469 = pneg %p247
        %p470 = pneg %p244
        %p471 = pneg %p268
        %p472 = pneg %p265
        %p473 = pneg %p294
        %p474 = pneg %p291
        %p475 = scmp.lt.s32.totalorder %s27, 1
        %s476 = scalar_select %p475, %s27, 1
        %s477 = smul.addr %s476, 8
        %s478 = scalar_lea.vmem %s11, %s477
        %p479 = scmp.lt.s32.totalorder %s27, 1
        %s480 = scalar_select %p479, %s27, 1
        %s481 = smul.addr %s480, 8
        %s482 = scalar_lea.vmem %s0, %s481
        %p483 = scmp.lt.s32.totalorder %s27, 1
        %s484 = scalar_select %p483, %s27, 1
        %s485 = smul.addr %s484, 8
        %s486 = scalar_lea.vmem %s2, %s485
        %p487 = scmp.lt.s32.totalorder %s27, 1
        %s488 = scalar_select %p487, %s27, 1
        %s489 = smul.addr %s488, 8
        %s490 = scalar_lea.vmem %s11, %s489
        %v492 = vld [vmem:[%s482] sm:$0xff]
        %v493 = vld [vmem:[%s417] sm:$0xff]
        %v494 = vld [vmem:[%s417 + $0x8] sm:$0xff]
        %v495 = vld [vmem:[%s486] sm:$0xff]
        %vm496 = vcmp.eq.s32.totalorder %v495, 0
        %v497 = vpack.c.bf16 %v492, %v492
        %v498 = vld [vmem:[%s3] sm:$0xf]
        %v499 = vld [vmem:[%s3 + $0x4] sm:$0xf]
        %v500 = vld [vmem:[%s3 + $0x8] sm:$0xf]
        %v501 = vld [vmem:[%s3 + $0xc] sm:$0xf]
        %v502 = vld [vmem:[%s3 + $0x10] sm:$0xf]
        %v503 = vld [vmem:[%s3 + $0x14] sm:$0xf]
        %v504 = vld [vmem:[%s3 + $0x18] sm:$0xf]
        %v505 = vld [vmem:[%s3 + $0x1c] sm:$0xf]
        %v506 = vld [vmem:[%s3 + $0x20] sm:$0xf]
        %v507 = vld [vmem:[%s3 + $0x24] sm:$0xf]
        %v508 = vld [vmem:[%s3 + $0x28] sm:$0xf]
        %v509 = vld [vmem:[%s3 + $0x2c] sm:$0xf]
        %v510 = vld [vmem:[%s3 + $0x30] sm:$0xf]
        %v511 = vld [vmem:[%s3 + $0x34] sm:$0xf]
        %v512 = vld [vmem:[%s3 + $0x38] sm:$0xf]
        %v513 = vld [vmem:[%s3 + $0x3c] sm:$0xf]
        %v514 = vld [vmem:[%s4] sm:$0x1]
        %v516 = vlaneseq
        %v517 = vshrl.u32 %v516, 7
        %v518 = vsub.s32 0, %v517
        %v519 = vrot.slane %v514, %v518
        %v537 = vunpack.c.l.b16 %v498
        %v538 = vunpack.c.l.b16 %v499
        %v539 = vunpack.c.l.b16 %v500
        %v540 = vunpack.c.l.b16 %v501
        %v541 = vunpack.c.l.b16 %v502
        %v542 = vunpack.c.l.b16 %v503
        %v543 = vunpack.c.l.b16 %v504
        %v544 = vunpack.c.l.b16 %v505
        %v545 = vunpack.c.l.b16 %v506
        %v546 = vunpack.c.l.b16 %v507
        %v547 = vunpack.c.l.b16 %v508
        %v548 = vunpack.c.l.b16 %v509
        %v549 = vunpack.c.l.b16 %v510
        %v550 = vunpack.c.l.b16 %v511
        %v551 = vunpack.c.l.b16 %v512
        %v552 = vunpack.c.l.b16 %v513
        %v553 = vpack.c.b16 %v538, %v537
        %v554 = vpack.c.b16 %v540, %v539
        %v555 = vpack.c.b16 %v542, %v541
        %v556 = vpack.c.b16 %v544, %v543
        %v557 = vpack.c.b16 %v546, %v545
        %v558 = vpack.c.b16 %v548, %v547
        %v559 = vpack.c.b16 %v550, %v549
        %v560 = vpack.c.b16 %v552, %v551
        %569 = vmatprep.subr.bf16.mxu0 0
        %570 = vmatpush1.bf16.msra.mxu0 %v553
        %571 = vmatprep.subr.bf16.mxu0 0
        %572 = vmatpush1.bf16.msra.mxu0 %v554
        %573 = vmatprep.subr.bf16.mxu0 0
        %574 = vmatpush1.bf16.msra.mxu0 %v555
        %575 = vmatprep.subr.bf16.mxu0 0
        %576 = vmatpush1.bf16.msra.mxu0 %v556
        %577 = vmatprep.subr.bf16.mxu0 0
        %578 = vmatpush1.bf16.msra.mxu0 %v557
        %579 = vmatprep.subr.bf16.mxu0 0
        %580 = vmatpush1.bf16.msra.mxu0 %v558
        %581 = vmatprep.subr.bf16.mxu0 0
        %582 = vmatpush1.bf16.msra.mxu0 %v559
        %583 = vmatprep.subr.bf16.mxu0 0
        %584 = vmatpush1.bf16.msra.mxu0 %v560
        %585 = vmatprep.subr.bf16.mxu0 0
        %586 = vmatpush1.bf16.msra.mxu0 0
        %587 = vmatprep.subr.bf16.mxu0 0
        %588 = vmatpush1.bf16.msra.mxu0 0
        %589 = vmatprep.subr.bf16.mxu0 0
        %590 = vmatpush1.bf16.msra.mxu0 0
        %591 = vmatprep.subr.bf16.mxu0 0
        %592 = vmatpush1.bf16.msra.mxu0 0
        %593 = vmatprep.subr.bf16.mxu0 0
        %594 = vmatpush1.bf16.msra.mxu0 0
        %595 = vmatprep.subr.bf16.mxu0 0
        %596 = vmatpush1.bf16.msra.mxu0 0
        %597 = vmatprep.subr.bf16.mxu0 0
        %598 = vmatpush1.bf16.msra.mxu0 0
        %599 = vmatprep.subr.bf16.mxu0 0
        %600 = vmatpush1.bf16.msra.mxu0 0
        %601 = vmatprep.mubr.bf16.mxu0 0
        %602 = vmatmul.mubr.bf16.gmra.mrb[0].mxu0 %v497
        %v603 = vpop.f32.mrb[0].mxu0
        %v604 = vadd.f32 %v519, %v603
        %v605 = vpop.f32.mrb[0].mxu0
        %v606 = vpop.f32.mrb[0].mxu0
        %v607 = vpop.f32.mrb[0].mxu0
        %608 = vdwg.mxu0
        %v609 = vpack.c.bf16 %v494, %v493
        %v610 = vld [vmem:[%s5] sm:$0xff]
        %v611 = vld [vmem:[%s5 + $0x8] sm:$0xff]
        %v612 = vld [vmem:[%s5 + $0x10] sm:$0xff]
        %v613 = vld [vmem:[%s5 + $0x18] sm:$0xff]
        %v614 = vld [vmem:[%s5 + $0x20] sm:$0xff]
        %v615 = vld [vmem:[%s5 + $0x28] sm:$0xff]
        %v616 = vld [vmem:[%s5 + $0x30] sm:$0xff]
        %v617 = vld [vmem:[%s5 + $0x38] sm:$0xff]
        %v618 = vld [vmem:[%s5 + $0x40] sm:$0xff]
        %v619 = vld [vmem:[%s5 + $0x48] sm:$0xff]
        %v620 = vld [vmem:[%s5 + $0x50] sm:$0xff]
        %v621 = vld [vmem:[%s5 + $0x58] sm:$0xff]
        %v622 = vld [vmem:[%s5 + $0x60] sm:$0xff]
        %v623 = vld [vmem:[%s5 + $0x68] sm:$0xff]
        %v624 = vld [vmem:[%s5 + $0x70] sm:$0xff]
        %v625 = vld [vmem:[%s5 + $0x78] sm:$0xff]
        %v626 = vld [vmem:[%s6] sm:$0x3]
        %v628 = vlaneseq
        %v629 = vshrl.u32 %v628, 7
        %v630 = vsub.s32 0, %v629
        %v631 = vrot.slane %v626, %v630
        %v632 = vlaneseq
        %v633 = vshrl.u32 %v632, 7
        %v634 = vsub.s32 1, %v633
        %v635 = vrot.slane %v626, %v634
        %v654 = vunpack.c.l.b16 %v610
        %v655 = vunpack.c.h.b16 %v610
        %v656 = vunpack.c.l.b16 %v611
        %v657 = vunpack.c.h.b16 %v611
        %v658 = vunpack.c.l.b16 %v612
        %v659 = vunpack.c.h.b16 %v612
        %v660 = vunpack.c.l.b16 %v613
        %v661 = vunpack.c.h.b16 %v613
        %v662 = vunpack.c.l.b16 %v614
        %v663 = vunpack.c.h.b16 %v614
        %v664 = vunpack.c.l.b16 %v615
        %v665 = vunpack.c.h.b16 %v615
        %v666 = vunpack.c.l.b16 %v616
        %v667 = vunpack.c.h.b16 %v616
        %v668 = vunpack.c.l.b16 %v617
        %v669 = vunpack.c.h.b16 %v617
        %v670 = vunpack.c.l.b16 %v618
        %v671 = vunpack.c.h.b16 %v618
        %v672 = vunpack.c.l.b16 %v619
        %v673 = vunpack.c.h.b16 %v619
        %v674 = vunpack.c.l.b16 %v620
        %v675 = vunpack.c.h.b16 %v620
        %v676 = vunpack.c.l.b16 %v621
        %v677 = vunpack.c.h.b16 %v621
        %v678 = vunpack.c.l.b16 %v622
        %v679 = vunpack.c.h.b16 %v622
        %v680 = vunpack.c.l.b16 %v623
        %v681 = vunpack.c.h.b16 %v623
        %v682 = vunpack.c.l.b16 %v624
        %v683 = vunpack.c.h.b16 %v624
        %v684 = vunpack.c.l.b16 %v625
        %v685 = vunpack.c.h.b16 %v625
        %v686 = vpack.c.b16 %v656, %v654
        %v687 = vpack.c.b16 %v657, %v655
        %v688 = vpack.c.b16 %v660, %v658
        %v689 = vpack.c.b16 %v661, %v659
        %v690 = vpack.c.b16 %v664, %v662
        %v691 = vpack.c.b16 %v665, %v663
        %v692 = vpack.c.b16 %v668, %v666
        %v693 = vpack.c.b16 %v669, %v667
        %v694 = vpack.c.b16 %v672, %v670
        %v695 = vpack.c.b16 %v673, %v671
        %v696 = vpack.c.b16 %v676, %v674
        %v697 = vpack.c.b16 %v677, %v675
        %v698 = vpack.c.b16 %v680, %v678
        %v699 = vpack.c.b16 %v681, %v679
        %v700 = vpack.c.b16 %v684, %v682
        %v701 = vpack.c.b16 %v685, %v683
        %718 = vmatprep.subr.bf16.mxu0 %v687
        %719 = vmatpush1.bf16.msra.mxu0 %v686
        %720 = vmatprep.subr.bf16.mxu0 %v689
        %721 = vmatpush1.bf16.msra.mxu0 %v688
        %722 = vmatprep.subr.bf16.mxu0 %v691
        %723 = vmatpush1.bf16.msra.mxu0 %v690
        %724 = vmatprep.subr.bf16.mxu0 %v693
        %725 = vmatpush1.bf16.msra.mxu0 %v692
        %726 = vmatprep.subr.bf16.mxu0 %v695
        %727 = vmatpush1.bf16.msra.mxu0 %v694
        %728 = vmatprep.subr.bf16.mxu0 %v697
        %729 = vmatpush1.bf16.msra.mxu0 %v696
        %730 = vmatprep.subr.bf16.mxu0 %v699
        %731 = vmatpush1.bf16.msra.mxu0 %v698
        %732 = vmatprep.subr.bf16.mxu0 %v701
        %733 = vmatpush1.bf16.msra.mxu0 %v700
        %734 = vmatprep.subr.bf16.mxu0 0
        %735 = vmatpush1.bf16.msra.mxu0 0
        %736 = vmatprep.subr.bf16.mxu0 0
        %737 = vmatpush1.bf16.msra.mxu0 0
        %738 = vmatprep.subr.bf16.mxu0 0
        %739 = vmatpush1.bf16.msra.mxu0 0
        %740 = vmatprep.subr.bf16.mxu0 0
        %741 = vmatpush1.bf16.msra.mxu0 0
        %742 = vmatprep.subr.bf16.mxu0 0
        %743 = vmatpush1.bf16.msra.mxu0 0
        %744 = vmatprep.subr.bf16.mxu0 0
        %745 = vmatpush1.bf16.msra.mxu0 0
        %746 = vmatprep.subr.bf16.mxu0 0
        %747 = vmatpush1.bf16.msra.mxu0 0
        %748 = vmatprep.subr.bf16.mxu0 0
        %749 = vmatpush1.bf16.msra.mxu0 0
        %750 = vmatprep.mubr.bf16.mxu0 0
        %751 = vmatmul.mubr.bf16.gmra.mrb[0].mxu0 %v609
        %v752 = vpop.f32.mrb[0].mxu0
        %v753 = vadd.f32 %v631, %v752
        %v754 = vpop.f32.mrb[0].mxu0
        %v755 = vadd.f32 %v635, %v754
        %v756 = vpop.f32.mrb[0].mxu0
        %v757 = vadd.f32 %v631, %v756
        %v758 = vpop.f32.mrb[0].mxu0
        %v759 = vadd.f32 %v635, %v758
        %760 = vdwg.mxu0
        %v761 = vmul.f32 %v604, 0.25
        %v762 = vpack.c.bf16 %v761, %v761
        %v763 = vpack.c.bf16 %v757, %v753
        %v764 = vpack.c.bf16 %v759, %v755
        %vm765 = vcmask 130048
        %v767 = vsel %vm765, %v762, 0
        %v770 = vsel %vm765, %v763, 0
        %772 = vmatprep.subr.bf16.mxu0 0
        %773 = vmatpush1.bf16.xpose.msra.mxu0 %v770
        %774 = vmatprep.subr.bf16.mxu0 0
        %775 = vmatpush1.bf16.xpose.msra.mxu0 0
        %776 = vmatprep.subr.bf16.mxu0 0
        %777 = vmatpush1.bf16.xpose.msra.mxu0 0
        %778 = vmatprep.subr.bf16.mxu0 0
        %779 = vmatpush1.bf16.xpose.msra.mxu0 0
        %780 = vmatprep.subr.bf16.mxu0 0
        %781 = vmatpush1.bf16.xpose.msra.mxu0 0
        %782 = vmatprep.subr.bf16.mxu0 0
        %783 = vmatpush1.bf16.xpose.msra.mxu0 0
        %784 = vmatprep.subr.bf16.mxu0 0
        %785 = vmatpush1.bf16.xpose.msra.mxu0 0
        %786 = vmatprep.subr.bf16.mxu0 0
        %787 = vmatpush1.bf16.xpose.msra.mxu0 0
        %788 = vmatprep.subr.bf16.mxu0 0
        %789 = vmatpush1.bf16.xpose.msra.mxu0 0
        %790 = vmatprep.subr.bf16.mxu0 0
        %791 = vmatpush1.bf16.xpose.msra.mxu0 0
        %792 = vmatprep.subr.bf16.mxu0 0
        %793 = vmatpush1.bf16.xpose.msra.mxu0 0
        %794 = vmatprep.subr.bf16.mxu0 0
        %795 = vmatpush1.bf16.xpose.msra.mxu0 0
        %796 = vmatprep.subr.bf16.mxu0 0
        %797 = vmatpush1.bf16.xpose.msra.mxu0 0
        %798 = vmatprep.subr.bf16.mxu0 0
        %799 = vmatpush1.bf16.xpose.msra.mxu0 0
        %800 = vmatprep.subr.bf16.mxu0 0
        %801 = vmatpush1.bf16.xpose.msra.mxu0 0
        %802 = vmatprep.subr.bf16.mxu0 0
        %803 = vmatpush1.bf16.xpose.msra.mxu0 0
        %804 = vmatprep.mubr.bf16.mxu0 0
        %805 = vmatmul.mubr.bf16.gmra.mrb[0].mxu0 %v767
        %v806 = vpop.f32.mrb[0].mxu0
        %v807 = vadd.f32 0.0, %v806
        %v808 = vpop.f32.mrb[0].mxu0
        %v809 = vpop.f32.mrb[0].mxu0
        %v810 = vpop.f32.mrb[0].mxu0
        %811 = vdwg.mxu0
        %v812 = vsel %vm496, -1e+09, %v807
        %v813 = vsel %vm765, %v812, -inf
        %814 = vmax.xlane.f32.xlu0 %v813
        %v815 = vpop.xlane.xlu0 %814
        %v816 = vsub.f32 %v812, %v815
        %v817 = vmul.f32 %v816, 1.442695
        %v818 = vpow.pop %v817
        %v819 = vsel %vm765, %v818, 0.0
        %820 = vadd.xlane.f32.xlu0 %v819
        %v821 = vpop.xlane.xlu0 %820
        %v822 = vrcp.pop %v821
        %v823 = vmul.f32 %v818, %v822
        %v824 = vpack.c.bf16 %v823, %v823
        %v826 = vsel %vm765, %v824, 0
        %828 = vmatprep.subr.bf16.mxu0 0
        %829 = vmatpush1.bf16.msra.mxu0 %v764
        %830 = vmatprep.subr.bf16.mxu0 0
        %831 = vmatpush1.bf16.msra.mxu0 0
        %832 = vmatprep.subr.bf16.mxu0 0
        %833 = vmatpush1.bf16.msra.mxu0 0
        %834 = vmatprep.subr.bf16.mxu0 0
        %835 = vmatpush1.bf16.msra.mxu0 0
        %836 = vmatprep.subr.bf16.mxu0 0
        %837 = vmatpush1.bf16.msra.mxu0 0
        %838 = vmatprep.subr.bf16.mxu0 0
        %839 = vmatpush1.bf16.msra.mxu0 0
        %840 = vmatprep.subr.bf16.mxu0 0
        %841 = vmatpush1.bf16.msra.mxu0 0
        %842 = vmatprep.subr.bf16.mxu0 0
        %843 = vmatpush1.bf16.msra.mxu0 0
        %844 = vmatprep.subr.bf16.mxu0 0
        %845 = vmatpush1.bf16.msra.mxu0 0
        %846 = vmatprep.subr.bf16.mxu0 0
        %847 = vmatpush1.bf16.msra.mxu0 0
        %848 = vmatprep.subr.bf16.mxu0 0
        %849 = vmatpush1.bf16.msra.mxu0 0
        %850 = vmatprep.subr.bf16.mxu0 0
        %851 = vmatpush1.bf16.msra.mxu0 0
        %852 = vmatprep.subr.bf16.mxu0 0
        %853 = vmatpush1.bf16.msra.mxu0 0
        %854 = vmatprep.subr.bf16.mxu0 0
        %855 = vmatpush1.bf16.msra.mxu0 0
        %856 = vmatprep.subr.bf16.mxu0 0
        %857 = vmatpush1.bf16.msra.mxu0 0
        %858 = vmatprep.subr.bf16.mxu0 0
        %859 = vmatpush1.bf16.msra.mxu0 0
        %860 = vmatprep.mubr.bf16.mxu0 0
        %861 = vmatmul.mubr.bf16.gmra.mrb[0].mxu0 %v826
        %v862 = vpop.f32.mrb[0].mxu0
        %v863 = vadd.f32 0.0, %v862
        %v864 = vpop.f32.mrb[0].mxu0
        %v865 = vpop.f32.mrb[0].mxu0
        %v866 = vpop.f32.mrb[0].mxu0
        %867 = vdwg.mxu0
        %869 = vrot.lane.b32.xlu0 %v762, 112
        %v870 = vpop.permute.xlu0 %869
        %872 = vrot.lane.b32.xlu0 %v763, 112
        %v873 = vpop.permute.xlu0 %872
        %v875 = vsel %vm765, %v870, 0
        %v878 = vsel %vm765, %v873, 0
        %880 = vmatprep.subr.bf16.mxu0 0
        %881 = vmatpush1.bf16.xpose.msra.mxu0 %v878
        %882 = vmatprep.subr.bf16.mxu0 0
        %883 = vmatpush1.bf16.xpose.msra.mxu0 0
        %884 = vmatprep.subr.bf16.mxu0 0
        %885 = vmatpush1.bf16.xpose.msra.mxu0 0
        %886 = vmatprep.subr.bf16.mxu0 0
        %887 = vmatpush1.bf16.xpose.msra.mxu0 0
        %888 = vmatprep.subr.bf16.mxu0 0
        %889 = vmatpush1.bf16.xpose.msra.mxu0 0
        %890 = vmatprep.subr.bf16.mxu0 0
        %891 = vmatpush1.bf16.xpose.msra.mxu0 0
        %892 = vmatprep.subr.bf16.mxu0 0
        %893 = vmatpush1.bf16.xpose.msra.mxu0 0
        %894 = vmatprep.subr.bf16.mxu0 0
        %895 = vmatpush1.bf16.xpose.msra.mxu0 0
        %896 = vmatprep.subr.bf16.mxu0 0
        %897 = vmatpush1.bf16.xpose.msra.mxu0 0
        %898 = vmatprep.subr.bf16.mxu0 0
        %899 = vmatpush1.bf16.xpose.msra.mxu0 0
        %900 = vmatprep.subr.bf16.mxu0 0
        %901 = vmatpush1.bf16.xpose.msra.mxu0 0
        %902 = vmatprep.subr.bf16.mxu0 0
        %903 = vmatpush1.bf16.xpose.msra.mxu0 0
        %904 = vmatprep.subr.bf16.mxu0 0
        %905 = vmatpush1.bf16.xpose.msra.mxu0 0
        %906 = vmatprep.subr.bf16.mxu0 0
        %907 = vmatpush1.bf16.xpose.msra.mxu0 0
        %908 = vmatprep.subr.bf16.mxu0 0
        %909 = vmatpush1.bf16.xpose.msra.mxu0 0
        %910 = vmatprep.subr.bf16.mxu0 0
        %911 = vmatpush1.bf16.xpose.msra.mxu0 0
        %912 = vmatprep.mubr.bf16.mxu0 0
        %913 = vmatmul.mubr.bf16.gmra.mrb[0].mxu0 %v875
        %v914 = vpop.f32.mrb[0].mxu0
        %v915 = vadd.f32 0.0, %v914
        %v916 = vpop.f32.mrb[0].mxu0
        %v917 = vpop.f32.mrb[0].mxu0
        %v918 = vpop.f32.mrb[0].mxu0
        %919 = vdwg.mxu0
        %v920 = vsel %vm496, -1e+09, %v915
        %v921 = vsel %vm765, %v920, -inf
        %922 = vmax.xlane.f32.xlu0 %v921
        %v923 = vpop.xlane.xlu0 %922
        %v924 = vsub.f32 %v920, %v923
        %v925 = vmul.f32 %v924, 1.442695
        %v926 = vpow.pop %v925
        %v927 = vsel %vm765, %v926, 0.0
        %928 = vadd.xlane.f32.xlu0 %v927
        %v929 = vpop.xlane.xlu0 %928
        %v930 = vrcp.pop %v929
        %v931 = vmul.f32 %v926, %v930
        %v932 = vpack.c.bf16 %v931, %v931
        %934 = vrot.lane.b32.xlu0 %v764, 112
        %v935 = vpop.permute.xlu0 %934
        %v938 = vsel %vm765, %v932, 0
        %940 = vmatprep.subr.bf16.mxu0 0
        %941 = vmatpush1.bf16.msra.mxu0 %v935
        %942 = vmatprep.subr.bf16.mxu0 0
        %943 = vmatpush1.bf16.msra.mxu0 0
        %944 = vmatprep.subr.bf16.mxu0 0
        %945 = vmatpush1.bf16.msra.mxu0 0
        %946 = vmatprep.subr.bf16.mxu0 0
        %947 = vmatpush1.bf16.msra.mxu0 0
        %948 = vmatprep.subr.bf16.mxu0 0
        %949 = vmatpush1.bf16.msra.mxu0 0
        %950 = vmatprep.subr.bf16.mxu0 0
        %951 = vmatpush1.bf16.msra.mxu0 0
        %952 = vmatprep.subr.bf16.mxu0 0
        %953 = vmatpush1.bf16.msra.mxu0 0
        %954 = vmatprep.subr.bf16.mxu0 0
        %955 = vmatpush1.bf16.msra.mxu0 0
        %956 = vmatprep.subr.bf16.mxu0 0
        %957 = vmatpush1.bf16.msra.mxu0 0
        %958 = vmatprep.subr.bf16.mxu0 0
        %959 = vmatpush1.bf16.msra.mxu0 0
        %960 = vmatprep.subr.bf16.mxu0 0
        %961 = vmatpush1.bf16.msra.mxu0 0
        %962 = vmatprep.subr.bf16.mxu0 0
        %963 = vmatpush1.bf16.msra.mxu0 0
        %964 = vmatprep.subr.bf16.mxu0 0
        %965 = vmatpush1.bf16.msra.mxu0 0
        %966 = vmatprep.subr.bf16.mxu0 0
        %967 = vmatpush1.bf16.msra.mxu0 0
        %968 = vmatprep.subr.bf16.mxu0 0
        %969 = vmatpush1.bf16.msra.mxu0 0
        %970 = vmatprep.subr.bf16.mxu0 0
        %971 = vmatpush1.bf16.msra.mxu0 0
        %972 = vmatprep.mubr.bf16.mxu0 0
        %973 = vmatmul.mubr.bf16.gmra.mrb[0].mxu0 %v938
        %v974 = vpop.f32.mrb[0].mxu0
        %v975 = vadd.f32 0.0, %v974
        %v976 = vpop.f32.mrb[0].mxu0
        %v977 = vpop.f32.mrb[0].mxu0
        %v978 = vpop.f32.mrb[0].mxu0
        %979 = vdwg.mxu0
        %980 = vrot.lane.b32.xlu0 %v762, 96
        %v981 = vpop.permute.xlu0 %980
        %982 = vrot.lane.b32.xlu0 %v763, 96
        %v983 = vpop.permute.xlu0 %982
        %v985 = vsel %vm765, %v981, 0
        %v988 = vsel %vm765, %v983, 0
        %990 = vmatprep.subr.bf16.mxu0 0
        %991 = vmatpush1.bf16.xpose.msra.mxu0 %v988
        %992 = vmatprep.subr.bf16.mxu0 0
        %993 = vmatpush1.bf16.xpose.msra.mxu0 0
        %994 = vmatprep.subr.bf16.mxu0 0
        %995 = vmatpush1.bf16.xpose.msra.mxu0 0
        %996 = vmatprep.subr.bf16.mxu0 0
        %997 = vmatpush1.bf16.xpose.msra.mxu0 0
        %998 = vmatprep.subr.bf16.mxu0 0
        %999 = vmatpush1.bf16.xpose.msra.mxu0 0
        %1000 = vmatprep.subr.bf16.mxu0 0
        %1001 = vmatpush1.bf16.xpose.msra.mxu0 0
        %1002 = vmatprep.subr.bf16.mxu0 0
        %1003 = vmatpush1.bf16.xpose.msra.mxu0 0
        %1004 = vmatprep.subr.bf16.mxu0 0
        %1005 = vmatpush1.bf16.xpose.msra.mxu0 0
        %1006 = vmatprep.subr.bf16.mxu0 0
        %1007 = vmatpush1.bf16.xpose.msra.mxu0 0
        %1008 = vmatprep.subr.bf16.mxu0 0
        %1009 = vmatpush1.bf16.xpose.msra.mxu0 0
        %1010 = vmatprep.subr.bf16.mxu0 0
        %1011 = vmatpush1.bf16.xpose.msra.mxu0 0
        %1012 = vmatprep.subr.bf16.mxu0 0
        %1013 = vmatpush1.bf16.xpose.msra.mxu0 0
        %1014 = vmatprep.subr.bf16.mxu0 0
        %1015 = vmatpush1.bf16.xpose.msra.mxu0 0
        %1016 = vmatprep.subr.bf16.mxu0 0
        %1017 = vmatpush1.bf16.xpose.msra.mxu0 0
        %1018 = vmatprep.subr.bf16.mxu0 0
        %1019 = vmatpush1.bf16.xpose.msra.mxu0 0
        %1020 = vmatprep.subr.bf16.mxu0 0
        %1021 = vmatpush1.bf16.xpose.msra.mxu0 0
        %1022 = vmatprep.mubr.bf16.mxu0 0
        %1023 = vmatmul.mubr.bf16.gmra.mrb[0].mxu0 %v985
        %v1024 = vpop.f32.mrb[0].mxu0
        %v1025 = vadd.f32 0.0, %v1024
        %v1026 = vpop.f32.mrb[0].mxu0
        %v1027 = vpop.f32.mrb[0].mxu0
        %v1028 = vpop.f32.mrb[0].mxu0
        %1029 = vdwg.mxu0
        %v1030 = vsel %vm496, -1e+09, %v1025
        %v1031 = vsel %vm765, %v1030, -inf
        %1032 = vmax.xlane.f32.xlu0 %v1031
        %v1033 = vpop.xlane.xlu0 %1032
        %v1034 = vsub.f32 %v1030, %v1033
        %v1035 = vmul.f32 %v1034, 1.442695
        %v1036 = vpow.pop %v1035
        %v1037 = vsel %vm765, %v1036, 0.0
        %1038 = vadd.xlane.f32.xlu0 %v1037
        %v1039 = vpop.xlane.xlu0 %1038
        %v1040 = vrcp.pop %v1039
        %v1041 = vmul.f32 %v1036, %v1040
        %v1042 = vpack.c.bf16 %v1041, %v1041
        %1043 = vrot.lane.b32.xlu0 %v764, 96
        %v1044 = vpop.permute.xlu0 %1043
        %v1047 = vsel %vm765, %v1042, 0
        %1049 = vmatprep.subr.bf16.mxu0 0
        %1050 = vmatpush1.bf16.msra.mxu0 %v1044
        %1051 = vmatprep.subr.bf16.mxu0 0
        %1052 = vmatpush1.bf16.msra.mxu0 0
        %1053 = vmatprep.subr.bf16.mxu0 0
        %1054 = vmatpush1.bf16.msra.mxu0 0
        %1055 = vmatprep.subr.bf16.mxu0 0
        %1056 = vmatpush1.bf16.msra.mxu0 0
        %1057 = vmatprep.subr.bf16.mxu0 0
        %1058 = vmatpush1.bf16.msra.mxu0 0
        %1059 = vmatprep.subr.bf16.mxu0 0
        %1060 = vmatpush1.bf16.msra.mxu0 0
        %1061 = vmatprep.subr.bf16.mxu0 0
        %1062 = vmatpush1.bf16.msra.mxu0 0
        %1063 = vmatprep.subr.bf16.mxu0 0
        %1064 = vmatpush1.bf16.msra.mxu0 0
        %1065 = vmatprep.subr.bf16.mxu0 0
        %1066 = vmatpush1.bf16.msra.mxu0 0
        %1067 = vmatprep.subr.bf16.mxu0 0
        %1068 = vmatpush1.bf16.msra.mxu0 0
        %1069 = vmatprep.subr.bf16.mxu0 0
        %1070 = vmatpush1.bf16.msra.mxu0 0
        %1071 = vmatprep.subr.bf16.mxu0 0
        %1072 = vmatpush1.bf16.msra.mxu0 0
        %1073 = vmatprep.subr.bf16.mxu0 0
        %1074 = vmatpush1.bf16.msra.mxu0 0
        %1075 = vmatprep.subr.bf16.mxu0 0
        %1076 = vmatpush1.bf16.msra.mxu0 0
        %1077 = vmatprep.subr.bf16.mxu0 0
        %1078 = vmatpush1.bf16.msra.mxu0 0
        %1079 = vmatprep.subr.bf16.mxu0 0
        %1080 = vmatpush1.bf16.msra.mxu0 0
        %1081 = vmatprep.mubr.bf16.mxu0 0
        %1082 = vmatmul.mubr.bf16.gmra.mrb[0].mxu0 %v1047
        %v1083 = vpop.f32.mrb[0].mxu0
        %v1084 = vadd.f32 0.0, %v1083
        %v1085 = vpop.f32.mrb[0].mxu0
        %v1086 = vpop.f32.mrb[0].mxu0
        %v1087 = vpop.f32.mrb[0].mxu0
        %1088 = vdwg.mxu0
        %1089 = vrot.lane.b32.xlu0 %v762, 80
        %v1090 = vpop.permute.xlu0 %1089
        %1091 = vrot.lane.b32.xlu0 %v763, 80
        %v1092 = vpop.permute.xlu0 %1091
        %v1094 = vsel %vm765, %v1090, 0
        %v1097 = vsel %vm765, %v1092, 0
        %1099 = vmatprep.subr.bf16.mxu0 0
        %1100 = vmatpush1.bf16.xpose.msra.mxu0 %v1097
        %1101 = vmatprep.subr.bf16.mxu0 0
        %1102 = vmatpush1.bf16.xpose.msra.mxu0 0
        %1103 = vmatprep.subr.bf16.mxu0 0
        %1104 = vmatpush1.bf16.xpose.msra.mxu0 0
        %1105 = vmatprep.subr.bf16.mxu0 0
        %1106 = vmatpush1.bf16.xpose.msra.mxu0 0
        %1107 = vmatprep.subr.bf16.mxu0 0
        %1108 = vmatpush1.bf16.xpose.msra.mxu0 0
        %1109 = vmatprep.subr.bf16.mxu0 0
        %1110 = vmatpush1.bf16.xpose.msra.mxu0 0
        %1111 = vmatprep.subr.bf16.mxu0 0
        %1112 = vmatpush1.bf16.xpose.msra.mxu0 0
        %1113 = vmatprep.subr.bf16.mxu0 0
        %1114 = vmatpush1.bf16.xpose.msra.mxu0 0
        %1115 = vmatprep.subr.bf16.mxu0 0
        %1116 = vmatpush1.bf16.xpose.msra.mxu0 0
        %1117 = vmatprep.subr.bf16.mxu0 0
        %1118 = vmatpush1.bf16.xpose.msra.mxu0 0
        %1119 = vmatprep.subr.bf16.mxu0 0
        %1120 = vmatpush1.bf16.xpose.msra.mxu0 0
        %1121 = vmatprep.subr.bf16.mxu0 0
        %1122 = vmatpush1.bf16.xpose.msra.mxu0 0
        %1123 = vmatprep.subr.bf16.mxu0 0
        %1124 = vmatpush1.bf16.xpose.msra.mxu0 0
        %1125 = vmatprep.subr.bf16.mxu0 0
        %1126 = vmatpush1.bf16.xpose.msra.mxu0 0
        %1127 = vmatprep.subr.bf16.mxu0 0
        %1128 = vmatpush1.bf16.xpose.msra.mxu0 0
        %1129 = vmatprep.subr.bf16.mxu0 0
        %1130 = vmatpush1.bf16.xpose.msra.mxu0 0
        %1131 = vmatprep.mubr.bf16.mxu0 0
        %1132 = vmatmul.mubr.bf16.gmra.mrb[0].mxu0 %v1094
        %v1133 = vpop.f32.mrb[0].mxu0
        %v1134 = vadd.f32 0.0, %v1133
        %v1135 = vpop.f32.mrb[0].mxu0
        %v1136 = vpop.f32.mrb[0].mxu0
        %v1137 = vpop.f32.mrb[0].mxu0
        %1138 = vdwg.mxu0
        %v1139 = vsel %vm496, -1e+09, %v1134
        %v1140 = vsel %vm765, %v1139, -inf
        %1141 = vmax.xlane.f32.xlu0 %v1140
        %v1142 = vpop.xlane.xlu0 %1141
        %v1143 = vsub.f32 %v1139, %v1142
        %v1144 = vmul.f32 %v1143, 1.442695
        %v1145 = vpow.pop %v1144
        %v1146 = vsel %vm765, %v1145, 0.0
        %1147 = vadd.xlane.f32.xlu0 %v1146
        %v1148 = vpop.xlane.xlu0 %1147
        %v1149 = vrcp.pop %v1148
        %v1150 = vmul.f32 %v1145, %v1149
        %v1151 = vpack.c.bf16 %v1150, %v1150
        %1152 = vrot.lane.b32.xlu0 %v764, 80
        %v1153 = vpop.permute.xlu0 %1152
        %v1156 = vsel %vm765, %v1151, 0
        %1158 = vmatprep.subr.bf16.mxu0 0
        %1159 = vmatpush1.bf16.msra.mxu0 %v1153
        %1160 = vmatprep.subr.bf16.mxu0 0
        %1161 = vmatpush1.bf16.msra.mxu0 0
        %1162 = vmatprep.subr.bf16.mxu0 0
        %1163 = vmatpush1.bf16.msra.mxu0 0
        %1164 = vmatprep.subr.bf16.mxu0 0
        %1165 = vmatpush1.bf16.msra.mxu0 0
        %1166 = vmatprep.subr.bf16.mxu0 0
        %1167 = vmatpush1.bf16.msra.mxu0 0
        %1168 = vmatprep.subr.bf16.mxu0 0
        %1169 = vmatpush1.bf16.msra.mxu0 0
        %1170 = vmatprep.subr.bf16.mxu0 0
        %1171 = vmatpush1.bf16.msra.mxu0 0
        %1172 = vmatprep.subr.bf16.mxu0 0
        %1173 = vmatpush1.bf16.msra.mxu0 0
        %1174 = vmatprep.subr.bf16.mxu0 0
        %1175 = vmatpush1.bf16.msra.mxu0 0
        %1176 = vmatprep.subr.bf16.mxu0 0
        %1177 = vmatpush1.bf16.msra.mxu0 0
        %1178 = vmatprep.subr.bf16.mxu0 0
        %1179 = vmatpush1.bf16.msra.mxu0 0
        %1180 = vmatprep.subr.bf16.mxu0 0
        %1181 = vmatpush1.bf16.msra.mxu0 0
        %1182 = vmatprep.subr.bf16.mxu0 0
        %1183 = vmatpush1.bf16.msra.mxu0 0
        %1184 = vmatprep.subr.bf16.mxu0 0
        %1185 = vmatpush1.bf16.msra.mxu0 0
        %1186 = vmatprep.subr.bf16.mxu0 0
        %1187 = vmatpush1.bf16.msra.mxu0 0
        %1188 = vmatprep.subr.bf16.mxu0 0
        %1189 = vmatpush1.bf16.msra.mxu0 0
        %1190 = vmatprep.mubr.bf16.mxu0 0
        %1191 = vmatmul.mubr.bf16.gmra.mrb[0].mxu0 %v1156
        %v1192 = vpop.f32.mrb[0].mxu0
        %v1193 = vadd.f32 0.0, %v1192
        %v1194 = vpop.f32.mrb[0].mxu0
        %v1195 = vpop.f32.mrb[0].mxu0
        %v1196 = vpop.f32.mrb[0].mxu0
        %1197 = vdwg.mxu0
        %1198 = vrot.lane.b32.xlu0 %v762, 64
        %v1199 = vpop.permute.xlu0 %1198
        %1200 = vrot.lane.b32.xlu0 %v763, 64
        %v1201 = vpop.permute.xlu0 %1200
        %v1203 = vsel %vm765, %v1199, 0
        %v1206 = vsel %vm765, %v1201, 0
        %1208 = vmatprep.subr.bf16.mxu0 0
        %1209 = vmatpush1.bf16.xpose.msra.mxu0 %v1206
        %1210 = vmatprep.subr.bf16.mxu0 0
        %1211 = vmatpush1.bf16.xpose.msra.mxu0 0
        %1212 = vmatprep.subr.bf16.mxu0 0
        %1213 = vmatpush1.bf16.xpose.msra.mxu0 0
        %1214 = vmatprep.subr.bf16.mxu0 0
        %1215 = vmatpush1.bf16.xpose.msra.mxu0 0
        %1216 = vmatprep.subr.bf16.mxu0 0
        %1217 = vmatpush1.bf16.xpose.msra.mxu0 0
        %1218 = vmatprep.subr.bf16.mxu0 0
        %1219 = vmatpush1.bf16.xpose.msra.mxu0 0
        %1220 = vmatprep.subr.bf16.mxu0 0
        %1221 = vmatpush1.bf16.xpose.msra.mxu0 0
        %1222 = vmatprep.subr.bf16.mxu0 0
        %1223 = vmatpush1.bf16.xpose.msra.mxu0 0
        %1224 = vmatprep.subr.bf16.mxu0 0
        %1225 = vmatpush1.bf16.xpose.msra.mxu0 0
        %1226 = vmatprep.subr.bf16.mxu0 0
        %1227 = vmatpush1.bf16.xpose.msra.mxu0 0
        %1228 = vmatprep.subr.bf16.mxu0 0
        %1229 = vmatpush1.bf16.xpose.msra.mxu0 0
        %1230 = vmatprep.subr.bf16.mxu0 0
        %1231 = vmatpush1.bf16.xpose.msra.mxu0 0
        %1232 = vmatprep.subr.bf16.mxu0 0
        %1233 = vmatpush1.bf16.xpose.msra.mxu0 0
        %1234 = vmatprep.subr.bf16.mxu0 0
        %1235 = vmatpush1.bf16.xpose.msra.mxu0 0
        %1236 = vmatprep.subr.bf16.mxu0 0
        %1237 = vmatpush1.bf16.xpose.msra.mxu0 0
        %1238 = vmatprep.subr.bf16.mxu0 0
        %1239 = vmatpush1.bf16.xpose.msra.mxu0 0
        %1240 = vmatprep.mubr.bf16.mxu0 0
        %1241 = vmatmul.mubr.bf16.gmra.mrb[0].mxu0 %v1203
        %v1242 = vpop.f32.mrb[0].mxu0
        %v1243 = vadd.f32 0.0, %v1242
        %v1244 = vpop.f32.mrb[0].mxu0
        %v1245 = vpop.f32.mrb[0].mxu0
        %v1246 = vpop.f32.mrb[0].mxu0
        %1247 = vdwg.mxu0
        %v1248 = vsel %vm496, -1e+09, %v1243
        %v1249 = vsel %vm765, %v1248, -inf
        %1250 = vmax.xlane.f32.xlu0 %v1249
        %v1251 = vpop.xlane.xlu0 %1250
        %v1252 = vsub.f32 %v1248, %v1251
        %v1253 = vmul.f32 %v1252, 1.442695
        %v1254 = vpow.pop %v1253
        %v1255 = vsel %vm765, %v1254, 0.0
        %1256 = vadd.xlane.f32.xlu0 %v1255
        %v1257 = vpop.xlane.xlu0 %1256
        %v1258 = vrcp.pop %v1257
        %v1259 = vmul.f32 %v1254, %v1258
        %v1260 = vpack.c.bf16 %v1259, %v1259
        %1261 = vrot.lane.b32.xlu0 %v764, 64
        %v1262 = vpop.permute.xlu0 %1261
        %v1265 = vsel %vm765, %v1260, 0
        %1267 = vmatprep.subr.bf16.mxu0 0
        %1268 = vmatpush1.bf16.msra.mxu0 %v1262
        %1269 = vmatprep.subr.bf16.mxu0 0
        %1270 = vmatpush1.bf16.msra.mxu0 0
        %1271 = vmatprep.subr.bf16.mxu0 0
        %1272 = vmatpush1.bf16.msra.mxu0 0
        %1273 = vmatprep.subr.bf16.mxu0 0
        %1274 = vmatpush1.bf16.msra.mxu0 0
        %1275 = vmatprep.subr.bf16.mxu0 0
        %1276 = vmatpush1.bf16.msra.mxu0 0
        %1277 = vmatprep.subr.bf16.mxu0 0
        %1278 = vmatpush1.bf16.msra.mxu0 0
        %1279 = vmatprep.subr.bf16.mxu0 0
        %1280 = vmatpush1.bf16.msra.mxu0 0
        %1281 = vmatprep.subr.bf16.mxu0 0
        %1282 = vmatpush1.bf16.msra.mxu0 0
        %1283 = vmatprep.subr.bf16.mxu0 0
        %1284 = vmatpush1.bf16.msra.mxu0 0
        %1285 = vmatprep.subr.bf16.mxu0 0
        %1286 = vmatpush1.bf16.msra.mxu0 0
        %1287 = vmatprep.subr.bf16.mxu0 0
        %1288 = vmatpush1.bf16.msra.mxu0 0
        %1289 = vmatprep.subr.bf16.mxu0 0
        %1290 = vmatpush1.bf16.msra.mxu0 0
        %1291 = vmatprep.subr.bf16.mxu0 0
        %1292 = vmatpush1.bf16.msra.mxu0 0
        %1293 = vmatprep.subr.bf16.mxu0 0
        %1294 = vmatpush1.bf16.msra.mxu0 0
        %1295 = vmatprep.subr.bf16.mxu0 0
        %1296 = vmatpush1.bf16.msra.mxu0 0
        %1297 = vmatprep.subr.bf16.mxu0 0
        %1298 = vmatpush1.bf16.msra.mxu0 0
        %1299 = vmatprep.mubr.bf16.mxu0 0
        %1300 = vmatmul.mubr.bf16.gmra.mrb[0].mxu0 %v1265
        %v1301 = vpop.f32.mrb[0].mxu0
        %v1302 = vadd.f32 0.0, %v1301
        %v1303 = vpop.f32.mrb[0].mxu0
        %v1304 = vpop.f32.mrb[0].mxu0
        %v1305 = vpop.f32.mrb[0].mxu0
        %1306 = vdwg.mxu0
        %1307 = vrot.lane.b32.xlu0 %v762, 48
        %v1308 = vpop.permute.xlu0 %1307
        %1309 = vrot.lane.b32.xlu0 %v763, 48
        %v1310 = vpop.permute.xlu0 %1309
        %v1312 = vsel %vm765, %v1308, 0
        %v1315 = vsel %vm765, %v1310, 0
        %1317 = vmatprep.subr.bf16.mxu0 0
        %1318 = vmatpush1.bf16.xpose.msra.mxu0 %v1315
        %1319 = vmatprep.subr.bf16.mxu0 0
        %1320 = vmatpush1.bf16.xpose.msra.mxu0 0
        %1321 = vmatprep.subr.bf16.mxu0 0
        %1322 = vmatpush1.bf16.xpose.msra.mxu0 0
        %1323 = vmatprep.subr.bf16.mxu0 0
        %1324 = vmatpush1.bf16.xpose.msra.mxu0 0
        %1325 = vmatprep.subr.bf16.mxu0 0
        %1326 = vmatpush1.bf16.xpose.msra.mxu0 0
        %1327 = vmatprep.subr.bf16.mxu0 0
        %1328 = vmatpush1.bf16.xpose.msra.mxu0 0
        %1329 = vmatprep.subr.bf16.mxu0 0
        %1330 = vmatpush1.bf16.xpose.msra.mxu0 0
        %1331 = vmatprep.subr.bf16.mxu0 0
        %1332 = vmatpush1.bf16.xpose.msra.mxu0 0
        %1333 = vmatprep.subr.bf16.mxu0 0
        %1334 = vmatpush1.bf16.xpose.msra.mxu0 0
        %1335 = vmatprep.subr.bf16.mxu0 0
        %1336 = vmatpush1.bf16.xpose.msra.mxu0 0
        %1337 = vmatprep.subr.bf16.mxu0 0
        %1338 = vmatpush1.bf16.xpose.msra.mxu0 0
        %1339 = vmatprep.subr.bf16.mxu0 0
        %1340 = vmatpush1.bf16.xpose.msra.mxu0 0
        %1341 = vmatprep.subr.bf16.mxu0 0
        %1342 = vmatpush1.bf16.xpose.msra.mxu0 0
        %1343 = vmatprep.subr.bf16.mxu0 0
        %1344 = vmatpush1.bf16.xpose.msra.mxu0 0
        %1345 = vmatprep.subr.bf16.mxu0 0
        %1346 = vmatpush1.bf16.xpose.msra.mxu0 0
        %1347 = vmatprep.subr.bf16.mxu0 0
        %1348 = vmatpush1.bf16.xpose.msra.mxu0 0
        %1349 = vmatprep.mubr.bf16.mxu0 0
        %1350 = vmatmul.mubr.bf16.gmra.mrb[0].mxu0 %v1312
        %v1351 = vpop.f32.mrb[0].mxu0
        %v1352 = vadd.f32 0.0, %v1351
        %v1353 = vpop.f32.mrb[0].mxu0
        %v1354 = vpop.f32.mrb[0].mxu0
        %v1355 = vpop.f32.mrb[0].mxu0
        %1356 = vdwg.mxu0
        %v1357 = vsel %vm496, -1e+09, %v1352
        %v1358 = vsel %vm765, %v1357, -inf
        %1359 = vmax.xlane.f32.xlu0 %v1358
        %v1360 = vpop.xlane.xlu0 %1359
        %v1361 = vsub.f32 %v1357, %v1360
        %v1362 = vmul.f32 %v1361, 1.442695
        %v1363 = vpow.pop %v1362
        %v1364 = vsel %vm765, %v1363, 0.0
        %1365 = vadd.xlane.f32.xlu0 %v1364
        %v1366 = vpop.xlane.xlu0 %1365
        %v1367 = vrcp.pop %v1366
        %v1368 = vmul.f32 %v1363, %v1367
        %v1369 = vpack.c.bf16 %v1368, %v1368
        %1370 = vrot.lane.b32.xlu0 %v764, 48
        %v1371 = vpop.permute.xlu0 %1370
        %v1374 = vsel %vm765, %v1369, 0
        %1376 = vmatprep.subr.bf16.mxu0 0
        %1377 = vmatpush1.bf16.msra.mxu0 %v1371
        %1378 = vmatprep.subr.bf16.mxu0 0
        %1379 = vmatpush1.bf16.msra.mxu0 0
        %1380 = vmatprep.subr.bf16.mxu0 0
        %1381 = vmatpush1.bf16.msra.mxu0 0
        %1382 = vmatprep.subr.bf16.mxu0 0
        %1383 = vmatpush1.bf16.msra.mxu0 0
        %1384 = vmatprep.subr.bf16.mxu0 0
        %1385 = vmatpush1.bf16.msra.mxu0 0
        %1386 = vmatprep.subr.bf16.mxu0 0
        %1387 = vmatpush1.bf16.msra.mxu0 0
        %1388 = vmatprep.subr.bf16.mxu0 0
        %1389 = vmatpush1.bf16.msra.mxu0 0
        %1390 = vmatprep.subr.bf16.mxu0 0
        %1391 = vmatpush1.bf16.msra.mxu0 0
        %1392 = vmatprep.subr.bf16.mxu0 0
        %1393 = vmatpush1.bf16.msra.mxu0 0
        %1394 = vmatprep.subr.bf16.mxu0 0
        %1395 = vmatpush1.bf16.msra.mxu0 0
        %1396 = vmatprep.subr.bf16.mxu0 0
        %1397 = vmatpush1.bf16.msra.mxu0 0
        %1398 = vmatprep.subr.bf16.mxu0 0
        %1399 = vmatpush1.bf16.msra.mxu0 0
        %1400 = vmatprep.subr.bf16.mxu0 0
        %1401 = vmatpush1.bf16.msra.mxu0 0
        %1402 = vmatprep.subr.bf16.mxu0 0
        %1403 = vmatpush1.bf16.msra.mxu0 0
        %1404 = vmatprep.subr.bf16.mxu0 0
        %1405 = vmatpush1.bf16.msra.mxu0 0
        %1406 = vmatprep.subr.bf16.mxu0 0
        %1407 = vmatpush1.bf16.msra.mxu0 0
        %1408 = vmatprep.mubr.bf16.mxu0 0
        %1409 = vmatmul.mubr.bf16.gmra.mrb[0].mxu0 %v1374
        %v1410 = vpop.f32.mrb[0].mxu0
        %v1411 = vadd.f32 0.0, %v1410
        %v1412 = vpop.f32.mrb[0].mxu0
        %v1413 = vpop.f32.mrb[0].mxu0
        %v1414 = vpop.f32.mrb[0].mxu0
        %1415 = vdwg.mxu0
        %1416 = vrot.lane.b32.xlu0 %v762, 32
        %v1417 = vpop.permute.xlu0 %1416
        %1418 = vrot.lane.b32.xlu0 %v763, 32
        %v1419 = vpop.permute.xlu0 %1418
        %v1421 = vsel %vm765, %v1417, 0
        %v1424 = vsel %vm765, %v1419, 0
        %1426 = vmatprep.subr.bf16.mxu0 0
        %1427 = vmatpush1.bf16.xpose.msra.mxu0 %v1424
        %1428 = vmatprep.subr.bf16.mxu0 0
        %1429 = vmatpush1.bf16.xpose.msra.mxu0 0
        %1430 = vmatprep.subr.bf16.mxu0 0
        %1431 = vmatpush1.bf16.xpose.msra.mxu0 0
        %1432 = vmatprep.subr.bf16.mxu0 0
        %1433 = vmatpush1.bf16.xpose.msra.mxu0 0
        %1434 = vmatprep.subr.bf16.mxu0 0
        %1435 = vmatpush1.bf16.xpose.msra.mxu0 0
        %1436 = vmatprep.subr.bf16.mxu0 0
        %1437 = vmatpush1.bf16.xpose.msra.mxu0 0
        %1438 = vmatprep.subr.bf16.mxu0 0
        %1439 = vmatpush1.bf16.xpose.msra.mxu0 0
        %1440 = vmatprep.subr.bf16.mxu0 0
        %1441 = vmatpush1.bf16.xpose.msra.mxu0 0
        %1442 = vmatprep.subr.bf16.mxu0 0
        %1443 = vmatpush1.bf16.xpose.msra.mxu0 0
        %1444 = vmatprep.subr.bf16.mxu0 0
        %1445 = vmatpush1.bf16.xpose.msra.mxu0 0
        %1446 = vmatprep.subr.bf16.mxu0 0
        %1447 = vmatpush1.bf16.xpose.msra.mxu0 0
        %1448 = vmatprep.subr.bf16.mxu0 0
        %1449 = vmatpush1.bf16.xpose.msra.mxu0 0
        %1450 = vmatprep.subr.bf16.mxu0 0
        %1451 = vmatpush1.bf16.xpose.msra.mxu0 0
        %1452 = vmatprep.subr.bf16.mxu0 0
        %1453 = vmatpush1.bf16.xpose.msra.mxu0 0
        %1454 = vmatprep.subr.bf16.mxu0 0
        %1455 = vmatpush1.bf16.xpose.msra.mxu0 0
        %1456 = vmatprep.subr.bf16.mxu0 0
        %1457 = vmatpush1.bf16.xpose.msra.mxu0 0
        %1458 = vmatprep.mubr.bf16.mxu0 0
        %1459 = vmatmul.mubr.bf16.gmra.mrb[0].mxu0 %v1421
        %v1460 = vpop.f32.mrb[0].mxu0
        %v1461 = vadd.f32 0.0, %v1460
        %v1462 = vpop.f32.mrb[0].mxu0
        %v1463 = vpop.f32.mrb[0].mxu0
        %v1464 = vpop.f32.mrb[0].mxu0
        %1465 = vdwg.mxu0
        %v1466 = vsel %vm496, -1e+09, %v1461
        %v1467 = vsel %vm765, %v1466, -inf
        %1468 = vmax.xlane.f32.xlu0 %v1467
        %v1469 = vpop.xlane.xlu0 %1468
        %v1470 = vsub.f32 %v1466, %v1469
        %v1471 = vmul.f32 %v1470, 1.442695
        %v1472 = vpow.pop %v1471
        %v1473 = vsel %vm765, %v1472, 0.0
        %1474 = vadd.xlane.f32.xlu0 %v1473
        %v1475 = vpop.xlane.xlu0 %1474
        %v1476 = vrcp.pop %v1475
        %v1477 = vmul.f32 %v1472, %v1476
        %v1478 = vpack.c.bf16 %v1477, %v1477
        %1479 = vrot.lane.b32.xlu0 %v764, 32
        %v1480 = vpop.permute.xlu0 %1479
        %v1483 = vsel %vm765, %v1478, 0
        %1485 = vmatprep.subr.bf16.mxu0 0
        %1486 = vmatpush1.bf16.msra.mxu0 %v1480
        %1487 = vmatprep.subr.bf16.mxu0 0
        %1488 = vmatpush1.bf16.msra.mxu0 0
        %1489 = vmatprep.subr.bf16.mxu0 0
        %1490 = vmatpush1.bf16.msra.mxu0 0
        %1491 = vmatprep.subr.bf16.mxu0 0
        %1492 = vmatpush1.bf16.msra.mxu0 0
        %1493 = vmatprep.subr.bf16.mxu0 0
        %1494 = vmatpush1.bf16.msra.mxu0 0
        %1495 = vmatprep.subr.bf16.mxu0 0
        %1496 = vmatpush1.bf16.msra.mxu0 0
        %1497 = vmatprep.subr.bf16.mxu0 0
        %1498 = vmatpush1.bf16.msra.mxu0 0
        %1499 = vmatprep.subr.bf16.mxu0 0
        %1500 = vmatpush1.bf16.msra.mxu0 0
        %1501 = vmatprep.subr.bf16.mxu0 0
        %1502 = vmatpush1.bf16.msra.mxu0 0
        %1503 = vmatprep.subr.bf16.mxu0 0
        %1504 = vmatpush1.bf16.msra.mxu0 0
        %1505 = vmatprep.subr.bf16.mxu0 0
        %1506 = vmatpush1.bf16.msra.mxu0 0
        %1507 = vmatprep.subr.bf16.mxu0 0
        %1508 = vmatpush1.bf16.msra.mxu0 0
        %1509 = vmatprep.subr.bf16.mxu0 0
        %1510 = vmatpush1.bf16.msra.mxu0 0
        %1511 = vmatprep.subr.bf16.mxu0 0
        %1512 = vmatpush1.bf16.msra.mxu0 0
        %1513 = vmatprep.subr.bf16.mxu0 0
        %1514 = vmatpush1.bf16.msra.mxu0 0
        %1515 = vmatprep.subr.bf16.mxu0 0
        %1516 = vmatpush1.bf16.msra.mxu0 0
        %1517 = vmatprep.mubr.bf16.mxu0 0
        %1518 = vmatmul.mubr.bf16.gmra.mrb[0].mxu0 %v1483
        %v1519 = vpop.f32.mrb[0].mxu0
        %v1520 = vadd.f32 0.0, %v1519
        %v1521 = vpop.f32.mrb[0].mxu0
        %v1522 = vpop.f32.mrb[0].mxu0
        %v1523 = vpop.f32.mrb[0].mxu0
        %1524 = vdwg.mxu0
        %1525 = vrot.lane.b32.xlu0 %v762, 16
        %v1526 = vpop.permute.xlu0 %1525
        %1527 = vrot.lane.b32.xlu0 %v763, 16
        %v1528 = vpop.permute.xlu0 %1527
        %v1530 = vsel %vm765, %v1526, 0
        %v1533 = vsel %vm765, %v1528, 0
        %1535 = vmatprep.subr.bf16.mxu0 0
        %1536 = vmatpush1.bf16.xpose.msra.mxu0 %v1533
        %1537 = vmatprep.subr.bf16.mxu0 0
        %1538 = vmatpush1.bf16.xpose.msra.mxu0 0
        %1539 = vmatprep.subr.bf16.mxu0 0
        %1540 = vmatpush1.bf16.xpose.msra.mxu0 0
        %1541 = vmatprep.subr.bf16.mxu0 0
        %1542 = vmatpush1.bf16.xpose.msra.mxu0 0
        %1543 = vmatprep.subr.bf16.mxu0 0
        %1544 = vmatpush1.bf16.xpose.msra.mxu0 0
        %1545 = vmatprep.subr.bf16.mxu0 0
        %1546 = vmatpush1.bf16.xpose.msra.mxu0 0
        %1547 = vmatprep.subr.bf16.mxu0 0
        %1548 = vmatpush1.bf16.xpose.msra.mxu0 0
        %1549 = vmatprep.subr.bf16.mxu0 0
        %1550 = vmatpush1.bf16.xpose.msra.mxu0 0
        %1551 = vmatprep.subr.bf16.mxu0 0
        %1552 = vmatpush1.bf16.xpose.msra.mxu0 0
        %1553 = vmatprep.subr.bf16.mxu0 0
        %1554 = vmatpush1.bf16.xpose.msra.mxu0 0
        %1555 = vmatprep.subr.bf16.mxu0 0
        %1556 = vmatpush1.bf16.xpose.msra.mxu0 0
        %1557 = vmatprep.subr.bf16.mxu0 0
        %1558 = vmatpush1.bf16.xpose.msra.mxu0 0
        %1559 = vmatprep.subr.bf16.mxu0 0
        %1560 = vmatpush1.bf16.xpose.msra.mxu0 0
        %1561 = vmatprep.subr.bf16.mxu0 0
        %1562 = vmatpush1.bf16.xpose.msra.mxu0 0
        %1563 = vmatprep.subr.bf16.mxu0 0
        %1564 = vmatpush1.bf16.xpose.msra.mxu0 0
        %1565 = vmatprep.subr.bf16.mxu0 0
        %1566 = vmatpush1.bf16.xpose.msra.mxu0 0
        %1567 = vmatprep.mubr.bf16.mxu0 0
        %1568 = vmatmul.mubr.bf16.gmra.mrb[0].mxu0 %v1530
        %v1569 = vpop.f32.mrb[0].mxu0
        %v1570 = vadd.f32 0.0, %v1569
        %v1571 = vpop.f32.mrb[0].mxu0
        %v1572 = vpop.f32.mrb[0].mxu0
        %v1573 = vpop.f32.mrb[0].mxu0
        %1574 = vdwg.mxu0
        %v1575 = vsel %vm496, -1e+09, %v1570
        %v1576 = vsel %vm765, %v1575, -inf
        %1577 = vmax.xlane.f32.xlu0 %v1576
        %v1578 = vpop.xlane.xlu0 %1577
        %v1579 = vsub.f32 %v1575, %v1578
        %v1580 = vmul.f32 %v1579, 1.442695
        %v1581 = vpow.pop %v1580
        %v1582 = vsel %vm765, %v1581, 0.0
        %1583 = vadd.xlane.f32.xlu0 %v1582
        %v1584 = vpop.xlane.xlu0 %1583
        %v1585 = vrcp.pop %v1584
        %v1586 = vmul.f32 %v1581, %v1585
        %v1587 = vpack.c.bf16 %v1586, %v1586
        %1588 = vrot.lane.b32.xlu0 %v764, 16
        %v1589 = vpop.permute.xlu0 %1588
        %v1592 = vsel %vm765, %v1587, 0
        %1594 = vmatprep.subr.bf16.mxu0 0
        %1595 = vmatpush1.bf16.msra.mxu0 %v1589
        %1596 = vmatprep.subr.bf16.mxu0 0
        %1597 = vmatpush1.bf16.msra.mxu0 0
        %1598 = vmatprep.subr.bf16.mxu0 0
        %1599 = vmatpush1.bf16.msra.mxu0 0
        %1600 = vmatprep.subr.bf16.mxu0 0
        %1601 = vmatpush1.bf16.msra.mxu0 0
        %1602 = vmatprep.subr.bf16.mxu0 0
        %1603 = vmatpush1.bf16.msra.mxu0 0
        %1604 = vmatprep.subr.bf16.mxu0 0
        %1605 = vmatpush1.bf16.msra.mxu0 0
        %1606 = vmatprep.subr.bf16.mxu0 0
        %1607 = vmatpush1.bf16.msra.mxu0 0
        %1608 = vmatprep.subr.bf16.mxu0 0
        %1609 = vmatpush1.bf16.msra.mxu0 0
        %1610 = vmatprep.subr.bf16.mxu0 0
        %1611 = vmatpush1.bf16.msra.mxu0 0
        %1612 = vmatprep.subr.bf16.mxu0 0
        %1613 = vmatpush1.bf16.msra.mxu0 0
        %1614 = vmatprep.subr.bf16.mxu0 0
        %1615 = vmatpush1.bf16.msra.mxu0 0
        %1616 = vmatprep.subr.bf16.mxu0 0
        %1617 = vmatpush1.bf16.msra.mxu0 0
        %1618 = vmatprep.subr.bf16.mxu0 0
        %1619 = vmatpush1.bf16.msra.mxu0 0
        %1620 = vmatprep.subr.bf16.mxu0 0
        %1621 = vmatpush1.bf16.msra.mxu0 0
        %1622 = vmatprep.subr.bf16.mxu0 0
        %1623 = vmatpush1.bf16.msra.mxu0 0
        %1624 = vmatprep.subr.bf16.mxu0 0
        %1625 = vmatpush1.bf16.msra.mxu0 0
        %1626 = vmatprep.mubr.bf16.mxu0 0
        %1627 = vmatmul.mubr.bf16.gmra.mrb[0].mxu0 %v1592
        %v1628 = vpop.f32.mrb[0].mxu0
        %v1629 = vadd.f32 0.0, %v1628
        %v1630 = vpop.f32.mrb[0].mxu0
        %v1631 = vpop.f32.mrb[0].mxu0
        %v1632 = vpop.f32.mrb[0].mxu0
        %1633 = vdwg.mxu0
        %1635 = vrot.lane.b32.xlu0 %v975, 16
        %v1636 = vpop.permute.xlu0 %1635
        %1639 = vrot.lane.b32.xlu0 %v1084, 32
        %v1640 = vpop.permute.xlu0 %1639
        %1643 = vrot.lane.b32.xlu0 %v1193, 48
        %v1644 = vpop.permute.xlu0 %1643
        %1647 = vrot.lane.b32.xlu0 %v1302, 64
        %v1648 = vpop.permute.xlu0 %1647
        %1651 = vrot.lane.b32.xlu0 %v1411, 80
        %v1652 = vpop.permute.xlu0 %1651
        %1655 = vrot.lane.b32.xlu0 %v1520, 96
        %v1656 = vpop.permute.xlu0 %1655
        %1659 = vrot.lane.b32.xlu0 %v1629, 112
        %v1660 = vpop.permute.xlu0 %1659
        %v1662 = vsel %vm765, %v863, %v1636
        %vm1663 = vcmask 261120
        %v1664 = vsel %vm1663, %v1662, %v1640
        %vm1665 = vcmask 392192
        %v1666 = vsel %vm1665, %v1664, %v1644
        %vm1667 = vcmask 523264
        %v1668 = vsel %vm1667, %v1666, %v1648
        %vm1669 = vcmask 654336
        %v1670 = vsel %vm1669, %v1668, %v1652
        %vm1671 = vcmask 785408
        %v1672 = vsel %vm1671, %v1670, %v1656
        %vm1673 = vcmask 916480
        %v1674 = vsel %vm1673, %v1672, %v1660
        %v1675 = vpack.c.bf16 %v1674, %v1674
        %v1676 = vld [vmem:[#allocation4] sm:$0xf]
        %v1677 = vld [vmem:[#allocation4 + $0x4] sm:$0xf]
        %v1678 = vld [vmem:[#allocation4 + $0x8] sm:$0xf]
        %v1679 = vld [vmem:[#allocation4 + $0xc] sm:$0xf]
        %v1680 = vld [vmem:[#allocation4 + $0x10] sm:$0xf]
        %v1681 = vld [vmem:[#allocation4 + $0x14] sm:$0xf]
        %v1682 = vld [vmem:[#allocation4 + $0x18] sm:$0xf]
        %v1683 = vld [vmem:[#allocation4 + $0x1c] sm:$0xf]
        %v1684 = vld [vmem:[#allocation4 + $0x20] sm:$0xf]
        %v1685 = vld [vmem:[#allocation4 + $0x24] sm:$0xf]
        %v1686 = vld [vmem:[#allocation4 + $0x28] sm:$0xf]
        %v1687 = vld [vmem:[#allocation4 + $0x2c] sm:$0xf]
        %v1688 = vld [vmem:[#allocation4 + $0x30] sm:$0xf]
        %v1689 = vld [vmem:[#allocation4 + $0x34] sm:$0xf]
        %v1690 = vld [vmem:[#allocation4 + $0x38] sm:$0xf]
        %v1691 = vld [vmem:[#allocation4 + $0x3c] sm:$0xf]
        %v1692 = vld [vmem:[#allocation6] sm:$0x1]
        %v1694 = vlaneseq
        %v1695 = vshrl.u32 %v1694, 7
        %v1696 = vsub.s32 0, %v1695
        %v1697 = vrot.slane %v1692, %v1696
        %v1715 = vunpack.c.l.b16 %v1676
        %v1716 = vunpack.c.l.b16 %v1677
        %v1717 = vunpack.c.l.b16 %v1678
        %v1718 = vunpack.c.l.b16 %v1679
        %v1719 = vunpack.c.l.b16 %v1680
        %v1720 = vunpack.c.l.b16 %v1681
        %v1721 = vunpack.c.l.b16 %v1682
        %v1722 = vunpack.c.l.b16 %v1683
        %v1723 = vunpack.c.l.b16 %v1684
        %v1724 = vunpack.c.l.b16 %v1685
        %v1725 = vunpack.c.l.b16 %v1686
        %v1726 = vunpack.c.l.b16 %v1687
        %v1727 = vunpack.c.l.b16 %v1688
        %v1728 = vunpack.c.l.b16 %v1689
        %v1729 = vunpack.c.l.b16 %v1690
        %v1730 = vunpack.c.l.b16 %v1691
        %v1731 = vpack.c.b16 %v1716, %v1715
        %v1732 = vpack.c.b16 %v1718, %v1717
        %v1733 = vpack.c.b16 %v1720, %v1719
        %v1734 = vpack.c.b16 %v1722, %v1721
        %v1735 = vpack.c.b16 %v1724, %v1723
        %v1736 = vpack.c.b16 %v1726, %v1725
        %v1737 = vpack.c.b16 %v1728, %v1727
        %v1738 = vpack.c.b16 %v1730, %v1729
        %1747 = vmatprep.subr.bf16.mxu0 0
        %1748 = vmatpush1.bf16.msra.mxu0 %v1731
        %1749 = vmatprep.subr.bf16.mxu0 0
        %1750 = vmatpush1.bf16.msra.mxu0 %v1732
        %1751 = vmatprep.subr.bf16.mxu0 0
        %1752 = vmatpush1.bf16.msra.mxu0 %v1733
        %1753 = vmatprep.subr.bf16.mxu0 0
        %1754 = vmatpush1.bf16.msra.mxu0 %v1734
        %1755 = vmatprep.subr.bf16.mxu0 0
        %1756 = vmatpush1.bf16.msra.mxu0 %v1735
        %1757 = vmatprep.subr.bf16.mxu0 0
        %1758 = vmatpush1.bf16.msra.mxu0 %v1736
        %1759 = vmatprep.subr.bf16.mxu0 0
        %1760 = vmatpush1.bf16.msra.mxu0 %v1737
        %1761 = vmatprep.subr.bf16.mxu0 0
        %1762 = vmatpush1.bf16.msra.mxu0 %v1738
        %1763 = vmatprep.subr.bf16.mxu0 0
        %1764 = vmatpush1.bf16.msra.mxu0 0
        %1765 = vmatprep.subr.bf16.mxu0 0
        %1766 = vmatpush1.bf16.msra.mxu0 0
        %1767 = vmatprep.subr.bf16.mxu0 0
        %1768 = vmatpush1.bf16.msra.mxu0 0
        %1769 = vmatprep.subr.bf16.mxu0 0
        %1770 = vmatpush1.bf16.msra.mxu0 0
        %1771 = vmatprep.subr.bf16.mxu0 0
        %1772 = vmatpush1.bf16.msra.mxu0 0
        %1773 = vmatprep.subr.bf16.mxu0 0
        %1774 = vmatpush1.bf16.msra.mxu0 0
        %1775 = vmatprep.subr.bf16.mxu0 0
        %1776 = vmatpush1.bf16.msra.mxu0 0
        %1777 = vmatprep.subr.bf16.mxu0 0
        %1778 = vmatpush1.bf16.msra.mxu0 0
        %1779 = vmatprep.mubr.bf16.mxu0 0
        %1780 = vmatmul.mubr.bf16.gmra.mrb[0].mxu0 %v1675
        %v1781 = vpop.f32.mrb[0].mxu0
        %v1782 = vadd.f32 %v1697, %v1781
        %v1783 = vpop.f32.mrb[0].mxu0
        %v1784 = vpop.f32.mrb[0].mxu0
        %v1785 = vpop.f32.mrb[0].mxu0
        %1786 = vdwg.mxu0
        %v1787 = vadd.f32 %v492, %v1782
        %v1788 = vld [vmem:[#allocation7] sm:$0x1]
        %v1789 = vld [vmem:[#allocation9] sm:$0x1]
        %1790 = vadd.xlane.f32.xlu0 %v1787
        %v1791 = vpop.xlane.xlu0 %1790
        %v1792 = vrcp.pop 128.0
        %v1793 = vmul.f32 %v1791, %v1792
        %v1794 = vsub.f32 %v1787, %v1793
        %v1795 = vmul.f32 %v1794, %v1794
        %1796 = vadd.xlane.f32.xlu0 %v1795
        %v1797 = vpop.xlane.xlu0 %1796
        %v1798 = vmul.f32 %v1797, %v1792
        %v1799 = vadd.f32 %v1798, 1e-05
        %v1800 = vrsqrt.pop %v1799
        %v1801 = vmul.f32 %v1794, %v1800
        %v1803 = vlaneseq
        %v1804 = vshrl.u32 %v1803, 7
        %v1805 = vsub.s32 0, %v1804
        %v1806 = vrot.slane %v1788, %v1805
        %v1808 = vmul.f32 %v1801, %v1806
        %v1810 = vlaneseq
        %v1811 = vshrl.u32 %v1810, 7
        %v1812 = vsub.s32 0, %v1811
        %v1813 = vrot.slane %v1789, %v1812
        %v1815 = vadd.f32 %v1808, %v1813
        %1816 = vst [vmem:[%s490] sm:$0xff] %v1815
        %p1817 = scmp.lt.s32.totalorder %s27, 1
        %s1818 = scalar_select %p1817, %s27, 1
        %s1819 = smul.addr %s1818, 8
        %s1820 = scalar_lea.vmem %s11, %s1819
        // Predicated region
        $region85: #{decoder_layer_forward.4} parent=63 // pred_check
          %p1821 = pneg %p291
        $region86: #{decoder_layer_forward.4} parent=63 // pred_check_branch
          %1823 = sbr.rel (%p1821) target = $region88
        $region87: #{decoder_layer_forward.4} parent=63 // pred_region
          _
        $region88: #{decoder_layer_forward.4} parent=63 // pred_fallthru
          _
      $region64: #{decoder_layer_forward.4} parent=5 // pred_fallthru
        _
      %p1824 = scmp.le.s32.totalorder 2, %s22
      // Predicated region
      $region89: #{decoder_layer_forward.4} parent=5 // pred_check
        %p1825 = pneg %p1824
      $region90: #{decoder_layer_forward.4} parent=5 // pred_check_branch
        %1827 = sbr.rel (%p1825) target = $region92
      $region91: #{decoder_layer_forward.4} parent=5 // pred_region
        %s1828 = ssub.s32 %s22, 2
        // Predicated region
        $region93: #{decoder_layer_forward.4} parent=91 // pred_check
          %p1829 = pneg %p297
        $region94: #{decoder_layer_forward.4} parent=91 // pred_check_branch
          %1831 = sbr.rel (%p1829) target = $region96
        $region95: #{decoder_layer_forward.4} parent=91 // pred_region
          %p1832 = scmp.lt.s32.totalorder %s28, 1
          %s1833 = scalar_select %p1832, %s28, 1
          %s1834 = smul.addr %s1833, 8
          %s1835 = scalar_lea.vmem %s11, %s1834
        $region96: #{decoder_layer_forward.4} parent=91 // pred_fallthru
          _
      $region92: #{decoder_layer_forward.4} parent=5 // pred_fallthru
        _
    $region6: #{decoder_layer_forward.4} parent=1 // loop_footer
      %s26 = sadd.s32 1, %s22
    $region7: #{decoder_layer_forward.4} parent=1 // loop_footer_branch
      %21 = sbr.rel target = $region3
    $region8: #{decoder_layer_forward.4} parent=1 // loop_exit
      _
    %1836 = vsyncpa [#allocation3], 1
    %s1837 = scalar_lea.sflag [#allocation3], 1
    %1838 = vsyncpa %s1837, 1
    %1839 = vsyncpa [#allocation5], 1
    %1840 = vsyncpa [#allocation8], 1

</llo_original>
